<compile_context>
chip_gen: v6e
topology: v6e:2x2x1
jax: 0.10.0
libtpu: 0.0.40
codegen_flags: <defaults>
</compile_context>

<pallas_src>
import functools

import jax
import jax.numpy as jnp
from jax.experimental import pallas as pl
from jax.experimental.pallas import tpu as pltpu


def _round_up(x, m):
    return (x + m - 1) // m * m


# ----------------------------------------------------------------------------
# Pallas kernels: tiled matmul + bias (+ optional fused ReLU), f32 accumulation.
# ----------------------------------------------------------------------------
def _mm_bias_kernel_1k(a_ref, b_ref, bias_ref, o_ref, *, relu):
    # Single K block: accumulate directly, no scratch needed.
    r = jnp.dot(a_ref[...], b_ref[...], preferred_element_type=jnp.float32)
    r = r + bias_ref[...]
    if relu:
        r = jnp.maximum(r, 0.0)
    o_ref[...] = r.astype(o_ref.dtype)


def _mm_bias_kernel_nk(a_ref, b_ref, bias_ref, o_ref, acc_ref, *, relu):
    k = pl.program_id(2)

    @pl.when(k == 0)
    def _():
        acc_ref[...] = jnp.zeros_like(acc_ref)

    acc_ref[...] += jnp.dot(a_ref[...], b_ref[...],
                            preferred_element_type=jnp.float32)

    @pl.when(k == pl.num_programs(2) - 1)
    def _():
        r = acc_ref[...] + bias_ref[...]
        if relu:
            r = jnp.maximum(r, 0.0)
        o_ref[...] = r.astype(o_ref.dtype)


def _choose_tm(M, K):
    if M <= 1024:
        return _round_up(M, 16)            # single M block (tiny GEMVs: fc6/fc7/...)
    if K <= 256:                            # tiny K: big M tiles -> few grid steps
        return 2048
    if K <= 1536:
        return 1024
    return 512


def _choose_tn(Np):
    if Np % 512 == 0:
        return 512
    if Np % 256 == 0:
        return 256
    return 128


def _choose_tk(K):
    if K <= 6144:
        return K                             # single K block, no padding, no scratch
    best, tk = K, 128
    while tk <= 8192:
        if K % tk == 0:
            best = tk
        tk += 128
    return best


@functools.lru_cache(maxsize=None)
def _build_matmul(Mp, K, Np, tm, tn, tk, relu, out_dtype):
    nk = K // tk
    grid = (Mp // tm, Np // tn, nk)
    if nk == 1:
        kernel = functools.partial(_mm_bias_kernel_1k, relu=relu)
        scratch = []
    else:
        kernel = functools.partial(_mm_bias_kernel_nk, relu=relu)
        scratch = [pltpu.VMEM((tm, tn), jnp.float32)]
    call = pl.pallas_call(
        kernel,
        out_shape=jax.ShapeDtypeStruct((Mp, Np), out_dtype),
        grid_spec=pltpu.PrefetchScalarGridSpec(
            num_scalar_prefetch=0,
            grid=grid,
            in_specs=[
                pl.BlockSpec((tm, tk), lambda i, j, k: (i, k)),
                pl.BlockSpec((tk, tn), lambda i, j, k: (k, j)),
                pl.BlockSpec((1, tn), lambda i, j, k: (0, j)),
            ],
            out_specs=pl.BlockSpec((tm, tn), lambda i, j, k: (i, j)),
            scratch_shapes=scratch,
        ),
        compiler_params=pltpu.CompilerParams(
            dimension_semantics=("parallel", "parallel", "arbitrary"),
            vmem_limit_bytes=48 * 1024 * 1024),
    )
    return jax.jit(call)


def matmul_bias(a, b, bias_row, *, relu, out_dtype):
    """out = relu?(a @ b + bias). a: (M, K) bf16, b: (K, Np) bf16, bias_row: (1, Np) f32."""
    M, K = a.shape
    Kb, Np = b.shape
    assert K == Kb and bias_row.shape == (1, Np)
    tm, tn, tk = _choose_tm(M, K), _choose_tn(Np), _choose_tk(K)
    Mp = _round_up(M, tm)
    if Mp != M:
        a = jnp.pad(a, ((0, Mp - M), (0, 0)))
    fn = _build_matmul(Mp, K, Np, tm, tn, tk, bool(relu), out_dtype)
    out = fn(a, b, bias_row)
    return out[:M] if Mp != M else out


# ----------------------------------------------------------------------------
# Conv / pool / deconv built on top of the Pallas matmul.
# ----------------------------------------------------------------------------
def _im2col(x, kh, kw):
    """x: (N, H, W, C) -> (N, OH, OW, kh*kw*C), patch order (dh, dw, c)."""
    N, H, W, C = x.shape
    OH, OW = H - kh + 1, W - kw + 1
    if kh == 1 and kw == 1:
        return x
    cols = [x[:, dh:dh + OH, dw:dw + OW, :]
            for dh in range(kh) for dw in range(kw)]
    return jnp.concatenate(cols, axis=-1)


def conv2d(x, layer, *, padding=0, relu=False, out_dtype=jnp.bfloat16):
    """x: NHWC. layer: prepared dict with bf16 (K, Np) weight and padded f32 bias."""
    kh, kw, cout = layer['kh'], layer['kw'], layer['cout']
    if padding > 0:
        x = jnp.pad(x, ((0, 0), (padding, padding), (padding, padding), (0, 0)))
    # TODO(synk): fuse im2col into the Pallas kernel via shifted-window index_maps
    # to avoid materializing the kh*kw-expanded patch matrix in HBM.
    patches = _im2col(x.astype(jnp.bfloat16), kh, kw)
    N, OH, OW, K = patches.shape
    a = patches.reshape(N * OH * OW, K)
    out = matmul_bias(a, layer['w'], layer['b'], relu=relu, out_dtype=out_dtype)
    out = out[:, :cout]
    return out.reshape(N, OH, OW, cout)


def maxpool2x2_ceil(x):
    """nn.MaxPool2d(2, stride=2, ceil_mode=True) on NHWC."""
    N, H, W, C = x.shape
    Hp, Wp = _round_up(H, 2), _round_up(W, 2)
    if (Hp, Wp) != (H, W):
        x = jnp.pad(x, ((0, 0), (0, Hp - H), (0, Wp - W), (0, 0)),
                    constant_values=-jnp.inf)
    x = x.reshape(N, Hp // 2, 2, Wp // 2, 2, C)
    return x.max(axis=(2, 4))


def conv_transpose2d(x, layer):
    """nn.ConvTranspose2d(C, C, k=2*stride, stride, bias=False) via sub-pixel
    decomposition: pad-by-1 + 2x2 conv with stride^2*Cout channels + depth-to-space."""
    s, cout = layer['stride'], layer['true_cout']
    xp = jnp.pad(x, ((0, 0), (1, 1), (1, 1), (0, 0)))
    y = conv2d(xp, layer, padding=0, relu=False, out_dtype=jnp.float32)
    N, Hq, Wq, _ = y.shape                       # spatial (H+1, W+1)
    y = y.reshape(N, Hq, Wq, s, s, cout)         # channel order (ry, rx, co)
    y = jnp.transpose(y, (0, 1, 3, 2, 4, 5)).reshape(N, Hq * s, Wq * s, cout)
    return y                                     # == (H-1)*s + k


# ----------------------------------------------------------------------------
# FCN8s parameters (PyTorch layouts) and one-time preprocessing.
# ----------------------------------------------------------------------------
def init_params(key, n_class=3):
    params = {}
    conv_defs = [
        ('c1_1', 64, 3, 3), ('c1_2', 64, 64, 3),
        ('c2_1', 128, 64, 3), ('c2_2', 128, 128, 3),
        ('c3_1', 256, 128, 3), ('c3_2', 256, 256, 3), ('c3_3', 256, 256, 3),
        ('c4_1', 512, 256, 3), ('c4_2', 512, 512, 3), ('c4_3', 512, 512, 3),
        ('c5_1', 512, 512, 3), ('c5_2', 512, 512, 3), ('c5_3', 512, 512, 3),
        ('fc6', 4096, 512, 7), ('fc7', 4096, 4096, 1),
        ('score_fr', n_class, 4096, 1),
        ('score_feat3', n_class, 256, 1), ('score_feat4', n_class, 512, 1),
    ]
    keys = jax.random.split(key, len(conv_defs) + 3)
    for (name, cout, cin, k), kk in zip(conv_defs, keys[:len(conv_defs)]):
        k1, k2 = jax.random.split(kk)
        fan_in = float(cin * k * k)
        w = jax.random.normal(k1, (cout, cin, k, k), jnp.float32) / jnp.sqrt(fan_in)
        b = jax.random.normal(k2, (cout,), jnp.float32) * 0.01
        params[name] = (w, b)
    # ConvTranspose2d weights: (Cin, Cout, kh, kw), bias=False.
    for (name, k), kk in zip([('upscore', 16), ('upscore_4', 4), ('upscore_5', 4)],
                             keys[-3:]):
        fan_in = float(n_class * k * k)
        params[name] = (jax.random.normal(kk, (n_class, n_class, k, k), jnp.float32)
                        / jnp.sqrt(fan_in))
    return params


_DECONV_STRIDES = {'upscore': 8, 'upscore_4': 2, 'upscore_5': 2}


def prepare_params(params):
    """One-time weight prep: im2col (K, N) layout, N padded to a lane multiple,
    bf16 cast; deconvs converted to their sub-pixel 2x2-conv weights."""
    prepped = {}
    for name, val in params.items():
        if name in _DECONV_STRIDES:
            w = val                                        # (cin, cout, k, k)
            s = _DECONV_STRIDES[name]
            cin, cout, k, _ = w.shape
            assert k == 2 * s
            # W2[(ry*s+rx)*cout+co, ci, ty, tx] = w[ci, co, ry + s*(1-ty), rx + s*(1-tx)]
            wr = w.reshape(cin, cout, 2, s, 2, s)          # (ci, co, by, ry, bx, rx)
            wr = jnp.flip(wr, axis=(2, 4))                 # by -> ty, bx -> tx
            w2 = jnp.transpose(wr, (3, 5, 1, 0, 2, 4)).reshape(s * s * cout, cin, 2, 2)
            cout2 = s * s * cout
            wmat = jnp.transpose(w2, (2, 3, 1, 0)).reshape(4 * cin, cout2)
            Np = max(128, _round_up(cout2, 128))
            prepped[name] = dict(
                w=jnp.pad(wmat, ((0, 0), (0, Np - cout2))).astype(jnp.bfloat16),
                b=jnp.zeros((1, Np), jnp.float32),
                kh=2, kw=2, cout=cout2, stride=s, true_cout=cout)
        else:
            w, b = val                                     # (cout, cin, kh, kw), (cout,)
            cout, cin, kh, kw = w.shape
            wmat = jnp.transpose(w, (2, 3, 1, 0)).reshape(kh * kw * cin, cout)
            Np = max(128, _round_up(cout, 128))
            prepped[name] = dict(
                w=jnp.pad(wmat, ((0, 0), (0, Np - cout))).astype(jnp.bfloat16),
                b=jnp.pad(b.reshape(1, -1), ((0, 0), (0, Np - cout))).astype(jnp.float32),
                kh=kh, kw=kw, cout=cout)
    return prepped


# ----------------------------------------------------------------------------
# Forward.
# ----------------------------------------------------------------------------
def fcn8s_forward(params, x_nchw):
    p = params
    x = jnp.transpose(x_nchw, (0, 2, 3, 1))  # NCHW -> NHWC

    # features_123
    h = conv2d(x, p['c1_1'], padding=100, relu=True)
    h = conv2d(h, p['c1_2'], padding=1, relu=True)
    h = maxpool2x2_ceil(h)
    h = conv2d(h, p['c2_1'], padding=1, relu=True)
    h = conv2d(h, p['c2_2'], padding=1, relu=True)
    h = maxpool2x2_ceil(h)
    h = conv2d(h, p['c3_1'], padding=1, relu=True)
    h = conv2d(h, p['c3_2'], padding=1, relu=True)
    h = conv2d(h, p['c3_3'], padding=1, relu=True)
    feat3 = maxpool2x2_ceil(h)

    # features_4
    h = conv2d(feat3, p['c4_1'], padding=1, relu=True)
    h = conv2d(h, p['c4_2'], padding=1, relu=True)
    h = conv2d(h, p['c4_3'], padding=1, relu=True)
    feat4 = maxpool2x2_ceil(h)

    # features_5
    h = conv2d(feat4, p['c5_1'], padding=1, relu=True)
    h = conv2d(h, p['c5_2'], padding=1, relu=True)
    h = conv2d(h, p['c5_3'], padding=1, relu=True)
    feat5 = maxpool2x2_ceil(h)

    # classifier (Dropout2d is identity at inference; matches module in eval mode)
    # TODO(synk): training-mode Dropout2d (random channel drop) not implemented.
    h = conv2d(feat5, p['fc6'], padding=0, relu=True)
    h = conv2d(h, p['fc7'], padding=0, relu=True)
    score5 = conv2d(h, p['score_fr'], padding=0, relu=False, out_dtype=jnp.float32)

    upscore5 = conv_transpose2d(score5, p['upscore_5'])
    score4 = conv2d(feat4, p['score_feat4'], padding=0, relu=False,
                    out_dtype=jnp.float32)
    h5, w5 = upscore5.shape[1], upscore5.shape[2]
    score4 = score4[:, 5:5 + h5, 5:5 + w5, :] + upscore5

    score3 = conv2d(feat3, p['score_feat3'], padding=0, relu=False,
                    out_dtype=jnp.float32)
    upscore4 = conv_transpose2d(score4, p['upscore_4'])
    h4, w4 = upscore4.shape[1], upscore4.shape[2]
    score3 = score3[:, 9:9 + h4, 9:9 + w4, :] + upscore4

    out = conv_transpose2d(score3, p['upscore'])
    Hin, Win = x.shape[1], x.shape[2]
    out = out[:, 28:28 + Hin, 28:28 + Win, :]
    return jnp.transpose(out, (0, 3, 1, 2))  # NHWC -> NCHW


if __name__ == "__main__":
    key = jax.random.PRNGKey(0)
    k_in, k_par = jax.random.split(key)
    # Small NCHW input consistent with the module (3 input channels). padding=100
    # in conv1_1 makes the interior extent large regardless of the input size, so
    # batch=1, 16x16 keeps total work modest while exercising every layer.
    x = jax.random.normal(k_in, (1, 3, 16, 16), jnp.float32)
    params = prepare_params(init_params(k_par, n_class=3))

    out = fcn8s_forward(params, x)
    out = jax.block_until_ready(out)
    assert out.shape == (1, 3, 16, 16), out.shape
    assert bool(jnp.all(jnp.isfinite(out)))
    print("KERNEL_OK")
</pallas_src>

<mosaic_0001>
module attributes {stable_mosaic.version = 11 : i64} {
  func.func @_mm_bias_kernel_1k(%arg0: i32, %arg1: i32, %arg2: i32, %arg3: memref<2048x27xbf16, #tpu.memory_space<vmem>>, %arg4: memref<27x128xbf16, #tpu.memory_space<vmem>>, %arg5: memref<1x128xf32, #tpu.memory_space<vmem>>, %arg6: memref<2048x128xbf16, #tpu.memory_space<vmem>>) attributes {dimension_semantics = [#tpu.dimension_semantics<parallel>, #tpu.dimension_semantics<parallel>, #tpu.dimension_semantics<arbitrary>], iteration_bounds = array<i64: 23, 1, 1>, scalar_prefetch = 0 : i64, scratch_operands = 0 : i64, tpu.core_type = #tpu.core_type<tc>, window_params = [{transform_indices = @transform_0, window_bounds = array<i64: 2048, 27>}, {transform_indices = @transform_1, window_bounds = array<i64: 27, 128>}, {transform_indices = @transform_2, window_bounds = array<i64: 1, 128>}, {transform_indices = @transform_3, window_bounds = array<i64: 2048, 128>}]} {
    %c0 = arith.constant 0 : index
    %c0_0 = arith.constant 0 : index
    %0 = vector.load %arg3[%c0, %c0_0] : memref<2048x27xbf16, #tpu.memory_space<vmem>>, vector<2048x27xbf16>
    %c0_1 = arith.constant 0 : index
    %c0_2 = arith.constant 0 : index
    %1 = vector.load %arg4[%c0_1, %c0_2] : memref<27x128xbf16, #tpu.memory_space<vmem>>, vector<27x128xbf16>
    %cst = arith.constant dense<0.000000e+00> : vector<2048x128xf32>
    %2 = tpu.matmul %0, %1, %cst {dimension_numbers = #tpu.dot_dimension_numbers<[1], [0], [0], [1], [0, 0, 1, 1], [], []>} : vector<2048x27xbf16>, vector<27x128xbf16>, vector<2048x128xf32> -> vector<2048x128xf32>
    %c0_3 = arith.constant 0 : index
    %c0_4 = arith.constant 0 : index
    %3 = vector.load %arg5[%c0_3, %c0_4] : memref<1x128xf32, #tpu.memory_space<vmem>>, vector<1x128xf32>
    %4 = vector.broadcast %3 : vector<1x128xf32> to vector<2048x128xf32>
    %5 = arith.addf %2, %4 : vector<2048x128xf32>
    %cst_5 = arith.constant 0.000000e+00 : f32
    %6 = vector.broadcast %cst_5 : f32 to vector<2048x128xf32>
    %7 = arith.maximumf %5, %6 : vector<2048x128xf32>
    %8 = arith.truncf %7 : vector<2048x128xf32> to vector<2048x128xbf16>
    %c0_6 = arith.constant 0 : index
    %c0_7 = arith.constant 0 : index
    %9 = vector.load %arg6[%c0_6, %c0_7] : memref<2048x128xbf16, #tpu.memory_space<vmem>>, vector<2048x128xbf16>
    tpu.vector_store %arg6[%c0_6, %c0_7], %8 {strides = array<i32>} : memref<2048x128xbf16, #tpu.memory_space<vmem>>, vector<2048x128xbf16>,
    return
  }
  func.func @transform_0(%arg0: i32, %arg1: i32, %arg2: i32) -> (i32, i32) {
    %c0_i32 = arith.constant 0 : i32
    return %arg0, %arg2 : i32, i32
  }
  func.func @transform_1(%arg0: i32, %arg1: i32, %arg2: i32) -> (i32, i32) {
    %c0_i32 = arith.constant 0 : i32
    return %arg2, %arg1 : i32, i32
  }
  func.func @transform_2(%arg0: i32, %arg1: i32, %arg2: i32) -> (i32, i32) {
    %c0_i32 = arith.constant 0 : i32
    %c0_i32_0 = arith.constant 0 : i32
    return %c0_i32, %arg1 : i32, i32
  }
  func.func @transform_3(%arg0: i32, %arg1: i32, %arg2: i32) -> (i32, i32) {
    %c0_i32 = arith.constant 0 : i32
    return %arg0, %arg1 : i32, i32
  }
}

</mosaic_0001>

<llo_original>
// kernel: tpu_custom_call.1
$region0: #{tpu_custom_call.1}
  #allocation0 [shape = 'u32[]', space=smem, size = 0x4, offset = 0x4, fixed_abs, tag = 'smem constant byte address 0x4 - core index']
  #allocation1 [shape = 'u32[144,128]{1,0:T(1,128)}', space=vmem, size = 0x12000, scoped, tag = 'internal scratch']
  %s0 = inlined_call_operand.vmem [shape: bf16[47104,27], index: 0, kind: input, shape index: {}]
  %s1 = inlined_call_operand.vmem [shape: bf16[27,128], index: 1, kind: input, shape index: {}]
  %s2 = inlined_call_operand.vmem [shape: f32[1,128], index: 2, kind: input, shape index: {}]
  %s3 = inlined_call_operand.hbm [shape: bf16[47104,128], index: 3, kind: output, shape index: {}]
  %s4 = sld [smem:[#allocation0]]
  $region45: #{tpu_custom_call.1} parent=0
    _
  %s6 = ssub.s32 1, %s4
  %s7 = scalar_select 0, %s6, %s4
  $region1: #{tpu_custom_call.1} parent=0
    #allocation2 [shape = 'u8[1048576]{0}', space=vmem, size = 0x100000, scoped, tag = 'output window, operand 0']
    #allocation3 [shape = 's32[2]{0}', space=sflag, size = 0x8, scoped, tag = 'scoped memory for tpu_custom_call.1']
    %8 = vsyncpa [#allocation3], 0
    %s9 = scalar_lea.sflag [#allocation3], 1
    %10 = vsyncpa %s9, 0
    loop: start=0, step=1, limit=25
    $region2: #{tpu_custom_call.1} parent=1 // loop_pre_header
      _
    $region3: #{tpu_custom_call.1} parent=1 // loop_header
      %s12 = sphi 0, %s16
      %p13 = scmp.ge.s32.totalorder %s12, 25
      %s19 = sphi 0, %s38
      %s20 = sphi 0, %s34
      %s21 = sphi 0, %s30
      %s22 = sphi 0, %s19
      %s23 = sphi 0, %s20
      %s24 = sphi 0, %s21
      %s25 = sphi 0, %s22
      %s26 = sphi 0, %s23
      %s27 = sphi 0, %s24
      %s43 = sphi 0, %s45
      %s46 = sphi 0, %s43
      %s47 = sphi 0, %s46
      %s63 = sphi 0, %s47
      %s71 = sphi 0, %s73
      %s74 = sphi 0, %s71
      %s75 = sphi 0, %s74
      %s91 = sphi 0, %s75
      %s97 = sphi 0, %s99
      %s100 = sphi 0, %s97
      %s101 = sphi 0, %s100
      %s117 = sphi 0, %s101
      %s125 = sphi 0, %s127
      %s128 = sphi 0, %s125
      %s129 = sphi 0, %s128
      %s145 = sphi 0, %s129
    $region4: #{tpu_custom_call.1} parent=1 // loop_header_branch
      %15 = sbr.rel (%p13) target = $region8
    $region5: #{tpu_custom_call.1} parent=1 // loop_body
      %s17 = ssub.s32 %s12, 1
      %s18 = ssub.s32 %s12, 2
      %s28 = sadd.s32 1, %s21
      %p29 = scmp.ge.s32.totalorder %s28, 1
      %s30 = scalar_select %p29, 0, %s28
      %s31 = sadd.s32 1, %s20
      %s32 = scalar_select %p29, %s31, %s20
      %p33 = scmp.ge.s32.totalorder %s32, 1
      %s34 = scalar_select %p33, 0, %s32
      %s35 = sadd.s32 1, %s19
      %s36 = scalar_select %p33, %s35, %s19
      %p37 = scmp.ge.s32.totalorder %s36, 23
      %s38 = scalar_select %p37, 0, %s36
      %s39 = ssub.s32 %s19, %s38
      %s40 = ssub.s32 %s21, %s30
      %s41 = sor.u32 %s39, %s40
      %p42 = scmp.eq.s32.totalorder %s41, 0
      %s44 = sadd.s32 %s43, 1
      %s45 = scalar_select %p42, %s43, %s44
      %p48 = pneg %p42
      %p49 = scmp.eq.s32.totalorder %s12, 22
      %p50 = por %p48, %p49
      %p51 = scmp.ne.s32.totalorder %s43, %s46
      %p52 = scmp.eq.s32.totalorder %s12, 0
      %p53 = por %p51, %p52
      %p54 = scmp.ne.s32.totalorder %s43, %s46
      %p55 = scmp.eq.s32.totalorder %s17, 22
      %p56 = por %p54, %p55
      %p57 = scmp.ne.s32.totalorder %s46, %s47
      %p58 = scmp.eq.s32.totalorder %s17, 0
      %p59 = por %p57, %p58
      %p60 = scmp.ne.s32.totalorder %s46, %s47
      %p61 = scmp.eq.s32.totalorder %s18, 22
      %p62 = por %p60, %p61
      %p64 = scmp.ne.s32.totalorder %s47, %s63
      %p65 = scmp.eq.s32.totalorder %s18, 0
      %p66 = por %p64, %p65
      %s67 = ssub.s32 %s21, %s30
      %s68 = ssub.s32 %s20, %s34
      %s69 = sor.u32 %s67, %s68
      %p70 = scmp.eq.s32.totalorder %s69, 0
      %s72 = sadd.s32 %s71, 1
      %s73 = scalar_select %p70, %s71, %s72
      %p76 = pneg %p70
      %p77 = scmp.eq.s32.totalorder %s12, 22
      %p78 = por %p76, %p77
      %p79 = scmp.ne.s32.totalorder %s71, %s74
      %p80 = scmp.eq.s32.totalorder %s12, 0
      %p81 = por %p79, %p80
      %p82 = scmp.ne.s32.totalorder %s71, %s74
      %p83 = scmp.eq.s32.totalorder %s17, 22
      %p84 = por %p82, %p83
      %p85 = scmp.ne.s32.totalorder %s74, %s75
      %p86 = scmp.eq.s32.totalorder %s17, 0
      %p87 = por %p85, %p86
      %p88 = scmp.ne.s32.totalorder %s74, %s75
      %p89 = scmp.eq.s32.totalorder %s18, 22
      %p90 = por %p88, %p89
      %p92 = scmp.ne.s32.totalorder %s75, %s91
      %p93 = scmp.eq.s32.totalorder %s18, 0
      %p94 = por %p92, %p93
      %s95 = ssub.s32 %s20, %s34
      %p96 = scmp.eq.s32.totalorder %s95, 0
      %s98 = sadd.s32 %s97, 1
      %s99 = scalar_select %p96, %s97, %s98
      %p102 = pneg %p96
      %p103 = scmp.eq.s32.totalorder %s12, 22
      %p104 = por %p102, %p103
      %p105 = scmp.ne.s32.totalorder %s97, %s100
      %p106 = scmp.eq.s32.totalorder %s12, 0
      %p107 = por %p105, %p106
      %p108 = scmp.ne.s32.totalorder %s97, %s100
      %p109 = scmp.eq.s32.totalorder %s17, 22
      %p110 = por %p108, %p109
      %p111 = scmp.ne.s32.totalorder %s100, %s101
      %p112 = scmp.eq.s32.totalorder %s17, 0
      %p113 = por %p111, %p112
      %p114 = scmp.ne.s32.totalorder %s100, %s101
      %p115 = scmp.eq.s32.totalorder %s18, 22
      %p116 = por %p114, %p115
      %p118 = scmp.ne.s32.totalorder %s101, %s117
      %p119 = scmp.eq.s32.totalorder %s18, 0
      %p120 = por %p118, %p119
      %s121 = ssub.s32 %s19, %s38
      %s122 = ssub.s32 %s20, %s34
      %s123 = sor.u32 %s121, %s122
      %p124 = scmp.eq.s32.totalorder %s123, 0
      %s126 = sadd.s32 %s125, 1
      %s127 = scalar_select %p124, %s125, %s126
      %p130 = pneg %p124
      %p131 = scmp.eq.s32.totalorder %s12, 22
      %p132 = por %p130, %p131
      %p133 = scmp.ne.s32.totalorder %s125, %s128
      %p134 = scmp.eq.s32.totalorder %s12, 0
      %p135 = por %p133, %p134
      %p136 = scmp.ne.s32.totalorder %s125, %s128
      %p137 = scmp.eq.s32.totalorder %s17, 22
      %p138 = por %p136, %p137
      %p139 = scmp.ne.s32.totalorder %s128, %s129
      %p140 = scmp.eq.s32.totalorder %s17, 0
      %p141 = por %p139, %p140
      %p142 = scmp.ne.s32.totalorder %s128, %s129
      %p143 = scmp.eq.s32.totalorder %s18, 22
      %p144 = por %p142, %p143
      %p146 = scmp.ne.s32.totalorder %s129, %s145
      %p147 = scmp.eq.s32.totalorder %s18, 0
      %p148 = por %p146, %p147
      %p149 = scmp.le.s32.totalorder 1, %s12
      %p150 = scmp.lt.s32.totalorder %s12, 24
      %p151 = pnand %p149, %p150
      %p152 = pneg %p151
      // Predicated region
      $region9: #{tpu_custom_call.1} parent=5 // pred_check
        _
      $region10: #{tpu_custom_call.1} parent=5 // pred_check_branch
        %154 = sbr.rel (%p151) target = $region12
      $region11: #{tpu_custom_call.1} parent=5 // pred_region
        %s155 = ssub.s32 %s12, 1
        // Predicated region
        $region13: #{tpu_custom_call.1} parent=11 // pred_check
          %p156 = pneg %p87
        $region14: #{tpu_custom_call.1} parent=11 // pred_check_branch
          %158 = sbr.rel (%p156) target = $region16
        $region15: #{tpu_custom_call.1} parent=11 // pred_region
          %s159 = smul.u32 4, %s24
          %p160 = scmp.lt.s32.totalorder %s159, 3
          %s161 = scalar_select %p160, %s159, 3
          %p162 = scmp.lt.s32.totalorder %s23, 0
          %s163 = scalar_select %p162, %s23, 0
          %s164 = sadd.s32 %s163, %s161
          %s165 = smul.addr %s164, 4
          %s166 = scalar_lea.vmem %s1, %s165
          %s167 = smul.u32 4, %s24
        $region16: #{tpu_custom_call.1} parent=11 // pred_fallthru
          _
        // Predicated region
        $region17: #{tpu_custom_call.1} parent=11 // pred_check
          %p168 = pneg %p113
        $region18: #{tpu_custom_call.1} parent=11 // pred_check_branch
          %170 = sbr.rel (%p168) target = $region20
        $region19: #{tpu_custom_call.1} parent=11 // pred_region
          %p171 = scmp.lt.s32.totalorder %s23, 0
          %s172 = scalar_select %p171, %s23, 0
          %s173 = scalar_lea.vmem %s2, %s172
        $region20: #{tpu_custom_call.1} parent=11 // pred_fallthru
          _
      $region12: #{tpu_custom_call.1} parent=5 // pred_fallthru
        _
      %p174 = scmp.lt.s32.totalorder %s12, 23
      // Predicated region
      $region21: #{tpu_custom_call.1} parent=5 // pred_check
        %p175 = pneg %p174
      $region22: #{tpu_custom_call.1} parent=5 // pred_check_branch
        %177 = sbr.rel (%p175) target = $region24
      $region23: #{tpu_custom_call.1} parent=5 // pred_region
        // Predicated region
        $region25: #{tpu_custom_call.1} parent=23 // pred_check
          %p178 = pneg %p53
        $region26: #{tpu_custom_call.1} parent=23 // pred_check_branch
          %180 = sbr.rel (%p178) target = $region28
        $region27: #{tpu_custom_call.1} parent=23 // pred_region
          %s181 = smul.u32 256, %s19
          %p182 = scmp.lt.s32.totalorder %s181, 5887
          %s183 = scalar_select %p182, %s181, 5887
          %p184 = scmp.lt.s32.totalorder %s21, 0
          %s185 = scalar_select %p184, %s21, 0
          %s186 = sadd.s32 %s185, %s183
          %s187 = smul.addr %s186, 4
          %s188 = scalar_lea.vmem %s0, %s187
          %s189 = smul.u32 256, %s19
        $region28: #{tpu_custom_call.1} parent=23 // pred_fallthru
          _
      $region24: #{tpu_custom_call.1} parent=5 // pred_fallthru
        _
      %p190 = scmp.le.s32.totalorder 1, %s12
      %p191 = scmp.lt.s32.totalorder %s12, 24
      %p192 = pnand %p190, %p191
      %p193 = pneg %p192
      // Predicated region
      $region29: #{tpu_custom_call.1} parent=5 // pred_check
        _
      $region30: #{tpu_custom_call.1} parent=5 // pred_check_branch
        %195 = sbr.rel (%p192) target = $region32
      $region31: #{tpu_custom_call.1} parent=5 // pred_region
        %s196 = ssub.s32 %s12, 1
        %s197 = smul.u32 256, %s22
        %p198 = scmp.lt.s32.totalorder %s197, 5887
        %s199 = scalar_select %p198, %s197, 5887
        %p200 = scmp.lt.s32.totalorder %s24, 0
        %s201 = scalar_select %p200, %s24, 0
        %s202 = sadd.s32 %s201, %s199
        %s203 = smul.addr %s202, 4
        %s204 = scalar_lea.vmem %s0, %s203
        %p205 = pneg %p59
        %p206 = pneg %p56
        %s207 = smul.u32 4, %s24
        %p208 = scmp.lt.s32.totalorder %s207, 3
        %s209 = scalar_select %p208, %s207, 3
        %p210 = scmp.lt.s32.totalorder %s23, 0
        %s211 = scalar_select %p210, %s23, 0
        %s212 = sadd.s32 %s211, %s209
        %s213 = smul.addr %s212, 4
        %s214 = scalar_lea.vmem %s1, %s213
        %p215 = pneg %p87
        %p216 = pneg %p84
        %p217 = scmp.lt.s32.totalorder %s23, 0
        %s218 = scalar_select %p217, %s23, 0
        %s219 = scalar_lea.vmem %s2, %s218
        %p220 = pneg %p113
        %p221 = pneg %p110
        %p222 = pneg %p141
        %p223 = pneg %p138
        %s224 = sand.u32 %s128, 1
        %s225 = scalar_lea.sflag [#allocation3], %s224
        %s226 = sand.u32 %s128, 1
        %s227 = smul.addr %s226, 1024
        %s228 = scalar_lea.vmem [#allocation2], %s227
        %s229 = smul.u32 256, %s22
        %p230 = scmp.lt.s32.totalorder %s229, 5887
        %s231 = scalar_select %p230, %s229, 5887
        %p232 = scmp.lt.s32.totalorder %s24, 0
        %s233 = scalar_select %p232, %s24, 0
        %s234 = sadd.s32 %s233, %s231
        %s235 = smul.addr %s234, 4
        %s236 = scalar_lea.vmem %s0, %s235
        %s237 = smul.u32 256, %s22
        %s238 = smul.u32 4, %s24
        %p239 = scmp.lt.s32.totalorder %s238, 3
        %s240 = scalar_select %p239, %s238, 3
        %p241 = scmp.lt.s32.totalorder %s23, 0
        %s242 = scalar_select %p241, %s23, 0
        %s243 = sadd.s32 %s242, %s240
        %s244 = smul.addr %s243, 4
        %s245 = scalar_lea.vmem %s1, %s244
        %s246 = smul.u32 4, %s24
        %p247 = scmp.lt.s32.totalorder %s23, 0
        %s248 = scalar_select %p247, %s23, 0
        %s249 = scalar_lea.vmem %s2, %s248
        %s250 = smul.u32 256, %s22
        %v252 = vld [vmem:[%s236] sm:$0xf]
        %v253 = vld [vmem:[%s236 + $0x4] sm:$0xf]
        %v254 = vld [vmem:[%s236 + $0x8] sm:$0xf]
        %v255 = vld [vmem:[%s236 + $0xc] sm:$0xf]
        %v256 = vld [vmem:[%s236 + $0x10] sm:$0xf]
        %v257 = vld [vmem:[%s236 + $0x14] sm:$0xf]
        %v258 = vld [vmem:[%s236 + $0x18] sm:$0xf]
        %v259 = vld [vmem:[%s236 + $0x1c] sm:$0xf]
        %v260 = vld [vmem:[%s236 + $0x20] sm:$0xf]
        %v261 = vld [vmem:[%s236 + $0x24] sm:$0xf]
        %v262 = vld [vmem:[%s236 + $0x28] sm:$0xf]
        %v263 = vld [vmem:[%s236 + $0x2c] sm:$0xf]
        %v264 = vld [vmem:[%s236 + $0x30] sm:$0xf]
        %v265 = vld [vmem:[%s236 + $0x34] sm:$0xf]
        %v266 = vld [vmem:[%s236 + $0x38] sm:$0xf]
        %v267 = vld [vmem:[%s236 + $0x3c] sm:$0xf]
        %v268 = vld [vmem:[%s236 + $0x40] sm:$0xf]
        %v269 = vld [vmem:[%s236 + $0x44] sm:$0xf]
        %v270 = vld [vmem:[%s236 + $0x48] sm:$0xf]
        %v271 = vld [vmem:[%s236 + $0x4c] sm:$0xf]
        %v272 = vld [vmem:[%s236 + $0x50] sm:$0xf]
        %v273 = vld [vmem:[%s236 + $0x54] sm:$0xf]
        %v274 = vld [vmem:[%s236 + $0x58] sm:$0xf]
        %v275 = vld [vmem:[%s236 + $0x5c] sm:$0xf]
        %v276 = vld [vmem:[%s236 + $0x60] sm:$0xf]
        %v277 = vld [vmem:[%s236 + $0x64] sm:$0xf]
        %v278 = vld [vmem:[%s236 + $0x68] sm:$0xf]
        %v279 = vld [vmem:[%s236 + $0x6c] sm:$0xf]
        %v280 = vld [vmem:[%s236 + $0x70] sm:$0xf]
        %v281 = vld [vmem:[%s236 + $0x74] sm:$0xf]
        %v282 = vld [vmem:[%s236 + $0x78] sm:$0xf]
        %v283 = vld [vmem:[%s236 + $0x7c] sm:$0xf]
        %v284 = vld [vmem:[%s236 + $0x80] sm:$0xf]
        %v285 = vld [vmem:[%s236 + $0x84] sm:$0xf]
        %v286 = vld [vmem:[%s236 + $0x88] sm:$0xf]
        %v287 = vld [vmem:[%s236 + $0x8c] sm:$0xf]
        %v288 = vld [vmem:[%s236 + $0x90] sm:$0xf]
        %v289 = vld [vmem:[%s236 + $0x94] sm:$0xf]
        %v290 = vld [vmem:[%s236 + $0x98] sm:$0xf]
        %v291 = vld [vmem:[%s236 + $0x9c] sm:$0xf]
        %v292 = vld [vmem:[%s236 + $0xa0] sm:$0xf]
        %v293 = vld [vmem:[%s236 + $0xa4] sm:$0xf]
        %v294 = vld [vmem:[%s236 + $0xa8] sm:$0xf]
        %v295 = vld [vmem:[%s236 + $0xac] sm:$0xf]
        %v296 = vld [vmem:[%s236 + $0xb0] sm:$0xf]
        %v297 = vld [vmem:[%s236 + $0xb4] sm:$0xf]
        %v298 = vld [vmem:[%s236 + $0xb8] sm:$0xf]
        %v299 = vld [vmem:[%s236 + $0xbc] sm:$0xf]
        %v300 = vld [vmem:[%s236 + $0xc0] sm:$0xf]
        %v301 = vld [vmem:[%s236 + $0xc4] sm:$0xf]
        %v302 = vld [vmem:[%s236 + $0xc8] sm:$0xf]
        %v303 = vld [vmem:[%s236 + $0xcc] sm:$0xf]
        %v304 = vld [vmem:[%s236 + $0xd0] sm:$0xf]
        %v305 = vld [vmem:[%s236 + $0xd4] sm:$0xf]
        %v306 = vld [vmem:[%s236 + $0xd8] sm:$0xf]
        %v307 = vld [vmem:[%s236 + $0xdc] sm:$0xf]
        %v308 = vld [vmem:[%s236 + $0xe0] sm:$0xf]
        %v309 = vld [vmem:[%s236 + $0xe4] sm:$0xf]
        %v310 = vld [vmem:[%s236 + $0xe8] sm:$0xf]
        %v311 = vld [vmem:[%s236 + $0xec] sm:$0xf]
        %v312 = vld [vmem:[%s236 + $0xf0] sm:$0xf]
        %v313 = vld [vmem:[%s236 + $0xf4] sm:$0xf]
        %v314 = vld [vmem:[%s236 + $0xf8] sm:$0xf]
        %v315 = vld [vmem:[%s236 + $0xfc] sm:$0xf]
        %v316 = vld [vmem:[%s236 + $0x100] sm:$0xf]
        %v317 = vld [vmem:[%s236 + $0x104] sm:$0xf]
        %v318 = vld [vmem:[%s236 + $0x108] sm:$0xf]
        %v319 = vld [vmem:[%s236 + $0x10c] sm:$0xf]
        %v320 = vld [vmem:[%s236 + $0x110] sm:$0xf]
        %v321 = vld [vmem:[%s236 + $0x114] sm:$0xf]
        %v322 = vld [vmem:[%s236 + $0x118] sm:$0xf]
        %v323 = vld [vmem:[%s236 + $0x11c] sm:$0xf]
        %v324 = vld [vmem:[%s236 + $0x120] sm:$0xf]
        %v325 = vld [vmem:[%s236 + $0x124] sm:$0xf]
        %v326 = vld [vmem:[%s236 + $0x128] sm:$0xf]
        %v327 = vld [vmem:[%s236 + $0x12c] sm:$0xf]
        %v328 = vld [vmem:[%s236 + $0x130] sm:$0xf]
        %v329 = vld [vmem:[%s236 + $0x134] sm:$0xf]
        %v330 = vld [vmem:[%s236 + $0x138] sm:$0xf]
        %v331 = vld [vmem:[%s236 + $0x13c] sm:$0xf]
        %v332 = vld [vmem:[%s236 + $0x140] sm:$0xf]
        %v333 = vld [vmem:[%s236 + $0x144] sm:$0xf]
        %v334 = vld [vmem:[%s236 + $0x148] sm:$0xf]
        %v335 = vld [vmem:[%s236 + $0x14c] sm:$0xf]
        %v336 = vld [vmem:[%s236 + $0x150] sm:$0xf]
        %v337 = vld [vmem:[%s236 + $0x154] sm:$0xf]
        %v338 = vld [vmem:[%s236 + $0x158] sm:$0xf]
        %v339 = vld [vmem:[%s236 + $0x15c] sm:$0xf]
        %v340 = vld [vmem:[%s236 + $0x160] sm:$0xf]
        %v341 = vld [vmem:[%s236 + $0x164] sm:$0xf]
        %v342 = vld [vmem:[%s236 + $0x168] sm:$0xf]
        %v343 = vld [vmem:[%s236 + $0x16c] sm:$0xf]
        %v344 = vld [vmem:[%s236 + $0x170] sm:$0xf]
        %v345 = vld [vmem:[%s236 + $0x174] sm:$0xf]
        %v346 = vld [vmem:[%s236 + $0x178] sm:$0xf]
        %v347 = vld [vmem:[%s236 + $0x17c] sm:$0xf]
        %v348 = vld [vmem:[%s236 + $0x180] sm:$0xf]
        %v349 = vld [vmem:[%s236 + $0x184] sm:$0xf]
        %v350 = vld [vmem:[%s236 + $0x188] sm:$0xf]
        %v351 = vld [vmem:[%s236 + $0x18c] sm:$0xf]
        %v352 = vld [vmem:[%s236 + $0x190] sm:$0xf]
        %v353 = vld [vmem:[%s236 + $0x194] sm:$0xf]
        %v354 = vld [vmem:[%s236 + $0x198] sm:$0xf]
        %v355 = vld [vmem:[%s236 + $0x19c] sm:$0xf]
        %v356 = vld [vmem:[%s236 + $0x1a0] sm:$0xf]
        %v357 = vld [vmem:[%s236 + $0x1a4] sm:$0xf]
        %v358 = vld [vmem:[%s236 + $0x1a8] sm:$0xf]
        %v359 = vld [vmem:[%s236 + $0x1ac] sm:$0xf]
        %v360 = vld [vmem:[%s236 + $0x1b0] sm:$0xf]
        %v361 = vld [vmem:[%s236 + $0x1b4] sm:$0xf]
        %v362 = vld [vmem:[%s236 + $0x1b8] sm:$0xf]
        %v363 = vld [vmem:[%s236 + $0x1bc] sm:$0xf]
        %v364 = vld [vmem:[%s236 + $0x1c0] sm:$0xf]
        %v365 = vld [vmem:[%s236 + $0x1c4] sm:$0xf]
        %v366 = vld [vmem:[%s236 + $0x1c8] sm:$0xf]
        %v367 = vld [vmem:[%s236 + $0x1cc] sm:$0xf]
        %v368 = vld [vmem:[%s236 + $0x1d0] sm:$0xf]
        %v369 = vld [vmem:[%s236 + $0x1d4] sm:$0xf]
        %v370 = vld [vmem:[%s236 + $0x1d8] sm:$0xf]
        %v371 = vld [vmem:[%s236 + $0x1dc] sm:$0xf]
        %v372 = vld [vmem:[%s236 + $0x1e0] sm:$0xf]
        %v373 = vld [vmem:[%s236 + $0x1e4] sm:$0xf]
        %v374 = vld [vmem:[%s236 + $0x1e8] sm:$0xf]
        %v375 = vld [vmem:[%s236 + $0x1ec] sm:$0xf]
        %v376 = vld [vmem:[%s236 + $0x1f0] sm:$0xf]
        %v377 = vld [vmem:[%s236 + $0x1f4] sm:$0xf]
        %v378 = vld [vmem:[%s236 + $0x1f8] sm:$0xf]
        %v379 = vld [vmem:[%s236 + $0x1fc] sm:$0xf]
        %v380 = vld [vmem:[%s236 + $0x200] sm:$0xf]
        %v381 = vld [vmem:[%s236 + $0x204] sm:$0xf]
        %v382 = vld [vmem:[%s236 + $0x208] sm:$0xf]
        %v383 = vld [vmem:[%s236 + $0x20c] sm:$0xf]
        %v384 = vld [vmem:[%s236 + $0x210] sm:$0xf]
        %v385 = vld [vmem:[%s236 + $0x214] sm:$0xf]
        %v386 = vld [vmem:[%s236 + $0x218] sm:$0xf]
        %v387 = vld [vmem:[%s236 + $0x21c] sm:$0xf]
        %v388 = vld [vmem:[%s236 + $0x220] sm:$0xf]
        %v389 = vld [vmem:[%s236 + $0x224] sm:$0xf]
        %v390 = vld [vmem:[%s236 + $0x228] sm:$0xf]
        %v391 = vld [vmem:[%s236 + $0x22c] sm:$0xf]
        %v392 = vld [vmem:[%s236 + $0x230] sm:$0xf]
        %v393 = vld [vmem:[%s236 + $0x234] sm:$0xf]
        %v394 = vld [vmem:[%s236 + $0x238] sm:$0xf]
        %v395 = vld [vmem:[%s236 + $0x23c] sm:$0xf]
        %v396 = vld [vmem:[%s236 + $0x240] sm:$0xf]
        %v397 = vld [vmem:[%s236 + $0x244] sm:$0xf]
        %v398 = vld [vmem:[%s236 + $0x248] sm:$0xf]
        %v399 = vld [vmem:[%s236 + $0x24c] sm:$0xf]
        %v400 = vld [vmem:[%s236 + $0x250] sm:$0xf]
        %v401 = vld [vmem:[%s236 + $0x254] sm:$0xf]
        %v402 = vld [vmem:[%s236 + $0x258] sm:$0xf]
        %v403 = vld [vmem:[%s236 + $0x25c] sm:$0xf]
        %v404 = vld [vmem:[%s236 + $0x260] sm:$0xf]
        %v405 = vld [vmem:[%s236 + $0x264] sm:$0xf]
        %v406 = vld [vmem:[%s236 + $0x268] sm:$0xf]
        %v407 = vld [vmem:[%s236 + $0x26c] sm:$0xf]
        %v408 = vld [vmem:[%s236 + $0x270] sm:$0xf]
        %v409 = vld [vmem:[%s236 + $0x274] sm:$0xf]
        %v410 = vld [vmem:[%s236 + $0x278] sm:$0xf]
        %v411 = vld [vmem:[%s236 + $0x27c] sm:$0xf]
        %v412 = vld [vmem:[%s236 + $0x280] sm:$0xf]
        %v413 = vld [vmem:[%s236 + $0x284] sm:$0xf]
        %v414 = vld [vmem:[%s236 + $0x288] sm:$0xf]
        %v415 = vld [vmem:[%s236 + $0x28c] sm:$0xf]
        %v416 = vld [vmem:[%s236 + $0x290] sm:$0xf]
        %v417 = vld [vmem:[%s236 + $0x294] sm:$0xf]
        %v418 = vld [vmem:[%s236 + $0x298] sm:$0xf]
        %v419 = vld [vmem:[%s236 + $0x29c] sm:$0xf]
        %v420 = vld [vmem:[%s236 + $0x2a0] sm:$0xf]
        %v421 = vld [vmem:[%s236 + $0x2a4] sm:$0xf]
        %v422 = vld [vmem:[%s236 + $0x2a8] sm:$0xf]
        %v423 = vld [vmem:[%s236 + $0x2ac] sm:$0xf]
        %v424 = vld [vmem:[%s236 + $0x2b0] sm:$0xf]
        %v425 = vld [vmem:[%s236 + $0x2b4] sm:$0xf]
        %v426 = vld [vmem:[%s236 + $0x2b8] sm:$0xf]
        %v427 = vld [vmem:[%s236 + $0x2bc] sm:$0xf]
        %v428 = vld [vmem:[%s236 + $0x2c0] sm:$0xf]
        %v429 = vld [vmem:[%s236 + $0x2c4] sm:$0xf]
        %v430 = vld [vmem:[%s236 + $0x2c8] sm:$0xf]
        %v431 = vld [vmem:[%s236 + $0x2cc] sm:$0xf]
        %v432 = vld [vmem:[%s236 + $0x2d0] sm:$0xf]
        %v433 = vld [vmem:[%s236 + $0x2d4] sm:$0xf]
        %v434 = vld [vmem:[%s236 + $0x2d8] sm:$0xf]
        %v435 = vld [vmem:[%s236 + $0x2dc] sm:$0xf]
        %v436 = vld [vmem:[%s236 + $0x2e0] sm:$0xf]
        %v437 = vld [vmem:[%s236 + $0x2e4] sm:$0xf]
        %v438 = vld [vmem:[%s236 + $0x2e8] sm:$0xf]
        %v439 = vld [vmem:[%s236 + $0x2ec] sm:$0xf]
        %v440 = vld [vmem:[%s236 + $0x2f0] sm:$0xf]
        %v441 = vld [vmem:[%s236 + $0x2f4] sm:$0xf]
        %v442 = vld [vmem:[%s236 + $0x2f8] sm:$0xf]
        %v443 = vld [vmem:[%s236 + $0x2fc] sm:$0xf]
        %v444 = vld [vmem:[%s236 + $0x300] sm:$0xf]
        %v445 = vld [vmem:[%s236 + $0x304] sm:$0xf]
        %v446 = vld [vmem:[%s236 + $0x308] sm:$0xf]
        %v447 = vld [vmem:[%s236 + $0x30c] sm:$0xf]
        %v448 = vld [vmem:[%s236 + $0x310] sm:$0xf]
        %v449 = vld [vmem:[%s236 + $0x314] sm:$0xf]
        %v450 = vld [vmem:[%s236 + $0x318] sm:$0xf]
        %v451 = vld [vmem:[%s236 + $0x31c] sm:$0xf]
        %v452 = vld [vmem:[%s236 + $0x320] sm:$0xf]
        %v453 = vld [vmem:[%s236 + $0x324] sm:$0xf]
        %v454 = vld [vmem:[%s236 + $0x328] sm:$0xf]
        %v455 = vld [vmem:[%s236 + $0x32c] sm:$0xf]
        %v456 = vld [vmem:[%s236 + $0x330] sm:$0xf]
        %v457 = vld [vmem:[%s236 + $0x334] sm:$0xf]
        %v458 = vld [vmem:[%s236 + $0x338] sm:$0xf]
        %v459 = vld [vmem:[%s236 + $0x33c] sm:$0xf]
        %v460 = vld [vmem:[%s236 + $0x340] sm:$0xf]
        %v461 = vld [vmem:[%s236 + $0x344] sm:$0xf]
        %v462 = vld [vmem:[%s236 + $0x348] sm:$0xf]
        %v463 = vld [vmem:[%s236 + $0x34c] sm:$0xf]
        %v464 = vld [vmem:[%s236 + $0x350] sm:$0xf]
        %v465 = vld [vmem:[%s236 + $0x354] sm:$0xf]
        %v466 = vld [vmem:[%s236 + $0x358] sm:$0xf]
        %v467 = vld [vmem:[%s236 + $0x35c] sm:$0xf]
        %v468 = vld [vmem:[%s236 + $0x360] sm:$0xf]
        %v469 = vld [vmem:[%s236 + $0x364] sm:$0xf]
        %v470 = vld [vmem:[%s236 + $0x368] sm:$0xf]
        %v471 = vld [vmem:[%s236 + $0x36c] sm:$0xf]
        %v472 = vld [vmem:[%s236 + $0x370] sm:$0xf]
        %v473 = vld [vmem:[%s236 + $0x374] sm:$0xf]
        %v474 = vld [vmem:[%s236 + $0x378] sm:$0xf]
        %v475 = vld [vmem:[%s236 + $0x37c] sm:$0xf]
        %v476 = vld [vmem:[%s236 + $0x380] sm:$0xf]
        %v477 = vld [vmem:[%s236 + $0x384] sm:$0xf]
        %v478 = vld [vmem:[%s236 + $0x388] sm:$0xf]
        %v479 = vld [vmem:[%s236 + $0x38c] sm:$0xf]
        %v480 = vld [vmem:[%s236 + $0x390] sm:$0xf]
        %v481 = vld [vmem:[%s236 + $0x394] sm:$0xf]
        %v482 = vld [vmem:[%s236 + $0x398] sm:$0xf]
        %v483 = vld [vmem:[%s236 + $0x39c] sm:$0xf]
        %v484 = vld [vmem:[%s236 + $0x3a0] sm:$0xf]
        %v485 = vld [vmem:[%s236 + $0x3a4] sm:$0xf]
        %v486 = vld [vmem:[%s236 + $0x3a8] sm:$0xf]
        %v487 = vld [vmem:[%s236 + $0x3ac] sm:$0xf]
        %v488 = vld [vmem:[%s236 + $0x3b0] sm:$0xf]
        %v489 = vld [vmem:[%s236 + $0x3b4] sm:$0xf]
        %v490 = vld [vmem:[%s236 + $0x3b8] sm:$0xf]
        %v491 = vld [vmem:[%s236 + $0x3bc] sm:$0xf]
        %v492 = vld [vmem:[%s236 + $0x3c0] sm:$0xf]
        %v493 = vld [vmem:[%s236 + $0x3c4] sm:$0xf]
        %v494 = vld [vmem:[%s236 + $0x3c8] sm:$0xf]
        %v495 = vld [vmem:[%s236 + $0x3cc] sm:$0xf]
        %v496 = vld [vmem:[%s236 + $0x3d0] sm:$0xf]
        %v497 = vld [vmem:[%s236 + $0x3d4] sm:$0xf]
        %v498 = vld [vmem:[%s236 + $0x3d8] sm:$0xf]
        %v499 = vld [vmem:[%s236 + $0x3dc] sm:$0xf]
        %v500 = vld [vmem:[%s236 + $0x3e0] sm:$0xf]
        %v501 = vld [vmem:[%s236 + $0x3e4] sm:$0xf]
        %v502 = vld [vmem:[%s236 + $0x3e8] sm:$0xf]
        %v503 = vld [vmem:[%s236 + $0x3ec] sm:$0xf]
        %v504 = vld [vmem:[%s236 + $0x3f0] sm:$0xf]
        %v505 = vld [vmem:[%s236 + $0x3f4] sm:$0xf]
        %v506 = vld [vmem:[%s236 + $0x3f8] sm:$0xf]
        %v507 = vld [vmem:[%s236 + $0x3fc] sm:$0xf]
        %v508 = vld [vmem:[%s245] sm:$0xf]
        %v509 = vld [vmem:[%s245 + $0x4] sm:$0xf]
        %v510 = vld [vmem:[%s245 + $0x8] sm:$0xf]
        %v511 = vld [vmem:[%s245 + $0xc] sm:$0x3]
        %v512 = vld [vmem:[%s249] sm:$0x1]
        %v514 = vlaneseq
        %v515 = vshrl.u32 %v514, 7
        %v516 = vsub.s32 0, %v515
        %v517 = vrot.slane %v512, %v516
        %v775 = vunpack.c.l.b16 %v252
        %v776 = vunpack.c.l.b16 %v253
        %v777 = vunpack.c.l.b16 %v254
        %v778 = vunpack.c.l.b16 %v255
        %v779 = vunpack.c.l.b16 %v256
        %v780 = vunpack.c.l.b16 %v257
        %v781 = vunpack.c.l.b16 %v258
        %v782 = vunpack.c.l.b16 %v259
        %v783 = vunpack.c.l.b16 %v260
        %v784 = vunpack.c.l.b16 %v261
        %v785 = vunpack.c.l.b16 %v262
        %v786 = vunpack.c.l.b16 %v263
        %v787 = vunpack.c.l.b16 %v264
        %v788 = vunpack.c.l.b16 %v265
        %v789 = vunpack.c.l.b16 %v266
        %v790 = vunpack.c.l.b16 %v267
        %v791 = vunpack.c.l.b16 %v268
        %v792 = vunpack.c.l.b16 %v269
        %v793 = vunpack.c.l.b16 %v270
        %v794 = vunpack.c.l.b16 %v271
        %v795 = vunpack.c.l.b16 %v272
        %v796 = vunpack.c.l.b16 %v273
        %v797 = vunpack.c.l.b16 %v274
        %v798 = vunpack.c.l.b16 %v275
        %v799 = vunpack.c.l.b16 %v276
        %v800 = vunpack.c.l.b16 %v277
        %v801 = vunpack.c.l.b16 %v278
        %v802 = vunpack.c.l.b16 %v279
        %v803 = vunpack.c.l.b16 %v280
        %v804 = vunpack.c.l.b16 %v281
        %v805 = vunpack.c.l.b16 %v282
        %v806 = vunpack.c.l.b16 %v283
        %v807 = vunpack.c.l.b16 %v284
        %v808 = vunpack.c.l.b16 %v285
        %v809 = vunpack.c.l.b16 %v286
        %v810 = vunpack.c.l.b16 %v287
        %v811 = vunpack.c.l.b16 %v288
        %v812 = vunpack.c.l.b16 %v289
        %v813 = vunpack.c.l.b16 %v290
        %v814 = vunpack.c.l.b16 %v291
        %v815 = vunpack.c.l.b16 %v292
        %v816 = vunpack.c.l.b16 %v293
        %v817 = vunpack.c.l.b16 %v294
        %v818 = vunpack.c.l.b16 %v295
        %v819 = vunpack.c.l.b16 %v296
        %v820 = vunpack.c.l.b16 %v297
        %v821 = vunpack.c.l.b16 %v298
        %v822 = vunpack.c.l.b16 %v299
        %v823 = vunpack.c.l.b16 %v300
        %v824 = vunpack.c.l.b16 %v301
        %v825 = vunpack.c.l.b16 %v302
        %v826 = vunpack.c.l.b16 %v303
        %v827 = vunpack.c.l.b16 %v304
        %v828 = vunpack.c.l.b16 %v305
        %v829 = vunpack.c.l.b16 %v306
        %v830 = vunpack.c.l.b16 %v307
        %v831 = vunpack.c.l.b16 %v308
        %v832 = vunpack.c.l.b16 %v309
        %v833 = vunpack.c.l.b16 %v310
        %v834 = vunpack.c.l.b16 %v311
        %v835 = vunpack.c.l.b16 %v312
        %v836 = vunpack.c.l.b16 %v313
        %v837 = vunpack.c.l.b16 %v314
        %v838 = vunpack.c.l.b16 %v315
        %v839 = vunpack.c.l.b16 %v316
        %v840 = vunpack.c.l.b16 %v317
        %v841 = vunpack.c.l.b16 %v318
        %v842 = vunpack.c.l.b16 %v319
        %v843 = vunpack.c.l.b16 %v320
        %v844 = vunpack.c.l.b16 %v321
        %v845 = vunpack.c.l.b16 %v322
        %v846 = vunpack.c.l.b16 %v323
        %v847 = vunpack.c.l.b16 %v324
        %v848 = vunpack.c.l.b16 %v325
        %v849 = vunpack.c.l.b16 %v326
        %v850 = vunpack.c.l.b16 %v327
        %v851 = vunpack.c.l.b16 %v328
        %v852 = vunpack.c.l.b16 %v329
        %v853 = vunpack.c.l.b16 %v330
        %v854 = vunpack.c.l.b16 %v331
        %v855 = vunpack.c.l.b16 %v332
        %v856 = vunpack.c.l.b16 %v333
        %v857 = vunpack.c.l.b16 %v334
        %v858 = vunpack.c.l.b16 %v335
        %v859 = vunpack.c.l.b16 %v336
        %v860 = vunpack.c.l.b16 %v337
        %v861 = vunpack.c.l.b16 %v338
        %v862 = vunpack.c.l.b16 %v339
        %v863 = vunpack.c.l.b16 %v340
        %v864 = vunpack.c.l.b16 %v341
        %v865 = vunpack.c.l.b16 %v342
        %v866 = vunpack.c.l.b16 %v343
        %v867 = vunpack.c.l.b16 %v344
        %v868 = vunpack.c.l.b16 %v345
        %v869 = vunpack.c.l.b16 %v346
        %v870 = vunpack.c.l.b16 %v347
        %v871 = vunpack.c.l.b16 %v348
        %v872 = vunpack.c.l.b16 %v349
        %v873 = vunpack.c.l.b16 %v350
        %v874 = vunpack.c.l.b16 %v351
        %v875 = vunpack.c.l.b16 %v352
        %v876 = vunpack.c.l.b16 %v353
        %v877 = vunpack.c.l.b16 %v354
        %v878 = vunpack.c.l.b16 %v355
        %v879 = vunpack.c.l.b16 %v356
        %v880 = vunpack.c.l.b16 %v357
        %v881 = vunpack.c.l.b16 %v358
        %v882 = vunpack.c.l.b16 %v359
        %v883 = vunpack.c.l.b16 %v360
        %v884 = vunpack.c.l.b16 %v361
        %v885 = vunpack.c.l.b16 %v362
        %v886 = vunpack.c.l.b16 %v363
        %v887 = vunpack.c.l.b16 %v364
        %v888 = vunpack.c.l.b16 %v365
        %v889 = vunpack.c.l.b16 %v366
        %v890 = vunpack.c.l.b16 %v367
        %v891 = vunpack.c.l.b16 %v368
        %v892 = vunpack.c.l.b16 %v369
        %v893 = vunpack.c.l.b16 %v370
        %v894 = vunpack.c.l.b16 %v371
        %v895 = vunpack.c.l.b16 %v372
        %v896 = vunpack.c.l.b16 %v373
        %v897 = vunpack.c.l.b16 %v374
        %v898 = vunpack.c.l.b16 %v375
        %v899 = vunpack.c.l.b16 %v376
        %v900 = vunpack.c.l.b16 %v377
        %v901 = vunpack.c.l.b16 %v378
        %v902 = vunpack.c.l.b16 %v379
        %v903 = vunpack.c.l.b16 %v380
        %v904 = vunpack.c.l.b16 %v381
        %v905 = vunpack.c.l.b16 %v382
        %v906 = vunpack.c.l.b16 %v383
        %v907 = vunpack.c.l.b16 %v384
        %v908 = vunpack.c.l.b16 %v385
        %v909 = vunpack.c.l.b16 %v386
        %v910 = vunpack.c.l.b16 %v387
        %v911 = vunpack.c.l.b16 %v388
        %v912 = vunpack.c.l.b16 %v389
        %v913 = vunpack.c.l.b16 %v390
        %v914 = vunpack.c.l.b16 %v391
        %v915 = vunpack.c.l.b16 %v392
        %v916 = vunpack.c.l.b16 %v393
        %v917 = vunpack.c.l.b16 %v394
        %v918 = vunpack.c.l.b16 %v395
        %v919 = vunpack.c.l.b16 %v396
        %v920 = vunpack.c.l.b16 %v397
        %v921 = vunpack.c.l.b16 %v398
        %v922 = vunpack.c.l.b16 %v399
        %v923 = vunpack.c.l.b16 %v400
        %v924 = vunpack.c.l.b16 %v401
        %v925 = vunpack.c.l.b16 %v402
        %v926 = vunpack.c.l.b16 %v403
        %v927 = vunpack.c.l.b16 %v404
        %v928 = vunpack.c.l.b16 %v405
        %v929 = vunpack.c.l.b16 %v406
        %v930 = vunpack.c.l.b16 %v407
        %v931 = vunpack.c.l.b16 %v408
        %v932 = vunpack.c.l.b16 %v409
        %v933 = vunpack.c.l.b16 %v410
        %v934 = vunpack.c.l.b16 %v411
        %v935 = vunpack.c.l.b16 %v412
        %v936 = vunpack.c.l.b16 %v413
        %v937 = vunpack.c.l.b16 %v414
        %v938 = vunpack.c.l.b16 %v415
        %v939 = vunpack.c.l.b16 %v416
        %v940 = vunpack.c.l.b16 %v417
        %v941 = vunpack.c.l.b16 %v418
        %v942 = vunpack.c.l.b16 %v419
        %v943 = vunpack.c.l.b16 %v420
        %v944 = vunpack.c.l.b16 %v421
        %v945 = vunpack.c.l.b16 %v422
        %v946 = vunpack.c.l.b16 %v423
        %v947 = vunpack.c.l.b16 %v424
        %v948 = vunpack.c.l.b16 %v425
        %v949 = vunpack.c.l.b16 %v426
        %v950 = vunpack.c.l.b16 %v427
        %v951 = vunpack.c.l.b16 %v428
        %v952 = vunpack.c.l.b16 %v429
        %v953 = vunpack.c.l.b16 %v430
        %v954 = vunpack.c.l.b16 %v431
        %v955 = vunpack.c.l.b16 %v432
        %v956 = vunpack.c.l.b16 %v433
        %v957 = vunpack.c.l.b16 %v434
        %v958 = vunpack.c.l.b16 %v435
        %v959 = vunpack.c.l.b16 %v436
        %v960 = vunpack.c.l.b16 %v437
        %v961 = vunpack.c.l.b16 %v438
        %v962 = vunpack.c.l.b16 %v439
        %v963 = vunpack.c.l.b16 %v440
        %v964 = vunpack.c.l.b16 %v441
        %v965 = vunpack.c.l.b16 %v442
        %v966 = vunpack.c.l.b16 %v443
        %v967 = vunpack.c.l.b16 %v444
        %v968 = vunpack.c.l.b16 %v445
        %v969 = vunpack.c.l.b16 %v446
        %v970 = vunpack.c.l.b16 %v447
        %v971 = vunpack.c.l.b16 %v448
        %v972 = vunpack.c.l.b16 %v449
        %v973 = vunpack.c.l.b16 %v450
        %v974 = vunpack.c.l.b16 %v451
        %v975 = vunpack.c.l.b16 %v452
        %v976 = vunpack.c.l.b16 %v453
        %v977 = vunpack.c.l.b16 %v454
        %v978 = vunpack.c.l.b16 %v455
        %v979 = vunpack.c.l.b16 %v456
        %v980 = vunpack.c.l.b16 %v457
        %v981 = vunpack.c.l.b16 %v458
        %v982 = vunpack.c.l.b16 %v459
        %v983 = vunpack.c.l.b16 %v460
        %v984 = vunpack.c.l.b16 %v461
        %v985 = vunpack.c.l.b16 %v462
        %v986 = vunpack.c.l.b16 %v463
        %v987 = vunpack.c.l.b16 %v464
        %v988 = vunpack.c.l.b16 %v465
        %v989 = vunpack.c.l.b16 %v466
        %v990 = vunpack.c.l.b16 %v467
        %v991 = vunpack.c.l.b16 %v468
        %v992 = vunpack.c.l.b16 %v469
        %v993 = vunpack.c.l.b16 %v470
        %v994 = vunpack.c.l.b16 %v471
        %v995 = vunpack.c.l.b16 %v472
        %v996 = vunpack.c.l.b16 %v473
        %v997 = vunpack.c.l.b16 %v474
        %v998 = vunpack.c.l.b16 %v475
        %v999 = vunpack.c.l.b16 %v476
        %v1000 = vunpack.c.l.b16 %v477
        %v1001 = vunpack.c.l.b16 %v478
        %v1002 = vunpack.c.l.b16 %v479
        %v1003 = vunpack.c.l.b16 %v480
        %v1004 = vunpack.c.l.b16 %v481
        %v1005 = vunpack.c.l.b16 %v482
        %v1006 = vunpack.c.l.b16 %v483
        %v1007 = vunpack.c.l.b16 %v484
        %v1008 = vunpack.c.l.b16 %v485
        %v1009 = vunpack.c.l.b16 %v486
        %v1010 = vunpack.c.l.b16 %v487
        %v1011 = vunpack.c.l.b16 %v488
        %v1012 = vunpack.c.l.b16 %v489
        %v1013 = vunpack.c.l.b16 %v490
        %v1014 = vunpack.c.l.b16 %v491
        %v1015 = vunpack.c.l.b16 %v492
        %v1016 = vunpack.c.l.b16 %v493
        %v1017 = vunpack.c.l.b16 %v494
        %v1018 = vunpack.c.l.b16 %v495
        %v1019 = vunpack.c.l.b16 %v496
        %v1020 = vunpack.c.l.b16 %v497
        %v1021 = vunpack.c.l.b16 %v498
        %v1022 = vunpack.c.l.b16 %v499
        %v1023 = vunpack.c.l.b16 %v500
        %v1024 = vunpack.c.l.b16 %v501
        %v1025 = vunpack.c.l.b16 %v502
        %v1026 = vunpack.c.l.b16 %v503
        %v1027 = vunpack.c.l.b16 %v504
        %v1028 = vunpack.c.l.b16 %v505
        %v1029 = vunpack.c.l.b16 %v506
        %v1030 = vunpack.c.l.b16 %v507
        %v1031 = vpack.c.b16 %v776, %v775
        %v1032 = vpack.c.b16 %v778, %v777
        %v1033 = vpack.c.b16 %v780, %v779
        %v1034 = vpack.c.b16 %v782, %v781
        %v1035 = vpack.c.b16 %v784, %v783
        %v1036 = vpack.c.b16 %v786, %v785
        %v1037 = vpack.c.b16 %v788, %v787
        %v1038 = vpack.c.b16 %v790, %v789
        %v1039 = vpack.c.b16 %v792, %v791
        %v1040 = vpack.c.b16 %v794, %v793
        %v1041 = vpack.c.b16 %v796, %v795
        %v1042 = vpack.c.b16 %v798, %v797
        %v1043 = vpack.c.b16 %v800, %v799
        %v1044 = vpack.c.b16 %v802, %v801
        %v1045 = vpack.c.b16 %v804, %v803
        %v1046 = vpack.c.b16 %v806, %v805
        %v1047 = vpack.c.b16 %v808, %v807
        %v1048 = vpack.c.b16 %v810, %v809
        %v1049 = vpack.c.b16 %v812, %v811
        %v1050 = vpack.c.b16 %v814, %v813
        %v1051 = vpack.c.b16 %v816, %v815
        %v1052 = vpack.c.b16 %v818, %v817
        %v1053 = vpack.c.b16 %v820, %v819
        %v1054 = vpack.c.b16 %v822, %v821
        %v1055 = vpack.c.b16 %v824, %v823
        %v1056 = vpack.c.b16 %v826, %v825
        %v1057 = vpack.c.b16 %v828, %v827
        %v1058 = vpack.c.b16 %v830, %v829
        %v1059 = vpack.c.b16 %v832, %v831
        %v1060 = vpack.c.b16 %v834, %v833
        %v1061 = vpack.c.b16 %v836, %v835
        %v1062 = vpack.c.b16 %v838, %v837
        %v1063 = vpack.c.b16 %v840, %v839
        %v1064 = vpack.c.b16 %v842, %v841
        %v1065 = vpack.c.b16 %v844, %v843
        %v1066 = vpack.c.b16 %v846, %v845
        %v1067 = vpack.c.b16 %v848, %v847
        %v1068 = vpack.c.b16 %v850, %v849
        %v1069 = vpack.c.b16 %v852, %v851
        %v1070 = vpack.c.b16 %v854, %v853
        %v1071 = vpack.c.b16 %v856, %v855
        %v1072 = vpack.c.b16 %v858, %v857
        %v1073 = vpack.c.b16 %v860, %v859
        %v1074 = vpack.c.b16 %v862, %v861
        %v1075 = vpack.c.b16 %v864, %v863
        %v1076 = vpack.c.b16 %v866, %v865
        %v1077 = vpack.c.b16 %v868, %v867
        %v1078 = vpack.c.b16 %v870, %v869
        %v1079 = vpack.c.b16 %v872, %v871
        %v1080 = vpack.c.b16 %v874, %v873
        %v1081 = vpack.c.b16 %v876, %v875
        %v1082 = vpack.c.b16 %v878, %v877
        %v1083 = vpack.c.b16 %v880, %v879
        %v1084 = vpack.c.b16 %v882, %v881
        %v1085 = vpack.c.b16 %v884, %v883
        %v1086 = vpack.c.b16 %v886, %v885
        %v1087 = vpack.c.b16 %v888, %v887
        %v1088 = vpack.c.b16 %v890, %v889
        %v1089 = vpack.c.b16 %v892, %v891
        %v1090 = vpack.c.b16 %v894, %v893
        %v1091 = vpack.c.b16 %v896, %v895
        %v1092 = vpack.c.b16 %v898, %v897
        %v1093 = vpack.c.b16 %v900, %v899
        %v1094 = vpack.c.b16 %v902, %v901
        %v1095 = vpack.c.b16 %v904, %v903
        %v1096 = vpack.c.b16 %v906, %v905
        %v1097 = vpack.c.b16 %v908, %v907
        %v1098 = vpack.c.b16 %v910, %v909
        %v1099 = vpack.c.b16 %v912, %v911
        %v1100 = vpack.c.b16 %v914, %v913
        %v1101 = vpack.c.b16 %v916, %v915
        %v1102 = vpack.c.b16 %v918, %v917
        %v1103 = vpack.c.b16 %v920, %v919
        %v1104 = vpack.c.b16 %v922, %v921
        %v1105 = vpack.c.b16 %v924, %v923
        %v1106 = vpack.c.b16 %v926, %v925
        %v1107 = vpack.c.b16 %v928, %v927
        %v1108 = vpack.c.b16 %v930, %v929
        %v1109 = vpack.c.b16 %v932, %v931
        %v1110 = vpack.c.b16 %v934, %v933
        %v1111 = vpack.c.b16 %v936, %v935
        %v1112 = vpack.c.b16 %v938, %v937
        %v1113 = vpack.c.b16 %v940, %v939
        %v1114 = vpack.c.b16 %v942, %v941
        %v1115 = vpack.c.b16 %v944, %v943
        %v1116 = vpack.c.b16 %v946, %v945
        %v1117 = vpack.c.b16 %v948, %v947
        %v1118 = vpack.c.b16 %v950, %v949
        %v1119 = vpack.c.b16 %v952, %v951
        %v1120 = vpack.c.b16 %v954, %v953
        %v1121 = vpack.c.b16 %v956, %v955
        %v1122 = vpack.c.b16 %v958, %v957
        %v1123 = vpack.c.b16 %v960, %v959
        %v1124 = vpack.c.b16 %v962, %v961
        %v1125 = vpack.c.b16 %v964, %v963
        %v1126 = vpack.c.b16 %v966, %v965
        %v1127 = vpack.c.b16 %v968, %v967
        %v1128 = vpack.c.b16 %v970, %v969
        %v1129 = vpack.c.b16 %v972, %v971
        %v1130 = vpack.c.b16 %v974, %v973
        %v1131 = vpack.c.b16 %v976, %v975
        %v1132 = vpack.c.b16 %v978, %v977
        %v1133 = vpack.c.b16 %v980, %v979
        %v1134 = vpack.c.b16 %v982, %v981
        %v1135 = vpack.c.b16 %v984, %v983
        %v1136 = vpack.c.b16 %v986, %v985
        %v1137 = vpack.c.b16 %v988, %v987
        %v1138 = vpack.c.b16 %v990, %v989
        %v1139 = vpack.c.b16 %v992, %v991
        %v1140 = vpack.c.b16 %v994, %v993
        %v1141 = vpack.c.b16 %v996, %v995
        %v1142 = vpack.c.b16 %v998, %v997
        %v1143 = vpack.c.b16 %v1000, %v999
        %v1144 = vpack.c.b16 %v1002, %v1001
        %v1145 = vpack.c.b16 %v1004, %v1003
        %v1146 = vpack.c.b16 %v1006, %v1005
        %v1147 = vpack.c.b16 %v1008, %v1007
        %v1148 = vpack.c.b16 %v1010, %v1009
        %v1149 = vpack.c.b16 %v1012, %v1011
        %v1150 = vpack.c.b16 %v1014, %v1013
        %v1151 = vpack.c.b16 %v1016, %v1015
        %v1152 = vpack.c.b16 %v1018, %v1017
        %v1153 = vpack.c.b16 %v1020, %v1019
        %v1154 = vpack.c.b16 %v1022, %v1021
        %v1155 = vpack.c.b16 %v1024, %v1023
        %v1156 = vpack.c.b16 %v1026, %v1025
        %v1157 = vpack.c.b16 %v1028, %v1027
        %v1158 = vpack.c.b16 %v1030, %v1029
        %v1163 = vunpack.c.l.b16 %v508
        %v1164 = vunpack.c.l.b16 %v509
        %v1165 = vunpack.c.l.b16 %v510
        %v1166 = vunpack.c.l.b16 %v511
        %v1167 = vpack.c.b16 %v1164, %v1163
        %v1168 = vpack.c.b16 %v1166, %v1165
        %vm1170 = vcmask 220160
        %v1172 = vsel %vm1170, %v1031, 0
        %v1175 = vsel %vm1170, %v1032, 0
        %v1178 = vsel %vm1170, %v1033, 0
        %v1181 = vsel %vm1170, %v1034, 0
        %v1184 = vsel %vm1170, %v1035, 0
        %v1187 = vsel %vm1170, %v1036, 0
        %v1190 = vsel %vm1170, %v1037, 0
        %v1193 = vsel %vm1170, %v1038, 0
        %v1196 = vsel %vm1170, %v1039, 0
        %v1199 = vsel %vm1170, %v1040, 0
        %v1202 = vsel %vm1170, %v1041, 0
        %v1205 = vsel %vm1170, %v1042, 0
        %v1208 = vsel %vm1170, %v1043, 0
        %v1211 = vsel %vm1170, %v1044, 0
        %v1214 = vsel %vm1170, %v1045, 0
        %v1217 = vsel %vm1170, %v1046, 0
        %v1220 = vsel %vm1170, %v1047, 0
        %v1223 = vsel %vm1170, %v1048, 0
        %v1226 = vsel %vm1170, %v1049, 0
        %v1229 = vsel %vm1170, %v1050, 0
        %v1232 = vsel %vm1170, %v1051, 0
        %v1235 = vsel %vm1170, %v1052, 0
        %v1238 = vsel %vm1170, %v1053, 0
        %v1241 = vsel %vm1170, %v1054, 0
        %v1244 = vsel %vm1170, %v1055, 0
        %v1247 = vsel %vm1170, %v1056, 0
        %v1250 = vsel %vm1170, %v1057, 0
        %v1253 = vsel %vm1170, %v1058, 0
        %v1256 = vsel %vm1170, %v1059, 0
        %v1259 = vsel %vm1170, %v1060, 0
        %v1262 = vsel %vm1170, %v1061, 0
        %v1265 = vsel %vm1170, %v1062, 0
        %v1268 = vsel %vm1170, %v1063, 0
        %v1271 = vsel %vm1170, %v1064, 0
        %v1274 = vsel %vm1170, %v1065, 0
        %v1277 = vsel %vm1170, %v1066, 0
        %v1280 = vsel %vm1170, %v1067, 0
        %v1283 = vsel %vm1170, %v1068, 0
        %v1286 = vsel %vm1170, %v1069, 0
        %v1289 = vsel %vm1170, %v1070, 0
        %v1292 = vsel %vm1170, %v1071, 0
        %v1295 = vsel %vm1170, %v1072, 0
        %v1298 = vsel %vm1170, %v1073, 0
        %v1301 = vsel %vm1170, %v1074, 0
        %v1304 = vsel %vm1170, %v1075, 0
        %v1307 = vsel %vm1170, %v1076, 0
        %v1310 = vsel %vm1170, %v1077, 0
        %v1313 = vsel %vm1170, %v1078, 0
        %v1316 = vsel %vm1170, %v1079, 0
        %v1319 = vsel %vm1170, %v1080, 0
        %v1322 = vsel %vm1170, %v1081, 0
        %v1325 = vsel %vm1170, %v1082, 0
        %v1328 = vsel %vm1170, %v1083, 0
        %v1331 = vsel %vm1170, %v1084, 0
        %v1334 = vsel %vm1170, %v1085, 0
        %v1337 = vsel %vm1170, %v1086, 0
        %v1340 = vsel %vm1170, %v1087, 0
        %v1343 = vsel %vm1170, %v1088, 0
        %v1346 = vsel %vm1170, %v1089, 0
        %v1349 = vsel %vm1170, %v1090, 0
        %v1352 = vsel %vm1170, %v1091, 0
        %v1355 = vsel %vm1170, %v1092, 0
        %v1358 = vsel %vm1170, %v1093, 0
        %v1361 = vsel %vm1170, %v1094, 0
        %v1364 = vsel %vm1170, %v1095, 0
        %v1367 = vsel %vm1170, %v1096, 0
        %v1370 = vsel %vm1170, %v1097, 0
        %v1373 = vsel %vm1170, %v1098, 0
        %v1376 = vsel %vm1170, %v1099, 0
        %v1379 = vsel %vm1170, %v1100, 0
        %v1382 = vsel %vm1170, %v1101, 0
        %v1385 = vsel %vm1170, %v1102, 0
        %v1388 = vsel %vm1170, %v1103, 0
        %v1391 = vsel %vm1170, %v1104, 0
        %v1394 = vsel %vm1170, %v1105, 0
        %v1397 = vsel %vm1170, %v1106, 0
        %v1400 = vsel %vm1170, %v1107, 0
        %v1403 = vsel %vm1170, %v1108, 0
        %v1406 = vsel %vm1170, %v1109, 0
        %v1409 = vsel %vm1170, %v1110, 0
        %v1412 = vsel %vm1170, %v1111, 0
        %v1415 = vsel %vm1170, %v1112, 0
        %v1418 = vsel %vm1170, %v1113, 0
        %v1421 = vsel %vm1170, %v1114, 0
        %v1424 = vsel %vm1170, %v1115, 0
        %v1427 = vsel %vm1170, %v1116, 0
        %v1430 = vsel %vm1170, %v1117, 0
        %v1433 = vsel %vm1170, %v1118, 0
        %v1436 = vsel %vm1170, %v1119, 0
        %v1439 = vsel %vm1170, %v1120, 0
        %v1442 = vsel %vm1170, %v1121, 0
        %v1445 = vsel %vm1170, %v1122, 0
        %v1448 = vsel %vm1170, %v1123, 0
        %v1451 = vsel %vm1170, %v1124, 0
        %v1454 = vsel %vm1170, %v1125, 0
        %v1457 = vsel %vm1170, %v1126, 0
        %v1460 = vsel %vm1170, %v1127, 0
        %v1463 = vsel %vm1170, %v1128, 0
        %v1466 = vsel %vm1170, %v1129, 0
        %v1469 = vsel %vm1170, %v1130, 0
        %v1472 = vsel %vm1170, %v1131, 0
        %v1475 = vsel %vm1170, %v1132, 0
        %v1478 = vsel %vm1170, %v1133, 0
        %v1481 = vsel %vm1170, %v1134, 0
        %v1484 = vsel %vm1170, %v1135, 0
        %v1487 = vsel %vm1170, %v1136, 0
        %v1490 = vsel %vm1170, %v1137, 0
        %v1493 = vsel %vm1170, %v1138, 0
        %v1496 = vsel %vm1170, %v1139, 0
        %v1499 = vsel %vm1170, %v1140, 0
        %v1502 = vsel %vm1170, %v1141, 0
        %v1505 = vsel %vm1170, %v1142, 0
        %v1508 = vsel %vm1170, %v1143, 0
        %v1511 = vsel %vm1170, %v1144, 0
        %v1514 = vsel %vm1170, %v1145, 0
        %v1517 = vsel %vm1170, %v1146, 0
        %v1520 = vsel %vm1170, %v1147, 0
        %v1523 = vsel %vm1170, %v1148, 0
        %v1526 = vsel %vm1170, %v1149, 0
        %v1529 = vsel %vm1170, %v1150, 0
        %v1532 = vsel %vm1170, %v1151, 0
        %v1535 = vsel %vm1170, %v1152, 0
        %v1538 = vsel %vm1170, %v1153, 0
        %v1541 = vsel %vm1170, %v1154, 0
        %v1544 = vsel %vm1170, %v1155, 0
        %v1547 = vsel %vm1170, %v1156, 0
        %v1550 = vsel %vm1170, %v1157, 0
        %v1553 = vsel %vm1170, %v1158, 0
        %vm1555 = vcmask 1044480
        %vm1556 = vcmask 1045504
        %v1557 = vsel %vm1555, 4294967295, 65535
        %v1558 = vsel %vm1556, %v1557, 0
        %v1560 = vand.u32 %v1168, %v1558
        %1562 = vmatprep.subr.bf16.mxu0 0
        %1563 = vmatpush1.bf16.msra.mxu0 0
        %1564 = vmatprep.subr.bf16.mxu0 0
        %1565 = vmatpush1.bf16.msra.mxu0 0
        %1566 = vmatprep.subr.bf16.mxu0 0
        %1567 = vmatpush1.bf16.msra.mxu0 0
        %1568 = vmatprep.subr.bf16.mxu0 0
        %1569 = vmatpush1.bf16.msra.mxu0 0
        %1570 = vmatprep.subr.bf16.mxu0 0
        %1571 = vmatpush1.bf16.msra.mxu0 0
        %1572 = vmatprep.subr.bf16.mxu0 0
        %1573 = vmatpush1.bf16.msra.mxu0 0
        %1574 = vmatprep.subr.bf16.mxu0 0
        %1575 = vmatpush1.bf16.msra.mxu0 %v1560
        %1576 = vmatprep.subr.bf16.mxu0 0
        %1577 = vmatpush1.bf16.msra.mxu0 %v1167
        %1578 = vmatprep.subr.bf16.mxu0 0
        %1579 = vmatpush2.bf16.msra.mxu0 0
        %1580 = vmatprep.subr.bf16.mxu0 0
        %1581 = vmatpush2.bf16.msra.mxu0 0
        %1582 = vmatprep.subr.bf16.mxu0 0
        %1583 = vmatpush2.bf16.msra.mxu0 0
        %1584 = vmatprep.subr.bf16.mxu0 0
        %1585 = vmatpush2.bf16.msra.mxu0 0
        %1586 = vmatprep.subr.bf16.mxu0 0
        %1587 = vmatpush2.bf16.msra.mxu0 0
        %1588 = vmatprep.subr.bf16.mxu0 0
        %1589 = vmatpush2.bf16.msra.mxu0 0
        %1590 = vmatprep.subr.bf16.mxu0 0
        %1591 = vmatpush2.bf16.msra.mxu0 0
        %1592 = vmatprep.subr.bf16.mxu0 0
        %1593 = vmatpush2.bf16.msra.mxu0 0
        %1594 = vmatprep.mubr.bf16.mxu0 0
        %1595 = vmatmul.mubr.bf16.gmra.mxu0 %v1172
        %v1596 = vpop.f32.mrf.mxu0
        %v1597 = vadd.f32 %v517, %v1596
        %v1598 = vpop.f32.mrf.mxu0
        %v1599 = vpop.f32.mrf.mxu0
        %v1600 = vadd.f32 %v517, %v1599
        %v1601 = vpop.f32.mrf.mxu0
        %1602 = vmatprep.mubr.bf16.mxu0 0
        %1603 = vmatmul.mubr.bf16.gmra.mxu0 %v1175
        %v1604 = vpop.f32.mrf.mxu0
        %v1605 = vadd.f32 %v517, %v1604
        %v1606 = vpop.f32.mrf.mxu0
        %v1607 = vpop.f32.mrf.mxu0
        %v1608 = vadd.f32 %v517, %v1607
        %v1609 = vpop.f32.mrf.mxu0
        %1610 = vmatprep.mubr.bf16.mxu0 0
        %1611 = vmatmul.mubr.bf16.gmra.mxu0 %v1178
        %v1612 = vpop.f32.mrf.mxu0
        %v1613 = vadd.f32 %v517, %v1612
        %v1614 = vpop.f32.mrf.mxu0
        %v1615 = vpop.f32.mrf.mxu0
        %v1616 = vadd.f32 %v517, %v1615
        %v1617 = vpop.f32.mrf.mxu0
        %1618 = vmatprep.mubr.bf16.mxu0 0
        %1619 = vmatmul.mubr.bf16.gmra.mxu0 %v1181
        %v1620 = vpop.f32.mrf.mxu0
        %v1621 = vadd.f32 %v517, %v1620
        %v1622 = vpop.f32.mrf.mxu0
        %v1623 = vpop.f32.mrf.mxu0
        %v1624 = vadd.f32 %v517, %v1623
        %v1625 = vpop.f32.mrf.mxu0
        %1626 = vmatprep.mubr.bf16.mxu0 0
        %1627 = vmatmul.mubr.bf16.gmra.mxu0 %v1184
        %v1628 = vpop.f32.mrf.mxu0
        %v1629 = vadd.f32 %v517, %v1628
        %v1630 = vpop.f32.mrf.mxu0
        %v1631 = vpop.f32.mrf.mxu0
        %v1632 = vadd.f32 %v517, %v1631
        %v1633 = vpop.f32.mrf.mxu0
        %1634 = vmatprep.mubr.bf16.mxu0 0
        %1635 = vmatmul.mubr.bf16.gmra.mxu0 %v1187
        %v1636 = vpop.f32.mrf.mxu0
        %v1637 = vadd.f32 %v517, %v1636
        %v1638 = vpop.f32.mrf.mxu0
        %v1639 = vpop.f32.mrf.mxu0
        %v1640 = vadd.f32 %v517, %v1639
        %v1641 = vpop.f32.mrf.mxu0
        %1642 = vmatprep.mubr.bf16.mxu0 0
        %1643 = vmatmul.mubr.bf16.gmra.mxu0 %v1190
        %v1644 = vpop.f32.mrf.mxu0
        %v1645 = vadd.f32 %v517, %v1644
        %v1646 = vpop.f32.mrf.mxu0
        %v1647 = vpop.f32.mrf.mxu0
        %v1648 = vadd.f32 %v517, %v1647
        %v1649 = vpop.f32.mrf.mxu0
        %1650 = vmatprep.mubr.bf16.mxu0 0
        %1651 = vmatmul.mubr.bf16.gmra.mxu0 %v1193
        %v1652 = vpop.f32.mrf.mxu0
        %v1653 = vadd.f32 %v517, %v1652
        %v1654 = vpop.f32.mrf.mxu0
        %v1655 = vpop.f32.mrf.mxu0
        %v1656 = vadd.f32 %v517, %v1655
        %v1657 = vpop.f32.mrf.mxu0
        %1658 = vmatprep.mubr.bf16.mxu0 0
        %1659 = vmatmul.mubr.bf16.gmra.mxu0 %v1196
        %v1660 = vpop.f32.mrf.mxu0
        %v1661 = vadd.f32 %v517, %v1660
        %v1662 = vpop.f32.mrf.mxu0
        %v1663 = vpop.f32.mrf.mxu0
        %v1664 = vadd.f32 %v517, %v1663
        %v1665 = vpop.f32.mrf.mxu0
        %1666 = vmatprep.mubr.bf16.mxu0 0
        %1667 = vmatmul.mubr.bf16.gmra.mxu0 %v1199
        %v1668 = vpop.f32.mrf.mxu0
        %v1669 = vadd.f32 %v517, %v1668
        %v1670 = vpop.f32.mrf.mxu0
        %v1671 = vpop.f32.mrf.mxu0
        %v1672 = vadd.f32 %v517, %v1671
        %v1673 = vpop.f32.mrf.mxu0
        %1674 = vmatprep.mubr.bf16.mxu0 0
        %1675 = vmatmul.mubr.bf16.gmra.mxu0 %v1202
        %v1676 = vpop.f32.mrf.mxu0
        %v1677 = vadd.f32 %v517, %v1676
        %v1678 = vpop.f32.mrf.mxu0
        %v1679 = vpop.f32.mrf.mxu0
        %v1680 = vadd.f32 %v517, %v1679
        %v1681 = vpop.f32.mrf.mxu0
        %1682 = vmatprep.mubr.bf16.mxu0 0
        %1683 = vmatmul.mubr.bf16.gmra.mxu0 %v1205
        %v1684 = vpop.f32.mrf.mxu0
        %v1685 = vadd.f32 %v517, %v1684
        %v1686 = vpop.f32.mrf.mxu0
        %v1687 = vpop.f32.mrf.mxu0
        %v1688 = vadd.f32 %v517, %v1687
        %v1689 = vpop.f32.mrf.mxu0
        %1690 = vmatprep.mubr.bf16.mxu0 0
        %1691 = vmatmul.mubr.bf16.gmra.mxu0 %v1208
        %v1692 = vpop.f32.mrf.mxu0
        %v1693 = vadd.f32 %v517, %v1692
        %v1694 = vpop.f32.mrf.mxu0
        %v1695 = vpop.f32.mrf.mxu0
        %v1696 = vadd.f32 %v517, %v1695
        %v1697 = vpop.f32.mrf.mxu0
        %1698 = vmatprep.mubr.bf16.mxu0 0
        %1699 = vmatmul.mubr.bf16.gmra.mxu0 %v1211
        %v1700 = vpop.f32.mrf.mxu0
        %v1701 = vadd.f32 %v517, %v1700
        %v1702 = vpop.f32.mrf.mxu0
        %v1703 = vpop.f32.mrf.mxu0
        %v1704 = vadd.f32 %v517, %v1703
        %v1705 = vpop.f32.mrf.mxu0
        %1706 = vmatprep.mubr.bf16.mxu0 0
        %1707 = vmatmul.mubr.bf16.gmra.mxu0 %v1214
        %v1708 = vpop.f32.mrf.mxu0
        %v1709 = vadd.f32 %v517, %v1708
        %v1710 = vpop.f32.mrf.mxu0
        %v1711 = vpop.f32.mrf.mxu0
        %v1712 = vadd.f32 %v517, %v1711
        %v1713 = vpop.f32.mrf.mxu0
        %1714 = vmatprep.mubr.bf16.mxu0 0
        %1715 = vmatmul.mubr.bf16.gmra.mxu0 %v1217
        %v1716 = vpop.f32.mrf.mxu0
        %v1717 = vadd.f32 %v517, %v1716
        %v1718 = vpop.f32.mrf.mxu0
        %v1719 = vpop.f32.mrf.mxu0
        %v1720 = vadd.f32 %v517, %v1719
        %v1721 = vpop.f32.mrf.mxu0
        %1722 = vmatprep.mubr.bf16.mxu0 0
        %1723 = vmatmul.mubr.bf16.gmra.mxu0 %v1220
        %v1724 = vpop.f32.mrf.mxu0
        %v1725 = vadd.f32 %v517, %v1724
        %v1726 = vpop.f32.mrf.mxu0
        %v1727 = vpop.f32.mrf.mxu0
        %v1728 = vadd.f32 %v517, %v1727
        %v1729 = vpop.f32.mrf.mxu0
        %1730 = vmatprep.mubr.bf16.mxu0 0
        %1731 = vmatmul.mubr.bf16.gmra.mxu0 %v1223
        %v1732 = vpop.f32.mrf.mxu0
        %v1733 = vadd.f32 %v517, %v1732
        %v1734 = vpop.f32.mrf.mxu0
        %v1735 = vpop.f32.mrf.mxu0
        %v1736 = vadd.f32 %v517, %v1735
        %v1737 = vpop.f32.mrf.mxu0
        %1738 = vmatprep.mubr.bf16.mxu0 0
        %1739 = vmatmul.mubr.bf16.gmra.mxu0 %v1226
        %v1740 = vpop.f32.mrf.mxu0
        %v1741 = vadd.f32 %v517, %v1740
        %v1742 = vpop.f32.mrf.mxu0
        %v1743 = vpop.f32.mrf.mxu0
        %v1744 = vadd.f32 %v517, %v1743
        %v1745 = vpop.f32.mrf.mxu0
        %1746 = vmatprep.mubr.bf16.mxu0 0
        %1747 = vmatmul.mubr.bf16.gmra.mxu0 %v1229
        %v1748 = vpop.f32.mrf.mxu0
        %v1749 = vadd.f32 %v517, %v1748
        %v1750 = vpop.f32.mrf.mxu0
        %v1751 = vpop.f32.mrf.mxu0
        %v1752 = vadd.f32 %v517, %v1751
        %v1753 = vpop.f32.mrf.mxu0
        %1754 = vmatprep.mubr.bf16.mxu0 0
        %1755 = vmatmul.mubr.bf16.gmra.mxu0 %v1232
        %v1756 = vpop.f32.mrf.mxu0
        %v1757 = vadd.f32 %v517, %v1756
        %v1758 = vpop.f32.mrf.mxu0
        %v1759 = vpop.f32.mrf.mxu0
        %v1760 = vadd.f32 %v517, %v1759
        %v1761 = vpop.f32.mrf.mxu0
        %1762 = vmatprep.mubr.bf16.mxu0 0
        %1763 = vmatmul.mubr.bf16.gmra.mxu0 %v1235
        %v1764 = vpop.f32.mrf.mxu0
        %v1765 = vadd.f32 %v517, %v1764
        %v1766 = vpop.f32.mrf.mxu0
        %v1767 = vpop.f32.mrf.mxu0
        %v1768 = vadd.f32 %v517, %v1767
        %v1769 = vpop.f32.mrf.mxu0
        %1770 = vmatprep.mubr.bf16.mxu0 0
        %1771 = vmatmul.mubr.bf16.gmra.mxu0 %v1238
        %v1772 = vpop.f32.mrf.mxu0
        %v1773 = vadd.f32 %v517, %v1772
        %v1774 = vpop.f32.mrf.mxu0
        %v1775 = vpop.f32.mrf.mxu0
        %v1776 = vadd.f32 %v517, %v1775
        %v1777 = vpop.f32.mrf.mxu0
        %1778 = vmatprep.mubr.bf16.mxu0 0
        %1779 = vmatmul.mubr.bf16.gmra.mxu0 %v1241
        %v1780 = vpop.f32.mrf.mxu0
        %v1781 = vadd.f32 %v517, %v1780
        %v1782 = vpop.f32.mrf.mxu0
        %v1783 = vpop.f32.mrf.mxu0
        %v1784 = vadd.f32 %v517, %v1783
        %v1785 = vpop.f32.mrf.mxu0
        %1786 = vmatprep.mubr.bf16.mxu0 0
        %1787 = vmatmul.mubr.bf16.gmra.mxu0 %v1244
        %v1788 = vpop.f32.mrf.mxu0
        %v1789 = vadd.f32 %v517, %v1788
        %v1790 = vpop.f32.mrf.mxu0
        %v1791 = vpop.f32.mrf.mxu0
        %v1792 = vadd.f32 %v517, %v1791
        %v1793 = vpop.f32.mrf.mxu0
        %1794 = vmatprep.mubr.bf16.mxu0 0
        %1795 = vmatmul.mubr.bf16.gmra.mxu0 %v1247
        %v1796 = vpop.f32.mrf.mxu0
        %v1797 = vadd.f32 %v517, %v1796
        %v1798 = vpop.f32.mrf.mxu0
        %v1799 = vpop.f32.mrf.mxu0
        %v1800 = vadd.f32 %v517, %v1799
        %v1801 = vpop.f32.mrf.mxu0
        %1802 = vmatprep.mubr.bf16.mxu0 0
        %1803 = vmatmul.mubr.bf16.gmra.mxu0 %v1250
        %v1804 = vpop.f32.mrf.mxu0
        %v1805 = vadd.f32 %v517, %v1804
        %v1806 = vpop.f32.mrf.mxu0
        %v1807 = vpop.f32.mrf.mxu0
        %v1808 = vadd.f32 %v517, %v1807
        %v1809 = vpop.f32.mrf.mxu0
        %1810 = vmatprep.mubr.bf16.mxu0 0
        %1811 = vmatmul.mubr.bf16.gmra.mxu0 %v1253
        %v1812 = vpop.f32.mrf.mxu0
        %v1813 = vadd.f32 %v517, %v1812
        %v1814 = vpop.f32.mrf.mxu0
        %v1815 = vpop.f32.mrf.mxu0
        %v1816 = vadd.f32 %v517, %v1815
        %v1817 = vpop.f32.mrf.mxu0
        %1818 = vmatprep.mubr.bf16.mxu0 0
        %1819 = vmatmul.mubr.bf16.gmra.mxu0 %v1256
        %v1820 = vpop.f32.mrf.mxu0
        %v1821 = vadd.f32 %v517, %v1820
        %v1822 = vpop.f32.mrf.mxu0
        %v1823 = vpop.f32.mrf.mxu0
        %v1824 = vadd.f32 %v517, %v1823
        %v1825 = vpop.f32.mrf.mxu0
        %1826 = vmatprep.mubr.bf16.mxu0 0
        %1827 = vmatmul.mubr.bf16.gmra.mxu0 %v1259
        %v1828 = vpop.f32.mrf.mxu0
        %v1829 = vadd.f32 %v517, %v1828
        %v1830 = vpop.f32.mrf.mxu0
        %v1831 = vpop.f32.mrf.mxu0
        %v1832 = vadd.f32 %v517, %v1831
        %v1833 = vpop.f32.mrf.mxu0
        %1834 = vmatprep.mubr.bf16.mxu0 0
        %1835 = vmatmul.mubr.bf16.gmra.mxu0 %v1262
        %v1836 = vpop.f32.mrf.mxu0
        %v1837 = vadd.f32 %v517, %v1836
        %v1838 = vpop.f32.mrf.mxu0
        %v1839 = vpop.f32.mrf.mxu0
        %v1840 = vadd.f32 %v517, %v1839
        %v1841 = vpop.f32.mrf.mxu0
        %1842 = vmatprep.mubr.bf16.mxu0 0
        %1843 = vmatmul.mubr.bf16.gmra.mxu0 %v1265
        %v1844 = vpop.f32.mrf.mxu0
        %v1845 = vadd.f32 %v517, %v1844
        %v1846 = vpop.f32.mrf.mxu0
        %v1847 = vpop.f32.mrf.mxu0
        %v1848 = vadd.f32 %v517, %v1847
        %v1849 = vpop.f32.mrf.mxu0
        %1850 = vmatprep.mubr.bf16.mxu0 0
        %1851 = vmatmul.mubr.bf16.gmra.mxu0 %v1268
        %v1852 = vpop.f32.mrf.mxu0
        %v1853 = vadd.f32 %v517, %v1852
        %v1854 = vpop.f32.mrf.mxu0
        %v1855 = vpop.f32.mrf.mxu0
        %v1856 = vadd.f32 %v517, %v1855
        %v1857 = vpop.f32.mrf.mxu0
        %1858 = vmatprep.mubr.bf16.mxu0 0
        %1859 = vmatmul.mubr.bf16.gmra.mxu0 %v1271
        %v1860 = vpop.f32.mrf.mxu0
        %v1861 = vadd.f32 %v517, %v1860
        %v1862 = vpop.f32.mrf.mxu0
        %v1863 = vpop.f32.mrf.mxu0
        %v1864 = vadd.f32 %v517, %v1863
        %v1865 = vpop.f32.mrf.mxu0
        %1866 = vmatprep.mubr.bf16.mxu0 0
        %1867 = vmatmul.mubr.bf16.gmra.mxu0 %v1274
        %v1868 = vpop.f32.mrf.mxu0
        %v1869 = vadd.f32 %v517, %v1868
        %v1870 = vpop.f32.mrf.mxu0
        %v1871 = vpop.f32.mrf.mxu0
        %v1872 = vadd.f32 %v517, %v1871
        %v1873 = vpop.f32.mrf.mxu0
        %1874 = vmatprep.mubr.bf16.mxu0 0
        %1875 = vmatmul.mubr.bf16.gmra.mxu0 %v1277
        %v1876 = vpop.f32.mrf.mxu0
        %v1877 = vadd.f32 %v517, %v1876
        %v1878 = vpop.f32.mrf.mxu0
        %v1879 = vpop.f32.mrf.mxu0
        %v1880 = vadd.f32 %v517, %v1879
        %v1881 = vpop.f32.mrf.mxu0
        %1882 = vmatprep.mubr.bf16.mxu0 0
        %1883 = vmatmul.mubr.bf16.gmra.mxu0 %v1280
        %v1884 = vpop.f32.mrf.mxu0
        %v1885 = vadd.f32 %v517, %v1884
        %v1886 = vpop.f32.mrf.mxu0
        %v1887 = vpop.f32.mrf.mxu0
        %v1888 = vadd.f32 %v517, %v1887
        %v1889 = vpop.f32.mrf.mxu0
        %1890 = vmatprep.mubr.bf16.mxu0 0
        %1891 = vmatmul.mubr.bf16.gmra.mxu0 %v1283
        %v1892 = vpop.f32.mrf.mxu0
        %v1893 = vadd.f32 %v517, %v1892
        %v1894 = vpop.f32.mrf.mxu0
        %v1895 = vpop.f32.mrf.mxu0
        %v1896 = vadd.f32 %v517, %v1895
        %v1897 = vpop.f32.mrf.mxu0
        %1898 = vmatprep.mubr.bf16.mxu0 0
        %1899 = vmatmul.mubr.bf16.gmra.mxu0 %v1286
        %v1900 = vpop.f32.mrf.mxu0
        %v1901 = vadd.f32 %v517, %v1900
        %v1902 = vpop.f32.mrf.mxu0
        %v1903 = vpop.f32.mrf.mxu0
        %v1904 = vadd.f32 %v517, %v1903
        %v1905 = vpop.f32.mrf.mxu0
        %1906 = vmatprep.mubr.bf16.mxu0 0
        %1907 = vmatmul.mubr.bf16.gmra.mxu0 %v1289
        %v1908 = vpop.f32.mrf.mxu0
        %v1909 = vadd.f32 %v517, %v1908
        %v1910 = vpop.f32.mrf.mxu0
        %v1911 = vpop.f32.mrf.mxu0
        %v1912 = vadd.f32 %v517, %v1911
        %v1913 = vpop.f32.mrf.mxu0
        %1914 = vmatprep.mubr.bf16.mxu0 0
        %1915 = vmatmul.mubr.bf16.gmra.mxu0 %v1292
        %v1916 = vpop.f32.mrf.mxu0
        %v1917 = vadd.f32 %v517, %v1916
        %v1918 = vpop.f32.mrf.mxu0
        %v1919 = vpop.f32.mrf.mxu0
        %v1920 = vadd.f32 %v517, %v1919
        %v1921 = vpop.f32.mrf.mxu0
        %1922 = vmatprep.mubr.bf16.mxu0 0
        %1923 = vmatmul.mubr.bf16.gmra.mxu0 %v1295
        %v1924 = vpop.f32.mrf.mxu0
        %v1925 = vadd.f32 %v517, %v1924
        %v1926 = vpop.f32.mrf.mxu0
        %v1927 = vpop.f32.mrf.mxu0
        %v1928 = vadd.f32 %v517, %v1927
        %v1929 = vpop.f32.mrf.mxu0
        %1930 = vmatprep.mubr.bf16.mxu0 0
        %1931 = vmatmul.mubr.bf16.gmra.mxu0 %v1298
        %v1932 = vpop.f32.mrf.mxu0
        %v1933 = vadd.f32 %v517, %v1932
        %v1934 = vpop.f32.mrf.mxu0
        %v1935 = vpop.f32.mrf.mxu0
        %v1936 = vadd.f32 %v517, %v1935
        %v1937 = vpop.f32.mrf.mxu0
        %1938 = vmatprep.mubr.bf16.mxu0 0
        %1939 = vmatmul.mubr.bf16.gmra.mxu0 %v1301
        %v1940 = vpop.f32.mrf.mxu0
        %v1941 = vadd.f32 %v517, %v1940
        %v1942 = vpop.f32.mrf.mxu0
        %v1943 = vpop.f32.mrf.mxu0
        %v1944 = vadd.f32 %v517, %v1943
        %v1945 = vpop.f32.mrf.mxu0
        %1946 = vmatprep.mubr.bf16.mxu0 0
        %1947 = vmatmul.mubr.bf16.gmra.mxu0 %v1304
        %v1948 = vpop.f32.mrf.mxu0
        %v1949 = vadd.f32 %v517, %v1948
        %v1950 = vpop.f32.mrf.mxu0
        %v1951 = vpop.f32.mrf.mxu0
        %v1952 = vadd.f32 %v517, %v1951
        %v1953 = vpop.f32.mrf.mxu0
        %1954 = vmatprep.mubr.bf16.mxu0 0
        %1955 = vmatmul.mubr.bf16.gmra.mxu0 %v1307
        %v1956 = vpop.f32.mrf.mxu0
        %v1957 = vadd.f32 %v517, %v1956
        %v1958 = vpop.f32.mrf.mxu0
        %v1959 = vpop.f32.mrf.mxu0
        %v1960 = vadd.f32 %v517, %v1959
        %v1961 = vpop.f32.mrf.mxu0
        %1962 = vmatprep.mubr.bf16.mxu0 0
        %1963 = vmatmul.mubr.bf16.gmra.mxu0 %v1310
        %v1964 = vpop.f32.mrf.mxu0
        %v1965 = vadd.f32 %v517, %v1964
        %v1966 = vpop.f32.mrf.mxu0
        %v1967 = vpop.f32.mrf.mxu0
        %v1968 = vadd.f32 %v517, %v1967
        %v1969 = vpop.f32.mrf.mxu0
        %1970 = vmatprep.mubr.bf16.mxu0 0
        %1971 = vmatmul.mubr.bf16.gmra.mxu0 %v1313
        %v1972 = vpop.f32.mrf.mxu0
        %v1973 = vadd.f32 %v517, %v1972
        %v1974 = vpop.f32.mrf.mxu0
        %v1975 = vpop.f32.mrf.mxu0
        %v1976 = vadd.f32 %v517, %v1975
        %v1977 = vpop.f32.mrf.mxu0
        %1978 = vmatprep.mubr.bf16.mxu0 0
        %1979 = vmatmul.mubr.bf16.gmra.mxu0 %v1316
        %v1980 = vpop.f32.mrf.mxu0
        %v1981 = vadd.f32 %v517, %v1980
        %v1982 = vpop.f32.mrf.mxu0
        %v1983 = vpop.f32.mrf.mxu0
        %v1984 = vadd.f32 %v517, %v1983
        %v1985 = vpop.f32.mrf.mxu0
        %1986 = vmatprep.mubr.bf16.mxu0 0
        %1987 = vmatmul.mubr.bf16.gmra.mxu0 %v1319
        %v1988 = vpop.f32.mrf.mxu0
        %v1989 = vadd.f32 %v517, %v1988
        %v1990 = vpop.f32.mrf.mxu0
        %v1991 = vpop.f32.mrf.mxu0
        %v1992 = vadd.f32 %v517, %v1991
        %v1993 = vpop.f32.mrf.mxu0
        %1994 = vmatprep.mubr.bf16.mxu0 0
        %1995 = vmatmul.mubr.bf16.gmra.mxu0 %v1322
        %v1996 = vpop.f32.mrf.mxu0
        %v1997 = vadd.f32 %v517, %v1996
        %v1998 = vpop.f32.mrf.mxu0
        %v1999 = vpop.f32.mrf.mxu0
        %v2000 = vadd.f32 %v517, %v1999
        %v2001 = vpop.f32.mrf.mxu0
        %2002 = vmatprep.mubr.bf16.mxu0 0
        %2003 = vmatmul.mubr.bf16.gmra.mxu0 %v1325
        %v2004 = vpop.f32.mrf.mxu0
        %v2005 = vadd.f32 %v517, %v2004
        %v2006 = vpop.f32.mrf.mxu0
        %v2007 = vpop.f32.mrf.mxu0
        %v2008 = vadd.f32 %v517, %v2007
        %v2009 = vpop.f32.mrf.mxu0
        %2010 = vmatprep.mubr.bf16.mxu0 0
        %2011 = vmatmul.mubr.bf16.gmra.mxu0 %v1328
        %v2012 = vpop.f32.mrf.mxu0
        %v2013 = vadd.f32 %v517, %v2012
        %v2014 = vpop.f32.mrf.mxu0
        %v2015 = vpop.f32.mrf.mxu0
        %v2016 = vadd.f32 %v517, %v2015
        %v2017 = vpop.f32.mrf.mxu0
        %2018 = vmatprep.mubr.bf16.mxu0 0
        %2019 = vmatmul.mubr.bf16.gmra.mxu0 %v1331
        %v2020 = vpop.f32.mrf.mxu0
        %v2021 = vadd.f32 %v517, %v2020
        %v2022 = vpop.f32.mrf.mxu0
        %v2023 = vpop.f32.mrf.mxu0
        %v2024 = vadd.f32 %v517, %v2023
        %v2025 = vpop.f32.mrf.mxu0
        %2026 = vmatprep.mubr.bf16.mxu0 0
        %2027 = vmatmul.mubr.bf16.gmra.mxu0 %v1334
        %v2028 = vpop.f32.mrf.mxu0
        %v2029 = vadd.f32 %v517, %v2028
        %v2030 = vpop.f32.mrf.mxu0
        %v2031 = vpop.f32.mrf.mxu0
        %v2032 = vadd.f32 %v517, %v2031
        %v2033 = vpop.f32.mrf.mxu0
        %2034 = vmatprep.mubr.bf16.mxu0 0
        %2035 = vmatmul.mubr.bf16.gmra.mxu0 %v1337
        %v2036 = vpop.f32.mrf.mxu0
        %v2037 = vadd.f32 %v517, %v2036
        %v2038 = vpop.f32.mrf.mxu0
        %v2039 = vpop.f32.mrf.mxu0
        %v2040 = vadd.f32 %v517, %v2039
        %v2041 = vpop.f32.mrf.mxu0
        %2042 = vmatprep.mubr.bf16.mxu0 0
        %2043 = vmatmul.mubr.bf16.gmra.mxu0 %v1340
        %v2044 = vpop.f32.mrf.mxu0
        %v2045 = vadd.f32 %v517, %v2044
        %v2046 = vpop.f32.mrf.mxu0
        %v2047 = vpop.f32.mrf.mxu0
        %v2048 = vadd.f32 %v517, %v2047
        %v2049 = vpop.f32.mrf.mxu0
        %2050 = vmatprep.mubr.bf16.mxu0 0
        %2051 = vmatmul.mubr.bf16.gmra.mxu0 %v1343
        %v2052 = vpop.f32.mrf.mxu0
        %v2053 = vadd.f32 %v517, %v2052
        %v2054 = vpop.f32.mrf.mxu0
        %v2055 = vpop.f32.mrf.mxu0
        %v2056 = vadd.f32 %v517, %v2055
        %v2057 = vpop.f32.mrf.mxu0
        %2058 = vmatprep.mubr.bf16.mxu0 0
        %2059 = vmatmul.mubr.bf16.gmra.mxu0 %v1346
        %v2060 = vpop.f32.mrf.mxu0
        %v2061 = vadd.f32 %v517, %v2060
        %v2062 = vpop.f32.mrf.mxu0
        %v2063 = vpop.f32.mrf.mxu0
        %v2064 = vadd.f32 %v517, %v2063
        %v2065 = vpop.f32.mrf.mxu0
        %2066 = vmatprep.mubr.bf16.mxu0 0
        %2067 = vmatmul.mubr.bf16.gmra.mxu0 %v1349
        %v2068 = vpop.f32.mrf.mxu0
        %v2069 = vadd.f32 %v517, %v2068
        %v2070 = vpop.f32.mrf.mxu0
        %v2071 = vpop.f32.mrf.mxu0
        %v2072 = vadd.f32 %v517, %v2071
        %v2073 = vpop.f32.mrf.mxu0
        %2074 = vmatprep.mubr.bf16.mxu0 0
        %2075 = vmatmul.mubr.bf16.gmra.mxu0 %v1352
        %v2076 = vpop.f32.mrf.mxu0
        %v2077 = vadd.f32 %v517, %v2076
        %v2078 = vpop.f32.mrf.mxu0
        %v2079 = vpop.f32.mrf.mxu0
        %v2080 = vadd.f32 %v517, %v2079
        %v2081 = vpop.f32.mrf.mxu0
        %2082 = vmatprep.mubr.bf16.mxu0 0
        %2083 = vmatmul.mubr.bf16.gmra.mxu0 %v1355
        %v2084 = vpop.f32.mrf.mxu0
        %v2085 = vadd.f32 %v517, %v2084
        %v2086 = vpop.f32.mrf.mxu0
        %v2087 = vpop.f32.mrf.mxu0
        %v2088 = vadd.f32 %v517, %v2087
        %v2089 = vpop.f32.mrf.mxu0
        %2090 = vmatprep.mubr.bf16.mxu0 0
        %2091 = vmatmul.mubr.bf16.gmra.mxu0 %v1358
        %v2092 = vpop.f32.mrf.mxu0
        %v2093 = vadd.f32 %v517, %v2092
        %v2094 = vpop.f32.mrf.mxu0
        %v2095 = vpop.f32.mrf.mxu0
        %v2096 = vadd.f32 %v517, %v2095
        %v2097 = vpop.f32.mrf.mxu0
        %2098 = vmatprep.mubr.bf16.mxu0 0
        %2099 = vmatmul.mubr.bf16.gmra.mxu0 %v1361
        %v2100 = vpop.f32.mrf.mxu0
        %v2101 = vadd.f32 %v517, %v2100
        %v2102 = vpop.f32.mrf.mxu0
        %v2103 = vpop.f32.mrf.mxu0
        %v2104 = vadd.f32 %v517, %v2103
        %v2105 = vpop.f32.mrf.mxu0
        %2106 = vmatprep.mubr.bf16.mxu0 0
        %2107 = vmatmul.mubr.bf16.gmra.mxu0 %v1364
        %v2108 = vpop.f32.mrf.mxu0
        %v2109 = vadd.f32 %v517, %v2108
        %v2110 = vpop.f32.mrf.mxu0
        %v2111 = vpop.f32.mrf.mxu0
        %v2112 = vadd.f32 %v517, %v2111
        %v2113 = vpop.f32.mrf.mxu0
        %2114 = vmatprep.mubr.bf16.mxu0 0
        %2115 = vmatmul.mubr.bf16.gmra.mxu0 %v1367
        %v2116 = vpop.f32.mrf.mxu0
        %v2117 = vadd.f32 %v517, %v2116
        %v2118 = vpop.f32.mrf.mxu0
        %v2119 = vpop.f32.mrf.mxu0
        %v2120 = vadd.f32 %v517, %v2119
        %v2121 = vpop.f32.mrf.mxu0
        %2122 = vmatprep.mubr.bf16.mxu0 0
        %2123 = vmatmul.mubr.bf16.gmra.mxu0 %v1370
        %v2124 = vpop.f32.mrf.mxu0
        %v2125 = vadd.f32 %v517, %v2124
        %v2126 = vpop.f32.mrf.mxu0
        %v2127 = vpop.f32.mrf.mxu0
        %v2128 = vadd.f32 %v517, %v2127
        %v2129 = vpop.f32.mrf.mxu0
        %2130 = vmatprep.mubr.bf16.mxu0 0
        %2131 = vmatmul.mubr.bf16.gmra.mxu0 %v1373
        %v2132 = vpop.f32.mrf.mxu0
        %v2133 = vadd.f32 %v517, %v2132
        %v2134 = vpop.f32.mrf.mxu0
        %v2135 = vpop.f32.mrf.mxu0
        %v2136 = vadd.f32 %v517, %v2135
        %v2137 = vpop.f32.mrf.mxu0
        %2138 = vmatprep.mubr.bf16.mxu0 0
        %2139 = vmatmul.mubr.bf16.gmra.mxu0 %v1376
        %v2140 = vpop.f32.mrf.mxu0
        %v2141 = vadd.f32 %v517, %v2140
        %v2142 = vpop.f32.mrf.mxu0
        %v2143 = vpop.f32.mrf.mxu0
        %v2144 = vadd.f32 %v517, %v2143
        %v2145 = vpop.f32.mrf.mxu0
        %2146 = vmatprep.mubr.bf16.mxu0 0
        %2147 = vmatmul.mubr.bf16.gmra.mxu0 %v1379
        %v2148 = vpop.f32.mrf.mxu0
        %v2149 = vadd.f32 %v517, %v2148
        %v2150 = vpop.f32.mrf.mxu0
        %v2151 = vpop.f32.mrf.mxu0
        %v2152 = vadd.f32 %v517, %v2151
        %v2153 = vpop.f32.mrf.mxu0
        %2154 = vmatprep.mubr.bf16.mxu0 0
        %2155 = vmatmul.mubr.bf16.gmra.mxu0 %v1382
        %v2156 = vpop.f32.mrf.mxu0
        %v2157 = vadd.f32 %v517, %v2156
        %v2158 = vpop.f32.mrf.mxu0
        %v2159 = vpop.f32.mrf.mxu0
        %v2160 = vadd.f32 %v517, %v2159
        %v2161 = vpop.f32.mrf.mxu0
        %2162 = vmatprep.mubr.bf16.mxu0 0
        %2163 = vmatmul.mubr.bf16.gmra.mxu0 %v1385
        %v2164 = vpop.f32.mrf.mxu0
        %v2165 = vadd.f32 %v517, %v2164
        %v2166 = vpop.f32.mrf.mxu0
        %v2167 = vpop.f32.mrf.mxu0
        %v2168 = vadd.f32 %v517, %v2167
        %v2169 = vpop.f32.mrf.mxu0
        %2170 = vmatprep.mubr.bf16.mxu0 0
        %2171 = vmatmul.mubr.bf16.gmra.mxu0 %v1388
        %v2172 = vpop.f32.mrf.mxu0
        %v2173 = vadd.f32 %v517, %v2172
        %v2174 = vpop.f32.mrf.mxu0
        %v2175 = vpop.f32.mrf.mxu0
        %v2176 = vadd.f32 %v517, %v2175
        %v2177 = vpop.f32.mrf.mxu0
        %2178 = vmatprep.mubr.bf16.mxu0 0
        %2179 = vmatmul.mubr.bf16.gmra.mxu0 %v1391
        %v2180 = vpop.f32.mrf.mxu0
        %v2181 = vadd.f32 %v517, %v2180
        %v2182 = vpop.f32.mrf.mxu0
        %v2183 = vpop.f32.mrf.mxu0
        %v2184 = vadd.f32 %v517, %v2183
        %v2185 = vpop.f32.mrf.mxu0
        %2186 = vmatprep.mubr.bf16.mxu0 0
        %2187 = vmatmul.mubr.bf16.gmra.mxu0 %v1394
        %v2188 = vpop.f32.mrf.mxu0
        %v2189 = vadd.f32 %v517, %v2188
        %v2190 = vpop.f32.mrf.mxu0
        %v2191 = vpop.f32.mrf.mxu0
        %v2192 = vadd.f32 %v517, %v2191
        %v2193 = vpop.f32.mrf.mxu0
        %2194 = vmatprep.mubr.bf16.mxu0 0
        %2195 = vmatmul.mubr.bf16.gmra.mxu0 %v1397
        %v2196 = vpop.f32.mrf.mxu0
        %v2197 = vadd.f32 %v517, %v2196
        %v2198 = vpop.f32.mrf.mxu0
        %v2199 = vpop.f32.mrf.mxu0
        %v2200 = vadd.f32 %v517, %v2199
        %v2201 = vpop.f32.mrf.mxu0
        %2202 = vmatprep.mubr.bf16.mxu0 0
        %2203 = vmatmul.mubr.bf16.gmra.mxu0 %v1400
        %v2204 = vpop.f32.mrf.mxu0
        %v2205 = vadd.f32 %v517, %v2204
        %v2206 = vpop.f32.mrf.mxu0
        %v2207 = vpop.f32.mrf.mxu0
        %v2208 = vadd.f32 %v517, %v2207
        %v2209 = vpop.f32.mrf.mxu0
        %2210 = vmatprep.mubr.bf16.mxu0 0
        %2211 = vmatmul.mubr.bf16.gmra.mxu0 %v1403
        %v2212 = vpop.f32.mrf.mxu0
        %v2213 = vadd.f32 %v517, %v2212
        %v2214 = vpop.f32.mrf.mxu0
        %v2215 = vpop.f32.mrf.mxu0
        %v2216 = vadd.f32 %v517, %v2215
        %v2217 = vpop.f32.mrf.mxu0
        %2218 = vmatprep.mubr.bf16.mxu0 0
        %2219 = vmatmul.mubr.bf16.gmra.mxu0 %v1406
        %v2220 = vpop.f32.mrf.mxu0
        %v2221 = vadd.f32 %v517, %v2220
        %v2222 = vpop.f32.mrf.mxu0
        %v2223 = vpop.f32.mrf.mxu0
        %v2224 = vadd.f32 %v517, %v2223
        %v2225 = vpop.f32.mrf.mxu0
        %2226 = vmatprep.mubr.bf16.mxu0 0
        %2227 = vmatmul.mubr.bf16.gmra.mxu0 %v1409
        %v2228 = vpop.f32.mrf.mxu0
        %v2229 = vadd.f32 %v517, %v2228
        %v2230 = vpop.f32.mrf.mxu0
        %v2231 = vpop.f32.mrf.mxu0
        %v2232 = vadd.f32 %v517, %v2231
        %v2233 = vpop.f32.mrf.mxu0
        %2234 = vmatprep.mubr.bf16.mxu0 0
        %2235 = vmatmul.mubr.bf16.gmra.mxu0 %v1412
        %v2236 = vpop.f32.mrf.mxu0
        %v2237 = vadd.f32 %v517, %v2236
        %v2238 = vpop.f32.mrf.mxu0
        %v2239 = vpop.f32.mrf.mxu0
        %v2240 = vadd.f32 %v517, %v2239
        %v2241 = vpop.f32.mrf.mxu0
        %2242 = vmatprep.mubr.bf16.mxu0 0
        %2243 = vmatmul.mubr.bf16.gmra.mxu0 %v1415
        %v2244 = vpop.f32.mrf.mxu0
        %v2245 = vadd.f32 %v517, %v2244
        %v2246 = vpop.f32.mrf.mxu0
        %v2247 = vpop.f32.mrf.mxu0
        %v2248 = vadd.f32 %v517, %v2247
        %v2249 = vpop.f32.mrf.mxu0
        %2250 = vmatprep.mubr.bf16.mxu0 0
        %2251 = vmatmul.mubr.bf16.gmra.mxu0 %v1418
        %v2252 = vpop.f32.mrf.mxu0
        %v2253 = vadd.f32 %v517, %v2252
        %v2254 = vpop.f32.mrf.mxu0
        %v2255 = vpop.f32.mrf.mxu0
        %v2256 = vadd.f32 %v517, %v2255
        %v2257 = vpop.f32.mrf.mxu0
        %2258 = vmatprep.mubr.bf16.mxu0 0
        %2259 = vmatmul.mubr.bf16.gmra.mxu0 %v1421
        %v2260 = vpop.f32.mrf.mxu0
        %v2261 = vadd.f32 %v517, %v2260
        %v2262 = vpop.f32.mrf.mxu0
        %v2263 = vpop.f32.mrf.mxu0
        %v2264 = vadd.f32 %v517, %v2263
        %v2265 = vpop.f32.mrf.mxu0
        %2266 = vmatprep.mubr.bf16.mxu0 0
        %2267 = vmatmul.mubr.bf16.gmra.mxu0 %v1424
        %v2268 = vpop.f32.mrf.mxu0
        %v2269 = vadd.f32 %v517, %v2268
        %v2270 = vpop.f32.mrf.mxu0
        %v2271 = vpop.f32.mrf.mxu0
        %v2272 = vadd.f32 %v517, %v2271
        %v2273 = vpop.f32.mrf.mxu0
        %2274 = vmatprep.mubr.bf16.mxu0 0
        %2275 = vmatmul.mubr.bf16.gmra.mxu0 %v1427
        %v2276 = vpop.f32.mrf.mxu0
        %v2277 = vadd.f32 %v517, %v2276
        %v2278 = vpop.f32.mrf.mxu0
        %v2279 = vpop.f32.mrf.mxu0
        %v2280 = vadd.f32 %v517, %v2279
        %v2281 = vpop.f32.mrf.mxu0
        %2282 = vmatprep.mubr.bf16.mxu0 0
        %2283 = vmatmul.mubr.bf16.gmra.mxu0 %v1430
        %v2284 = vpop.f32.mrf.mxu0
        %v2285 = vadd.f32 %v517, %v2284
        %v2286 = vpop.f32.mrf.mxu0
        %v2287 = vpop.f32.mrf.mxu0
        %v2288 = vadd.f32 %v517, %v2287
        %v2289 = vpop.f32.mrf.mxu0
        %2290 = vmatprep.mubr.bf16.mxu0 0
        %2291 = vmatmul.mubr.bf16.gmra.mxu0 %v1433
        %v2292 = vpop.f32.mrf.mxu0
        %v2293 = vadd.f32 %v517, %v2292
        %v2294 = vpop.f32.mrf.mxu0
        %v2295 = vpop.f32.mrf.mxu0
        %v2296 = vadd.f32 %v517, %v2295
        %v2297 = vpop.f32.mrf.mxu0
        %2298 = vmatprep.mubr.bf16.mxu0 0
        %2299 = vmatmul.mubr.bf16.gmra.mxu0 %v1436
        %v2300 = vpop.f32.mrf.mxu0
        %v2301 = vadd.f32 %v517, %v2300
        %v2302 = vpop.f32.mrf.mxu0
        %v2303 = vpop.f32.mrf.mxu0
        %v2304 = vadd.f32 %v517, %v2303
        %v2305 = vpop.f32.mrf.mxu0
        %2306 = vmatprep.mubr.bf16.mxu0 0
        %2307 = vmatmul.mubr.bf16.gmra.mxu0 %v1439
        %v2308 = vpop.f32.mrf.mxu0
        %v2309 = vadd.f32 %v517, %v2308
        %v2310 = vpop.f32.mrf.mxu0
        %v2311 = vpop.f32.mrf.mxu0
        %v2312 = vadd.f32 %v517, %v2311
        %v2313 = vpop.f32.mrf.mxu0
        %2314 = vmatprep.mubr.bf16.mxu0 0
        %2315 = vmatmul.mubr.bf16.gmra.mxu0 %v1442
        %v2316 = vpop.f32.mrf.mxu0
        %v2317 = vadd.f32 %v517, %v2316
        %v2318 = vpop.f32.mrf.mxu0
        %v2319 = vpop.f32.mrf.mxu0
        %v2320 = vadd.f32 %v517, %v2319
        %v2321 = vpop.f32.mrf.mxu0
        %2322 = vmatprep.mubr.bf16.mxu0 0
        %2323 = vmatmul.mubr.bf16.gmra.mxu0 %v1445
        %v2324 = vpop.f32.mrf.mxu0
        %v2325 = vadd.f32 %v517, %v2324
        %v2326 = vpop.f32.mrf.mxu0
        %v2327 = vpop.f32.mrf.mxu0
        %v2328 = vadd.f32 %v517, %v2327
        %v2329 = vpop.f32.mrf.mxu0
        %2330 = vmatprep.mubr.bf16.mxu0 0
        %2331 = vmatmul.mubr.bf16.gmra.mxu0 %v1448
        %v2332 = vpop.f32.mrf.mxu0
        %v2333 = vadd.f32 %v517, %v2332
        %v2334 = vpop.f32.mrf.mxu0
        %v2335 = vpop.f32.mrf.mxu0
        %v2336 = vadd.f32 %v517, %v2335
        %v2337 = vpop.f32.mrf.mxu0
        %2338 = vmatprep.mubr.bf16.mxu0 0
        %2339 = vmatmul.mubr.bf16.gmra.mxu0 %v1451
        %v2340 = vpop.f32.mrf.mxu0
        %v2341 = vadd.f32 %v517, %v2340
        %v2342 = vpop.f32.mrf.mxu0
        %v2343 = vpop.f32.mrf.mxu0
        %v2344 = vadd.f32 %v517, %v2343
        %v2345 = vpop.f32.mrf.mxu0
        %2346 = vmatprep.mubr.bf16.mxu0 0
        %2347 = vmatmul.mubr.bf16.gmra.mxu0 %v1454
        %v2348 = vpop.f32.mrf.mxu0
        %v2349 = vadd.f32 %v517, %v2348
        %v2350 = vpop.f32.mrf.mxu0
        %v2351 = vpop.f32.mrf.mxu0
        %v2352 = vadd.f32 %v517, %v2351
        %v2353 = vpop.f32.mrf.mxu0
        %2354 = vmatprep.mubr.bf16.mxu0 0
        %2355 = vmatmul.mubr.bf16.gmra.mxu0 %v1457
        %v2356 = vpop.f32.mrf.mxu0
        %v2357 = vadd.f32 %v517, %v2356
        %v2358 = vpop.f32.mrf.mxu0
        %v2359 = vpop.f32.mrf.mxu0
        %v2360 = vadd.f32 %v517, %v2359
        %v2361 = vpop.f32.mrf.mxu0
        %2362 = vmatprep.mubr.bf16.mxu0 0
        %2363 = vmatmul.mubr.bf16.gmra.mxu0 %v1460
        %v2364 = vpop.f32.mrf.mxu0
        %v2365 = vadd.f32 %v517, %v2364
        %v2366 = vpop.f32.mrf.mxu0
        %v2367 = vpop.f32.mrf.mxu0
        %v2368 = vadd.f32 %v517, %v2367
        %v2369 = vpop.f32.mrf.mxu0
        %2370 = vmatprep.mubr.bf16.mxu0 0
        %2371 = vmatmul.mubr.bf16.gmra.mxu0 %v1463
        %v2372 = vpop.f32.mrf.mxu0
        %v2373 = vadd.f32 %v517, %v2372
        %v2374 = vpop.f32.mrf.mxu0
        %v2375 = vpop.f32.mrf.mxu0
        %v2376 = vadd.f32 %v517, %v2375
        %v2377 = vpop.f32.mrf.mxu0
        %2378 = vmatprep.mubr.bf16.mxu0 0
        %2379 = vmatmul.mubr.bf16.gmra.mxu0 %v1466
        %v2380 = vpop.f32.mrf.mxu0
        %v2381 = vadd.f32 %v517, %v2380
        %v2382 = vpop.f32.mrf.mxu0
        %v2383 = vpop.f32.mrf.mxu0
        %v2384 = vadd.f32 %v517, %v2383
        %v2385 = vpop.f32.mrf.mxu0
        %2386 = vmatprep.mubr.bf16.mxu0 0
        %2387 = vmatmul.mubr.bf16.gmra.mxu0 %v1469
        %v2388 = vpop.f32.mrf.mxu0
        %v2389 = vadd.f32 %v517, %v2388
        %v2390 = vpop.f32.mrf.mxu0
        %v2391 = vpop.f32.mrf.mxu0
        %v2392 = vadd.f32 %v517, %v2391
        %v2393 = vpop.f32.mrf.mxu0
        %2394 = vmatprep.mubr.bf16.mxu0 0
        %2395 = vmatmul.mubr.bf16.gmra.mxu0 %v1472
        %v2396 = vpop.f32.mrf.mxu0
        %v2397 = vadd.f32 %v517, %v2396
        %v2398 = vpop.f32.mrf.mxu0
        %v2399 = vpop.f32.mrf.mxu0
        %v2400 = vadd.f32 %v517, %v2399
        %v2401 = vpop.f32.mrf.mxu0
        %2402 = vmatprep.mubr.bf16.mxu0 0
        %2403 = vmatmul.mubr.bf16.gmra.mxu0 %v1475
        %v2404 = vpop.f32.mrf.mxu0
        %v2405 = vadd.f32 %v517, %v2404
        %v2406 = vpop.f32.mrf.mxu0
        %v2407 = vpop.f32.mrf.mxu0
        %v2408 = vadd.f32 %v517, %v2407
        %v2409 = vpop.f32.mrf.mxu0
        %2410 = vmatprep.mubr.bf16.mxu0 0
        %2411 = vmatmul.mubr.bf16.gmra.mxu0 %v1478
        %v2412 = vpop.f32.mrf.mxu0
        %v2413 = vadd.f32 %v517, %v2412
        %v2414 = vpop.f32.mrf.mxu0
        %v2415 = vpop.f32.mrf.mxu0
        %v2416 = vadd.f32 %v517, %v2415
        %v2417 = vpop.f32.mrf.mxu0
        %2418 = vmatprep.mubr.bf16.mxu0 0
        %2419 = vmatmul.mubr.bf16.gmra.mxu0 %v1481
        %v2420 = vpop.f32.mrf.mxu0
        %v2421 = vadd.f32 %v517, %v2420
        %v2422 = vpop.f32.mrf.mxu0
        %v2423 = vpop.f32.mrf.mxu0
        %v2424 = vadd.f32 %v517, %v2423
        %v2425 = vpop.f32.mrf.mxu0
        %2426 = vmatprep.mubr.bf16.mxu0 0
        %2427 = vmatmul.mubr.bf16.gmra.mxu0 %v1484
        %v2428 = vpop.f32.mrf.mxu0
        %v2429 = vadd.f32 %v517, %v2428
        %v2430 = vpop.f32.mrf.mxu0
        %v2431 = vpop.f32.mrf.mxu0
        %v2432 = vadd.f32 %v517, %v2431
        %v2433 = vpop.f32.mrf.mxu0
        %2434 = vmatprep.mubr.bf16.mxu0 0
        %2435 = vmatmul.mubr.bf16.gmra.mxu0 %v1487
        %v2436 = vpop.f32.mrf.mxu0
        %v2437 = vadd.f32 %v517, %v2436
        %v2438 = vpop.f32.mrf.mxu0
        %v2439 = vpop.f32.mrf.mxu0
        %v2440 = vadd.f32 %v517, %v2439
        %v2441 = vpop.f32.mrf.mxu0
        %2442 = vmatprep.mubr.bf16.mxu0 0
        %2443 = vmatmul.mubr.bf16.gmra.mxu0 %v1490
        %v2444 = vpop.f32.mrf.mxu0
        %v2445 = vadd.f32 %v517, %v2444
        %v2446 = vpop.f32.mrf.mxu0
        %v2447 = vpop.f32.mrf.mxu0
        %v2448 = vadd.f32 %v517, %v2447
        %v2449 = vpop.f32.mrf.mxu0
        %2450 = vmatprep.mubr.bf16.mxu0 0
        %2451 = vmatmul.mubr.bf16.gmra.mxu0 %v1493
        %v2452 = vpop.f32.mrf.mxu0
        %v2453 = vadd.f32 %v517, %v2452
        %v2454 = vpop.f32.mrf.mxu0
        %v2455 = vpop.f32.mrf.mxu0
        %v2456 = vadd.f32 %v517, %v2455
        %v2457 = vpop.f32.mrf.mxu0
        %2458 = vmatprep.mubr.bf16.mxu0 0
        %2459 = vmatmul.mubr.bf16.gmra.mxu0 %v1496
        %v2460 = vpop.f32.mrf.mxu0
        %v2461 = vadd.f32 %v517, %v2460
        %v2462 = vpop.f32.mrf.mxu0
        %v2463 = vpop.f32.mrf.mxu0
        %v2464 = vadd.f32 %v517, %v2463
        %v2465 = vpop.f32.mrf.mxu0
        %2466 = vmatprep.mubr.bf16.mxu0 0
        %2467 = vmatmul.mubr.bf16.gmra.mxu0 %v1499
        %v2468 = vpop.f32.mrf.mxu0
        %v2469 = vadd.f32 %v517, %v2468
        %v2470 = vpop.f32.mrf.mxu0
        %v2471 = vpop.f32.mrf.mxu0
        %v2472 = vadd.f32 %v517, %v2471
        %v2473 = vpop.f32.mrf.mxu0
        %2474 = vmatprep.mubr.bf16.mxu0 0
        %2475 = vmatmul.mubr.bf16.gmra.mxu0 %v1502
        %v2476 = vpop.f32.mrf.mxu0
        %v2477 = vadd.f32 %v517, %v2476
        %v2478 = vpop.f32.mrf.mxu0
        %v2479 = vpop.f32.mrf.mxu0
        %v2480 = vadd.f32 %v517, %v2479
        %v2481 = vpop.f32.mrf.mxu0
        %2482 = vmatprep.mubr.bf16.mxu0 0
        %2483 = vmatmul.mubr.bf16.gmra.mxu0 %v1505
        %v2484 = vpop.f32.mrf.mxu0
        %v2485 = vadd.f32 %v517, %v2484
        %v2486 = vpop.f32.mrf.mxu0
        %v2487 = vpop.f32.mrf.mxu0
        %v2488 = vadd.f32 %v517, %v2487
        %v2489 = vpop.f32.mrf.mxu0
        %2490 = vmatprep.mubr.bf16.mxu0 0
        %2491 = vmatmul.mubr.bf16.gmra.mxu0 %v1508
        %v2492 = vpop.f32.mrf.mxu0
        %v2493 = vadd.f32 %v517, %v2492
        %v2494 = vpop.f32.mrf.mxu0
        %v2495 = vpop.f32.mrf.mxu0
        %v2496 = vadd.f32 %v517, %v2495
        %v2497 = vpop.f32.mrf.mxu0
        %2498 = vmatprep.mubr.bf16.mxu0 0
        %2499 = vmatmul.mubr.bf16.gmra.mxu0 %v1511
        %v2500 = vpop.f32.mrf.mxu0
        %v2501 = vadd.f32 %v517, %v2500
        %v2502 = vpop.f32.mrf.mxu0
        %v2503 = vpop.f32.mrf.mxu0
        %v2504 = vadd.f32 %v517, %v2503
        %v2505 = vpop.f32.mrf.mxu0
        %2506 = vmatprep.mubr.bf16.mxu0 0
        %2507 = vmatmul.mubr.bf16.gmra.mxu0 %v1514
        %v2508 = vpop.f32.mrf.mxu0
        %v2509 = vadd.f32 %v517, %v2508
        %v2510 = vpop.f32.mrf.mxu0
        %v2511 = vpop.f32.mrf.mxu0
        %v2512 = vadd.f32 %v517, %v2511
        %v2513 = vpop.f32.mrf.mxu0
        %2514 = vmatprep.mubr.bf16.mxu0 0
        %2515 = vmatmul.mubr.bf16.gmra.mxu0 %v1517
        %v2516 = vpop.f32.mrf.mxu0
        %v2517 = vadd.f32 %v517, %v2516
        %v2518 = vpop.f32.mrf.mxu0
        %v2519 = vpop.f32.mrf.mxu0
        %v2520 = vadd.f32 %v517, %v2519
        %v2521 = vpop.f32.mrf.mxu0
        %2522 = vmatprep.mubr.bf16.mxu0 0
        %2523 = vmatmul.mubr.bf16.gmra.mxu0 %v1520
        %v2524 = vpop.f32.mrf.mxu0
        %v2525 = vadd.f32 %v517, %v2524
        %v2526 = vpop.f32.mrf.mxu0
        %v2527 = vpop.f32.mrf.mxu0
        %v2528 = vadd.f32 %v517, %v2527
        %v2529 = vpop.f32.mrf.mxu0
        %2530 = vmatprep.mubr.bf16.mxu0 0
        %2531 = vmatmul.mubr.bf16.gmra.mxu0 %v1523
        %v2532 = vpop.f32.mrf.mxu0
        %v2533 = vadd.f32 %v517, %v2532
        %v2534 = vpop.f32.mrf.mxu0
        %v2535 = vpop.f32.mrf.mxu0
        %v2536 = vadd.f32 %v517, %v2535
        %v2537 = vpop.f32.mrf.mxu0
        %2538 = vmatprep.mubr.bf16.mxu0 0
        %2539 = vmatmul.mubr.bf16.gmra.mxu0 %v1526
        %v2540 = vpop.f32.mrf.mxu0
        %v2541 = vadd.f32 %v517, %v2540
        %v2542 = vpop.f32.mrf.mxu0
        %v2543 = vpop.f32.mrf.mxu0
        %v2544 = vadd.f32 %v517, %v2543
        %v2545 = vpop.f32.mrf.mxu0
        %2546 = vmatprep.mubr.bf16.mxu0 0
        %2547 = vmatmul.mubr.bf16.gmra.mxu0 %v1529
        %v2548 = vpop.f32.mrf.mxu0
        %v2549 = vadd.f32 %v517, %v2548
        %v2550 = vpop.f32.mrf.mxu0
        %v2551 = vpop.f32.mrf.mxu0
        %v2552 = vadd.f32 %v517, %v2551
        %v2553 = vpop.f32.mrf.mxu0
        %2554 = vmatprep.mubr.bf16.mxu0 0
        %2555 = vmatmul.mubr.bf16.gmra.mxu0 %v1532
        %v2556 = vpop.f32.mrf.mxu0
        %v2557 = vadd.f32 %v517, %v2556
        %v2558 = vpop.f32.mrf.mxu0
        %v2559 = vpop.f32.mrf.mxu0
        %v2560 = vadd.f32 %v517, %v2559
        %v2561 = vpop.f32.mrf.mxu0
        %2562 = vmatprep.mubr.bf16.mxu0 0
        %2563 = vmatmul.mubr.bf16.gmra.mxu0 %v1535
        %v2564 = vpop.f32.mrf.mxu0
        %v2565 = vadd.f32 %v517, %v2564
        %v2566 = vpop.f32.mrf.mxu0
        %v2567 = vpop.f32.mrf.mxu0
        %v2568 = vadd.f32 %v517, %v2567
        %v2569 = vpop.f32.mrf.mxu0
        %2570 = vmatprep.mubr.bf16.mxu0 0
        %2571 = vmatmul.mubr.bf16.gmra.mxu0 %v1538
        %v2572 = vpop.f32.mrf.mxu0
        %v2573 = vadd.f32 %v517, %v2572
        %v2574 = vpop.f32.mrf.mxu0
        %v2575 = vpop.f32.mrf.mxu0
        %v2576 = vadd.f32 %v517, %v2575
        %v2577 = vpop.f32.mrf.mxu0
        %2578 = vmatprep.mubr.bf16.mxu0 0
        %2579 = vmatmul.mubr.bf16.gmra.mxu0 %v1541
        %v2580 = vpop.f32.mrf.mxu0
        %v2581 = vadd.f32 %v517, %v2580
        %v2582 = vpop.f32.mrf.mxu0
        %v2583 = vpop.f32.mrf.mxu0
        %v2584 = vadd.f32 %v517, %v2583
        %v2585 = vpop.f32.mrf.mxu0
        %2586 = vmatprep.mubr.bf16.mxu0 0
        %2587 = vmatmul.mubr.bf16.gmra.mxu0 %v1544
        %v2588 = vpop.f32.mrf.mxu0
        %v2589 = vadd.f32 %v517, %v2588
        %v2590 = vpop.f32.mrf.mxu0
        %v2591 = vpop.f32.mrf.mxu0
        %v2592 = vadd.f32 %v517, %v2591
        %v2593 = vpop.f32.mrf.mxu0
        %2594 = vmatprep.mubr.bf16.mxu0 0
        %2595 = vmatmul.mubr.bf16.gmra.mxu0 %v1547
        %v2596 = vpop.f32.mrf.mxu0
        %v2597 = vadd.f32 %v517, %v2596
        %v2598 = vpop.f32.mrf.mxu0
        %v2599 = vpop.f32.mrf.mxu0
        %v2600 = vadd.f32 %v517, %v2599
        %v2601 = vpop.f32.mrf.mxu0
        %2602 = vmatprep.mubr.bf16.mxu0 0
        %2603 = vmatmul.mubr.bf16.gmra.mxu0 %v1550
        %v2604 = vpop.f32.mrf.mxu0
        %v2605 = vadd.f32 %v517, %v2604
        %v2606 = vpop.f32.mrf.mxu0
        %v2607 = vpop.f32.mrf.mxu0
        %v2608 = vadd.f32 %v517, %v2607
        %v2609 = vpop.f32.mrf.mxu0
        %2610 = vmatprep.mubr.bf16.mxu0 0
        %2611 = vmatmul.mubr.bf16.gmra.mxu0 %v1553
        %v2612 = vpop.f32.mrf.mxu0
        %v2613 = vadd.f32 %v517, %v2612
        %v2614 = vpop.f32.mrf.mxu0
        %v2615 = vpop.f32.mrf.mxu0
        %v2616 = vadd.f32 %v517, %v2615
        %v2617 = vpop.f32.mrf.mxu0
        %2618 = vdwg.mxu0
        %v2619 = vmax.f32 %v1597, 0.0
        %v2620 = vmax.f32 %v1600, 0.0
        %v2621 = vmax.f32 %v1605, 0.0
        %v2622 = vmax.f32 %v1608, 0.0
        %v2623 = vmax.f32 %v1613, 0.0
        %v2624 = vmax.f32 %v1616, 0.0
        %v2625 = vmax.f32 %v1621, 0.0
        %v2626 = vmax.f32 %v1624, 0.0
        %v2627 = vmax.f32 %v1629, 0.0
        %v2628 = vmax.f32 %v1632, 0.0
        %v2629 = vmax.f32 %v1637, 0.0
        %v2630 = vmax.f32 %v1640, 0.0
        %v2631 = vmax.f32 %v1645, 0.0
        %v2632 = vmax.f32 %v1648, 0.0
        %v2633 = vmax.f32 %v1653, 0.0
        %v2634 = vmax.f32 %v1656, 0.0
        %v2635 = vmax.f32 %v1661, 0.0
        %v2636 = vmax.f32 %v1664, 0.0
        %v2637 = vmax.f32 %v1669, 0.0
        %v2638 = vmax.f32 %v1672, 0.0
        %v2639 = vmax.f32 %v1677, 0.0
        %v2640 = vmax.f32 %v1680, 0.0
        %v2641 = vmax.f32 %v1685, 0.0
        %v2642 = vmax.f32 %v1688, 0.0
        %v2643 = vmax.f32 %v1693, 0.0
        %v2644 = vmax.f32 %v1696, 0.0
        %v2645 = vmax.f32 %v1701, 0.0
        %v2646 = vmax.f32 %v1704, 0.0
        %v2647 = vmax.f32 %v1709, 0.0
        %v2648 = vmax.f32 %v1712, 0.0
        %v2649 = vmax.f32 %v1717, 0.0
        %v2650 = vmax.f32 %v1720, 0.0
        %v2651 = vmax.f32 %v1725, 0.0
        %v2652 = vmax.f32 %v1728, 0.0
        %v2653 = vmax.f32 %v1733, 0.0
        %v2654 = vmax.f32 %v1736, 0.0
        %v2655 = vmax.f32 %v1741, 0.0
        %v2656 = vmax.f32 %v1744, 0.0
        %v2657 = vmax.f32 %v1749, 0.0
        %v2658 = vmax.f32 %v1752, 0.0
        %v2659 = vmax.f32 %v1757, 0.0
        %v2660 = vmax.f32 %v1760, 0.0
        %v2661 = vmax.f32 %v1765, 0.0
        %v2662 = vmax.f32 %v1768, 0.0
        %v2663 = vmax.f32 %v1773, 0.0
        %v2664 = vmax.f32 %v1776, 0.0
        %v2665 = vmax.f32 %v1781, 0.0
        %v2666 = vmax.f32 %v1784, 0.0
        %v2667 = vmax.f32 %v1789, 0.0
        %v2668 = vmax.f32 %v1792, 0.0
        %v2669 = vmax.f32 %v1797, 0.0
        %v2670 = vmax.f32 %v1800, 0.0
        %v2671 = vmax.f32 %v1805, 0.0
        %v2672 = vmax.f32 %v1808, 0.0
        %v2673 = vmax.f32 %v1813, 0.0
        %v2674 = vmax.f32 %v1816, 0.0
        %v2675 = vmax.f32 %v1821, 0.0
        %v2676 = vmax.f32 %v1824, 0.0
        %v2677 = vmax.f32 %v1829, 0.0
        %v2678 = vmax.f32 %v1832, 0.0
        %v2679 = vmax.f32 %v1837, 0.0
        %v2680 = vmax.f32 %v1840, 0.0
        %v2681 = vmax.f32 %v1845, 0.0
        %v2682 = vmax.f32 %v1848, 0.0
        %v2683 = vmax.f32 %v1853, 0.0
        %v2684 = vmax.f32 %v1856, 0.0
        %v2685 = vmax.f32 %v1861, 0.0
        %v2686 = vmax.f32 %v1864, 0.0
        %v2687 = vmax.f32 %v1869, 0.0
        %v2688 = vmax.f32 %v1872, 0.0
        %v2689 = vmax.f32 %v1877, 0.0
        %v2690 = vmax.f32 %v1880, 0.0
        %v2691 = vmax.f32 %v1885, 0.0
        %v2692 = vmax.f32 %v1888, 0.0
        %v2693 = vmax.f32 %v1893, 0.0
        %v2694 = vmax.f32 %v1896, 0.0
        %v2695 = vmax.f32 %v1901, 0.0
        %v2696 = vmax.f32 %v1904, 0.0
        %v2697 = vmax.f32 %v1909, 0.0
        %v2698 = vmax.f32 %v1912, 0.0
        %v2699 = vmax.f32 %v1917, 0.0
        %v2700 = vmax.f32 %v1920, 0.0
        %v2701 = vmax.f32 %v1925, 0.0
        %v2702 = vmax.f32 %v1928, 0.0
        %v2703 = vmax.f32 %v1933, 0.0
        %v2704 = vmax.f32 %v1936, 0.0
        %v2705 = vmax.f32 %v1941, 0.0
        %v2706 = vmax.f32 %v1944, 0.0
        %v2707 = vmax.f32 %v1949, 0.0
        %v2708 = vmax.f32 %v1952, 0.0
        %v2709 = vmax.f32 %v1957, 0.0
        %v2710 = vmax.f32 %v1960, 0.0
        %v2711 = vmax.f32 %v1965, 0.0
        %v2712 = vmax.f32 %v1968, 0.0
        %v2713 = vmax.f32 %v1973, 0.0
        %v2714 = vmax.f32 %v1976, 0.0
        %v2715 = vmax.f32 %v1981, 0.0
        %v2716 = vmax.f32 %v1984, 0.0
        %v2717 = vmax.f32 %v1989, 0.0
        %v2718 = vmax.f32 %v1992, 0.0
        %v2719 = vmax.f32 %v1997, 0.0
        %v2720 = vmax.f32 %v2000, 0.0
        %v2721 = vmax.f32 %v2005, 0.0
        %v2722 = vmax.f32 %v2008, 0.0
        %v2723 = vmax.f32 %v2013, 0.0
        %v2724 = vmax.f32 %v2016, 0.0
        %v2725 = vmax.f32 %v2021, 0.0
        %v2726 = vmax.f32 %v2024, 0.0
        %v2727 = vmax.f32 %v2029, 0.0
        %v2728 = vmax.f32 %v2032, 0.0
        %v2729 = vmax.f32 %v2037, 0.0
        %v2730 = vmax.f32 %v2040, 0.0
        %v2731 = vmax.f32 %v2045, 0.0
        %v2732 = vmax.f32 %v2048, 0.0
        %v2733 = vmax.f32 %v2053, 0.0
        %v2734 = vmax.f32 %v2056, 0.0
        %v2735 = vmax.f32 %v2061, 0.0
        %v2736 = vmax.f32 %v2064, 0.0
        %v2737 = vmax.f32 %v2069, 0.0
        %v2738 = vmax.f32 %v2072, 0.0
        %v2739 = vmax.f32 %v2077, 0.0
        %v2740 = vmax.f32 %v2080, 0.0
        %v2741 = vmax.f32 %v2085, 0.0
        %v2742 = vmax.f32 %v2088, 0.0
        %v2743 = vmax.f32 %v2093, 0.0
        %v2744 = vmax.f32 %v2096, 0.0
        %v2745 = vmax.f32 %v2101, 0.0
        %v2746 = vmax.f32 %v2104, 0.0
        %v2747 = vmax.f32 %v2109, 0.0
        %v2748 = vmax.f32 %v2112, 0.0
        %v2749 = vmax.f32 %v2117, 0.0
        %v2750 = vmax.f32 %v2120, 0.0
        %v2751 = vmax.f32 %v2125, 0.0
        %v2752 = vmax.f32 %v2128, 0.0
        %v2753 = vmax.f32 %v2133, 0.0
        %v2754 = vmax.f32 %v2136, 0.0
        %v2755 = vmax.f32 %v2141, 0.0
        %v2756 = vmax.f32 %v2144, 0.0
        %v2757 = vmax.f32 %v2149, 0.0
        %v2758 = vmax.f32 %v2152, 0.0
        %v2759 = vmax.f32 %v2157, 0.0
        %v2760 = vmax.f32 %v2160, 0.0
        %v2761 = vmax.f32 %v2165, 0.0
        %v2762 = vmax.f32 %v2168, 0.0
        %v2763 = vmax.f32 %v2173, 0.0
        %v2764 = vmax.f32 %v2176, 0.0
        %v2765 = vmax.f32 %v2181, 0.0
        %v2766 = vmax.f32 %v2184, 0.0
        %v2767 = vmax.f32 %v2189, 0.0
        %v2768 = vmax.f32 %v2192, 0.0
        %v2769 = vmax.f32 %v2197, 0.0
        %v2770 = vmax.f32 %v2200, 0.0
        %v2771 = vmax.f32 %v2205, 0.0
        %v2772 = vmax.f32 %v2208, 0.0
        %v2773 = vmax.f32 %v2213, 0.0
        %v2774 = vmax.f32 %v2216, 0.0
        %v2775 = vmax.f32 %v2221, 0.0
        %v2776 = vmax.f32 %v2224, 0.0
        %v2777 = vmax.f32 %v2229, 0.0
        %v2778 = vmax.f32 %v2232, 0.0
        %v2779 = vmax.f32 %v2237, 0.0
        %v2780 = vmax.f32 %v2240, 0.0
        %v2781 = vmax.f32 %v2245, 0.0
        %v2782 = vmax.f32 %v2248, 0.0
        %v2783 = vmax.f32 %v2253, 0.0
        %v2784 = vmax.f32 %v2256, 0.0
        %v2785 = vmax.f32 %v2261, 0.0
        %v2786 = vmax.f32 %v2264, 0.0
        %v2787 = vmax.f32 %v2269, 0.0
        %v2788 = vmax.f32 %v2272, 0.0
        %v2789 = vmax.f32 %v2277, 0.0
        %v2790 = vmax.f32 %v2280, 0.0
        %v2791 = vmax.f32 %v2285, 0.0
        %v2792 = vmax.f32 %v2288, 0.0
        %v2793 = vmax.f32 %v2293, 0.0
        %v2794 = vmax.f32 %v2296, 0.0
        %v2795 = vmax.f32 %v2301, 0.0
        %v2796 = vmax.f32 %v2304, 0.0
        %v2797 = vmax.f32 %v2309, 0.0
        %v2798 = vmax.f32 %v2312, 0.0
        %v2799 = vmax.f32 %v2317, 0.0
        %v2800 = vmax.f32 %v2320, 0.0
        %v2801 = vmax.f32 %v2325, 0.0
        %v2802 = vmax.f32 %v2328, 0.0
        %v2803 = vmax.f32 %v2333, 0.0
        %v2804 = vmax.f32 %v2336, 0.0
        %v2805 = vmax.f32 %v2341, 0.0
        %v2806 = vmax.f32 %v2344, 0.0
        %v2807 = vmax.f32 %v2349, 0.0
        %v2808 = vmax.f32 %v2352, 0.0
        %v2809 = vmax.f32 %v2357, 0.0
        %v2810 = vmax.f32 %v2360, 0.0
        %v2811 = vmax.f32 %v2365, 0.0
        %v2812 = vmax.f32 %v2368, 0.0
        %v2813 = vmax.f32 %v2373, 0.0
        %v2814 = vmax.f32 %v2376, 0.0
        %v2815 = vmax.f32 %v2381, 0.0
        %v2816 = vmax.f32 %v2384, 0.0
        %v2817 = vmax.f32 %v2389, 0.0
        %v2818 = vmax.f32 %v2392, 0.0
        %v2819 = vmax.f32 %v2397, 0.0
        %v2820 = vmax.f32 %v2400, 0.0
        %v2821 = vmax.f32 %v2405, 0.0
        %v2822 = vmax.f32 %v2408, 0.0
        %v2823 = vmax.f32 %v2413, 0.0
        %v2824 = vmax.f32 %v2416, 0.0
        %v2825 = vmax.f32 %v2421, 0.0
        %v2826 = vmax.f32 %v2424, 0.0
        %v2827 = vmax.f32 %v2429, 0.0
        %v2828 = vmax.f32 %v2432, 0.0
        %v2829 = vmax.f32 %v2437, 0.0
        %v2830 = vmax.f32 %v2440, 0.0
        %v2831 = vmax.f32 %v2445, 0.0
        %v2832 = vmax.f32 %v2448, 0.0
        %v2833 = vmax.f32 %v2453, 0.0
        %v2834 = vmax.f32 %v2456, 0.0
        %v2835 = vmax.f32 %v2461, 0.0
        %v2836 = vmax.f32 %v2464, 0.0
        %v2837 = vmax.f32 %v2469, 0.0
        %v2838 = vmax.f32 %v2472, 0.0
        %v2839 = vmax.f32 %v2477, 0.0
        %v2840 = vmax.f32 %v2480, 0.0
        %v2841 = vmax.f32 %v2485, 0.0
        %v2842 = vmax.f32 %v2488, 0.0
        %v2843 = vmax.f32 %v2493, 0.0
        %v2844 = vmax.f32 %v2496, 0.0
        %v2845 = vmax.f32 %v2501, 0.0
        %v2846 = vmax.f32 %v2504, 0.0
        %v2847 = vmax.f32 %v2509, 0.0
        %v2848 = vmax.f32 %v2512, 0.0
        %v2849 = vmax.f32 %v2517, 0.0
        %v2850 = vmax.f32 %v2520, 0.0
        %v2851 = vmax.f32 %v2525, 0.0
        %v2852 = vmax.f32 %v2528, 0.0
        %v2853 = vmax.f32 %v2533, 0.0
        %v2854 = vmax.f32 %v2536, 0.0
        %v2855 = vmax.f32 %v2541, 0.0
        %v2856 = vmax.f32 %v2544, 0.0
        %v2857 = vmax.f32 %v2549, 0.0
        %v2858 = vmax.f32 %v2552, 0.0
        %v2859 = vmax.f32 %v2557, 0.0
        %v2860 = vmax.f32 %v2560, 0.0
        %v2861 = vmax.f32 %v2565, 0.0
        %v2862 = vmax.f32 %v2568, 0.0
        %v2863 = vmax.f32 %v2573, 0.0
        %v2864 = vmax.f32 %v2576, 0.0
        %v2865 = vmax.f32 %v2581, 0.0
        %v2866 = vmax.f32 %v2584, 0.0
        %v2867 = vmax.f32 %v2589, 0.0
        %v2868 = vmax.f32 %v2592, 0.0
        %v2869 = vmax.f32 %v2597, 0.0
        %v2870 = vmax.f32 %v2600, 0.0
        %v2871 = vmax.f32 %v2605, 0.0
        %v2872 = vmax.f32 %v2608, 0.0
        %v2873 = vmax.f32 %v2613, 0.0
        %v2874 = vmax.f32 %v2616, 0.0
        %v2875 = vpack.c.bf16 %v2620, %v2619
        %v2876 = vpack.c.bf16 %v2622, %v2621
        %v2877 = vpack.c.bf16 %v2624, %v2623
        %v2878 = vpack.c.bf16 %v2626, %v2625
        %v2879 = vpack.c.bf16 %v2628, %v2627
        %v2880 = vpack.c.bf16 %v2630, %v2629
        %v2881 = vpack.c.bf16 %v2632, %v2631
        %v2882 = vpack.c.bf16 %v2634, %v2633
        %v2883 = vpack.c.bf16 %v2636, %v2635
        %v2884 = vpack.c.bf16 %v2638, %v2637
        %v2885 = vpack.c.bf16 %v2640, %v2639
        %v2886 = vpack.c.bf16 %v2642, %v2641
        %v2887 = vpack.c.bf16 %v2644, %v2643
        %v2888 = vpack.c.bf16 %v2646, %v2645
        %v2889 = vpack.c.bf16 %v2648, %v2647
        %v2890 = vpack.c.bf16 %v2650, %v2649
        %v2891 = vpack.c.bf16 %v2652, %v2651
        %v2892 = vpack.c.bf16 %v2654, %v2653
        %v2893 = vpack.c.bf16 %v2656, %v2655
        %v2894 = vpack.c.bf16 %v2658, %v2657
        %v2895 = vpack.c.bf16 %v2660, %v2659
        %v2896 = vpack.c.bf16 %v2662, %v2661
        %v2897 = vpack.c.bf16 %v2664, %v2663
        %v2898 = vpack.c.bf16 %v2666, %v2665
        %v2899 = vpack.c.bf16 %v2668, %v2667
        %v2900 = vpack.c.bf16 %v2670, %v2669
        %v2901 = vpack.c.bf16 %v2672, %v2671
        %v2902 = vpack.c.bf16 %v2674, %v2673
        %v2903 = vpack.c.bf16 %v2676, %v2675
        %v2904 = vpack.c.bf16 %v2678, %v2677
        %v2905 = vpack.c.bf16 %v2680, %v2679
        %v2906 = vpack.c.bf16 %v2682, %v2681
        %v2907 = vpack.c.bf16 %v2684, %v2683
        %v2908 = vpack.c.bf16 %v2686, %v2685
        %v2909 = vpack.c.bf16 %v2688, %v2687
        %v2910 = vpack.c.bf16 %v2690, %v2689
        %v2911 = vpack.c.bf16 %v2692, %v2691
        %v2912 = vpack.c.bf16 %v2694, %v2693
        %v2913 = vpack.c.bf16 %v2696, %v2695
        %v2914 = vpack.c.bf16 %v2698, %v2697
        %v2915 = vpack.c.bf16 %v2700, %v2699
        %v2916 = vpack.c.bf16 %v2702, %v2701
        %v2917 = vpack.c.bf16 %v2704, %v2703
        %v2918 = vpack.c.bf16 %v2706, %v2705
        %v2919 = vpack.c.bf16 %v2708, %v2707
        %v2920 = vpack.c.bf16 %v2710, %v2709
        %v2921 = vpack.c.bf16 %v2712, %v2711
        %v2922 = vpack.c.bf16 %v2714, %v2713
        %v2923 = vpack.c.bf16 %v2716, %v2715
        %v2924 = vpack.c.bf16 %v2718, %v2717
        %v2925 = vpack.c.bf16 %v2720, %v2719
        %v2926 = vpack.c.bf16 %v2722, %v2721
        %v2927 = vpack.c.bf16 %v2724, %v2723
        %v2928 = vpack.c.bf16 %v2726, %v2725
        %v2929 = vpack.c.bf16 %v2728, %v2727
        %v2930 = vpack.c.bf16 %v2730, %v2729
        %v2931 = vpack.c.bf16 %v2732, %v2731
        %v2932 = vpack.c.bf16 %v2734, %v2733
        %v2933 = vpack.c.bf16 %v2736, %v2735
        %v2934 = vpack.c.bf16 %v2738, %v2737
        %v2935 = vpack.c.bf16 %v2740, %v2739
        %v2936 = vpack.c.bf16 %v2742, %v2741
        %v2937 = vpack.c.bf16 %v2744, %v2743
        %v2938 = vpack.c.bf16 %v2746, %v2745
        %v2939 = vpack.c.bf16 %v2748, %v2747
        %v2940 = vpack.c.bf16 %v2750, %v2749
        %v2941 = vpack.c.bf16 %v2752, %v2751
        %v2942 = vpack.c.bf16 %v2754, %v2753
        %v2943 = vpack.c.bf16 %v2756, %v2755
        %v2944 = vpack.c.bf16 %v2758, %v2757
        %v2945 = vpack.c.bf16 %v2760, %v2759
        %v2946 = vpack.c.bf16 %v2762, %v2761
        %v2947 = vpack.c.bf16 %v2764, %v2763
        %v2948 = vpack.c.bf16 %v2766, %v2765
        %v2949 = vpack.c.bf16 %v2768, %v2767
        %v2950 = vpack.c.bf16 %v2770, %v2769
        %v2951 = vpack.c.bf16 %v2772, %v2771
        %v2952 = vpack.c.bf16 %v2774, %v2773
        %v2953 = vpack.c.bf16 %v2776, %v2775
        %v2954 = vpack.c.bf16 %v2778, %v2777
        %v2955 = vpack.c.bf16 %v2780, %v2779
        %v2956 = vpack.c.bf16 %v2782, %v2781
        %v2957 = vpack.c.bf16 %v2784, %v2783
        %v2958 = vpack.c.bf16 %v2786, %v2785
        %v2959 = vpack.c.bf16 %v2788, %v2787
        %v2960 = vpack.c.bf16 %v2790, %v2789
        %v2961 = vpack.c.bf16 %v2792, %v2791
        %v2962 = vpack.c.bf16 %v2794, %v2793
        %v2963 = vpack.c.bf16 %v2796, %v2795
        %v2964 = vpack.c.bf16 %v2798, %v2797
        %v2965 = vpack.c.bf16 %v2800, %v2799
        %v2966 = vpack.c.bf16 %v2802, %v2801
        %v2967 = vpack.c.bf16 %v2804, %v2803
        %v2968 = vpack.c.bf16 %v2806, %v2805
        %v2969 = vpack.c.bf16 %v2808, %v2807
        %v2970 = vpack.c.bf16 %v2810, %v2809
        %v2971 = vpack.c.bf16 %v2812, %v2811
        %v2972 = vpack.c.bf16 %v2814, %v2813
        %v2973 = vpack.c.bf16 %v2816, %v2815
        %v2974 = vpack.c.bf16 %v2818, %v2817
        %v2975 = vpack.c.bf16 %v2820, %v2819
        %v2976 = vpack.c.bf16 %v2822, %v2821
        %v2977 = vpack.c.bf16 %v2824, %v2823
        %v2978 = vpack.c.bf16 %v2826, %v2825
        %v2979 = vpack.c.bf16 %v2828, %v2827
        %v2980 = vpack.c.bf16 %v2830, %v2829
        %v2981 = vpack.c.bf16 %v2832, %v2831
        %v2982 = vpack.c.bf16 %v2834, %v2833
        %v2983 = vpack.c.bf16 %v2836, %v2835
        %v2984 = vpack.c.bf16 %v2838, %v2837
        %v2985 = vpack.c.bf16 %v2840, %v2839
        %v2986 = vpack.c.bf16 %v2842, %v2841
        %v2987 = vpack.c.bf16 %v2844, %v2843
        %v2988 = vpack.c.bf16 %v2846, %v2845
        %v2989 = vpack.c.bf16 %v2848, %v2847
        %v2990 = vpack.c.bf16 %v2850, %v2849
        %v2991 = vpack.c.bf16 %v2852, %v2851
        %v2992 = vpack.c.bf16 %v2854, %v2853
        %v2993 = vpack.c.bf16 %v2856, %v2855
        %v2994 = vpack.c.bf16 %v2858, %v2857
        %v2995 = vpack.c.bf16 %v2860, %v2859
        %v2996 = vpack.c.bf16 %v2862, %v2861
        %v2997 = vpack.c.bf16 %v2864, %v2863
        %v2998 = vpack.c.bf16 %v2866, %v2865
        %v2999 = vpack.c.bf16 %v2868, %v2867
        %v3000 = vpack.c.bf16 %v2870, %v2869
        %v3001 = vpack.c.bf16 %v2872, %v2871
        %v3002 = vpack.c.bf16 %v2874, %v2873
        %v3131 = vunpack.c.l.b16 %v2875
        %v3132 = vunpack.c.h.b16 %v2875
        %v3133 = vunpack.c.l.b16 %v2876
        %v3134 = vunpack.c.h.b16 %v2876
        %v3135 = vunpack.c.l.b16 %v2877
        %v3136 = vunpack.c.h.b16 %v2877
        %v3137 = vunpack.c.l.b16 %v2878
        %v3138 = vunpack.c.h.b16 %v2878
        %v3139 = vunpack.c.l.b16 %v2879
        %v3140 = vunpack.c.h.b16 %v2879
        %v3141 = vunpack.c.l.b16 %v2880
        %v3142 = vunpack.c.h.b16 %v2880
        %v3143 = vunpack.c.l.b16 %v2881
        %v3144 = vunpack.c.h.b16 %v2881
        %v3145 = vunpack.c.l.b16 %v2882
        %v3146 = vunpack.c.h.b16 %v2882
        %v3147 = vunpack.c.l.b16 %v2883
        %v3148 = vunpack.c.h.b16 %v2883
        %v3149 = vunpack.c.l.b16 %v2884
        %v3150 = vunpack.c.h.b16 %v2884
        %v3151 = vunpack.c.l.b16 %v2885
        %v3152 = vunpack.c.h.b16 %v2885
        %v3153 = vunpack.c.l.b16 %v2886
        %v3154 = vunpack.c.h.b16 %v2886
        %v3155 = vunpack.c.l.b16 %v2887
        %v3156 = vunpack.c.h.b16 %v2887
        %v3157 = vunpack.c.l.b16 %v2888
        %v3158 = vunpack.c.h.b16 %v2888
        %v3159 = vunpack.c.l.b16 %v2889
        %v3160 = vunpack.c.h.b16 %v2889
        %v3161 = vunpack.c.l.b16 %v2890
        %v3162 = vunpack.c.h.b16 %v2890
        %v3163 = vunpack.c.l.b16 %v2891
        %v3164 = vunpack.c.h.b16 %v2891
        %v3165 = vunpack.c.l.b16 %v2892
        %v3166 = vunpack.c.h.b16 %v2892
        %v3167 = vunpack.c.l.b16 %v2893
        %v3168 = vunpack.c.h.b16 %v2893
        %v3169 = vunpack.c.l.b16 %v2894
        %v3170 = vunpack.c.h.b16 %v2894
        %v3171 = vunpack.c.l.b16 %v2895
        %v3172 = vunpack.c.h.b16 %v2895
        %v3173 = vunpack.c.l.b16 %v2896
        %v3174 = vunpack.c.h.b16 %v2896
        %v3175 = vunpack.c.l.b16 %v2897
        %v3176 = vunpack.c.h.b16 %v2897
        %v3177 = vunpack.c.l.b16 %v2898
        %v3178 = vunpack.c.h.b16 %v2898
        %v3179 = vunpack.c.l.b16 %v2899
        %v3180 = vunpack.c.h.b16 %v2899
        %v3181 = vunpack.c.l.b16 %v2900
        %v3182 = vunpack.c.h.b16 %v2900
        %v3183 = vunpack.c.l.b16 %v2901
        %v3184 = vunpack.c.h.b16 %v2901
        %v3185 = vunpack.c.l.b16 %v2902
        %v3186 = vunpack.c.h.b16 %v2902
        %v3187 = vunpack.c.l.b16 %v2903
        %v3188 = vunpack.c.h.b16 %v2903
        %v3189 = vunpack.c.l.b16 %v2904
        %v3190 = vunpack.c.h.b16 %v2904
        %v3191 = vunpack.c.l.b16 %v2905
        %v3192 = vunpack.c.h.b16 %v2905
        %v3193 = vunpack.c.l.b16 %v2906
        %v3194 = vunpack.c.h.b16 %v2906
        %v3195 = vunpack.c.l.b16 %v2907
        %v3196 = vunpack.c.h.b16 %v2907
        %v3197 = vunpack.c.l.b16 %v2908
        %v3198 = vunpack.c.h.b16 %v2908
        %v3199 = vunpack.c.l.b16 %v2909
        %v3200 = vunpack.c.h.b16 %v2909
        %v3201 = vunpack.c.l.b16 %v2910
        %v3202 = vunpack.c.h.b16 %v2910
        %v3203 = vunpack.c.l.b16 %v2911
        %v3204 = vunpack.c.h.b16 %v2911
        %v3205 = vunpack.c.l.b16 %v2912
        %v3206 = vunpack.c.h.b16 %v2912
        %v3207 = vunpack.c.l.b16 %v2913
        %v3208 = vunpack.c.h.b16 %v2913
        %v3209 = vunpack.c.l.b16 %v2914
        %v3210 = vunpack.c.h.b16 %v2914
        %v3211 = vunpack.c.l.b16 %v2915
        %v3212 = vunpack.c.h.b16 %v2915
        %v3213 = vunpack.c.l.b16 %v2916
        %v3214 = vunpack.c.h.b16 %v2916
        %v3215 = vunpack.c.l.b16 %v2917
        %v3216 = vunpack.c.h.b16 %v2917
        %v3217 = vunpack.c.l.b16 %v2918
        %v3218 = vunpack.c.h.b16 %v2918
        %v3219 = vunpack.c.l.b16 %v2919
        %v3220 = vunpack.c.h.b16 %v2919
        %v3221 = vunpack.c.l.b16 %v2920
        %v3222 = vunpack.c.h.b16 %v2920
        %v3223 = vunpack.c.l.b16 %v2921
        %v3224 = vunpack.c.h.b16 %v2921
        %v3225 = vunpack.c.l.b16 %v2922
        %v3226 = vunpack.c.h.b16 %v2922
        %v3227 = vunpack.c.l.b16 %v2923
        %v3228 = vunpack.c.h.b16 %v2923
        %v3229 = vunpack.c.l.b16 %v2924
        %v3230 = vunpack.c.h.b16 %v2924
        %v3231 = vunpack.c.l.b16 %v2925
        %v3232 = vunpack.c.h.b16 %v2925
        %v3233 = vunpack.c.l.b16 %v2926
        %v3234 = vunpack.c.h.b16 %v2926
        %v3235 = vunpack.c.l.b16 %v2927
        %v3236 = vunpack.c.h.b16 %v2927
        %v3237 = vunpack.c.l.b16 %v2928
        %v3238 = vunpack.c.h.b16 %v2928
        %v3239 = vunpack.c.l.b16 %v2929
        %v3240 = vunpack.c.h.b16 %v2929
        %v3241 = vunpack.c.l.b16 %v2930
        %v3242 = vunpack.c.h.b16 %v2930
        %v3243 = vunpack.c.l.b16 %v2931
        %v3244 = vunpack.c.h.b16 %v2931
        %v3245 = vunpack.c.l.b16 %v2932
        %v3246 = vunpack.c.h.b16 %v2932
        %v3247 = vunpack.c.l.b16 %v2933
        %v3248 = vunpack.c.h.b16 %v2933
        %v3249 = vunpack.c.l.b16 %v2934
        %v3250 = vunpack.c.h.b16 %v2934
        %v3251 = vunpack.c.l.b16 %v2935
        %v3252 = vunpack.c.h.b16 %v2935
        %v3253 = vunpack.c.l.b16 %v2936
        %v3254 = vunpack.c.h.b16 %v2936
        %v3255 = vunpack.c.l.b16 %v2937
        %v3256 = vunpack.c.h.b16 %v2937
        %v3257 = vunpack.c.l.b16 %v2938
        %v3258 = vunpack.c.h.b16 %v2938
        %v3259 = vunpack.c.l.b16 %v2939
        %v3260 = vunpack.c.h.b16 %v2939
        %v3261 = vunpack.c.l.b16 %v2940
        %v3262 = vunpack.c.h.b16 %v2940
        %v3263 = vunpack.c.l.b16 %v2941
        %v3264 = vunpack.c.h.b16 %v2941
        %v3265 = vunpack.c.l.b16 %v2942
        %v3266 = vunpack.c.h.b16 %v2942
        %v3267 = vunpack.c.l.b16 %v2943
        %v3268 = vunpack.c.h.b16 %v2943
        %v3269 = vunpack.c.l.b16 %v2944
        %v3270 = vunpack.c.h.b16 %v2944
        %v3271 = vunpack.c.l.b16 %v2945
        %v3272 = vunpack.c.h.b16 %v2945
        %v3273 = vunpack.c.l.b16 %v2946
        %v3274 = vunpack.c.h.b16 %v2946
        %v3275 = vunpack.c.l.b16 %v2947
        %v3276 = vunpack.c.h.b16 %v2947
        %v3277 = vunpack.c.l.b16 %v2948
        %v3278 = vunpack.c.h.b16 %v2948
        %v3279 = vunpack.c.l.b16 %v2949
        %v3280 = vunpack.c.h.b16 %v2949
        %v3281 = vunpack.c.l.b16 %v2950
        %v3282 = vunpack.c.h.b16 %v2950
        %v3283 = vunpack.c.l.b16 %v2951
        %v3284 = vunpack.c.h.b16 %v2951
        %v3285 = vunpack.c.l.b16 %v2952
        %v3286 = vunpack.c.h.b16 %v2952
        %v3287 = vunpack.c.l.b16 %v2953
        %v3288 = vunpack.c.h.b16 %v2953
        %v3289 = vunpack.c.l.b16 %v2954
        %v3290 = vunpack.c.h.b16 %v2954
        %v3291 = vunpack.c.l.b16 %v2955
        %v3292 = vunpack.c.h.b16 %v2955
        %v3293 = vunpack.c.l.b16 %v2956
        %v3294 = vunpack.c.h.b16 %v2956
        %v3295 = vunpack.c.l.b16 %v2957
        %v3296 = vunpack.c.h.b16 %v2957
        %v3297 = vunpack.c.l.b16 %v2958
        %v3298 = vunpack.c.h.b16 %v2958
        %v3299 = vunpack.c.l.b16 %v2959
        %v3300 = vunpack.c.h.b16 %v2959
        %v3301 = vunpack.c.l.b16 %v2960
        %v3302 = vunpack.c.h.b16 %v2960
        %v3303 = vunpack.c.l.b16 %v2961
        %v3304 = vunpack.c.h.b16 %v2961
        %v3305 = vunpack.c.l.b16 %v2962
        %v3306 = vunpack.c.h.b16 %v2962
        %v3307 = vunpack.c.l.b16 %v2963
        %v3308 = vunpack.c.h.b16 %v2963
        %v3309 = vunpack.c.l.b16 %v2964
        %v3310 = vunpack.c.h.b16 %v2964
        %v3311 = vunpack.c.l.b16 %v2965
        %v3312 = vunpack.c.h.b16 %v2965
        %v3313 = vunpack.c.l.b16 %v2966
        %v3314 = vunpack.c.h.b16 %v2966
        %v3315 = vunpack.c.l.b16 %v2967
        %v3316 = vunpack.c.h.b16 %v2967
        %v3317 = vunpack.c.l.b16 %v2968
        %v3318 = vunpack.c.h.b16 %v2968
        %v3319 = vunpack.c.l.b16 %v2969
        %v3320 = vunpack.c.h.b16 %v2969
        %v3321 = vunpack.c.l.b16 %v2970
        %v3322 = vunpack.c.h.b16 %v2970
        %v3323 = vunpack.c.l.b16 %v2971
        %v3324 = vunpack.c.h.b16 %v2971
        %v3325 = vunpack.c.l.b16 %v2972
        %v3326 = vunpack.c.h.b16 %v2972
        %v3327 = vunpack.c.l.b16 %v2973
        %v3328 = vunpack.c.h.b16 %v2973
        %v3329 = vunpack.c.l.b16 %v2974
        %v3330 = vunpack.c.h.b16 %v2974
        %v3331 = vunpack.c.l.b16 %v2975
        %v3332 = vunpack.c.h.b16 %v2975
        %v3333 = vunpack.c.l.b16 %v2976
        %v3334 = vunpack.c.h.b16 %v2976
        %v3335 = vunpack.c.l.b16 %v2977
        %v3336 = vunpack.c.h.b16 %v2977
        %v3337 = vunpack.c.l.b16 %v2978
        %v3338 = vunpack.c.h.b16 %v2978
        %v3339 = vunpack.c.l.b16 %v2979
        %v3340 = vunpack.c.h.b16 %v2979
        %v3341 = vunpack.c.l.b16 %v2980
        %v3342 = vunpack.c.h.b16 %v2980
        %v3343 = vunpack.c.l.b16 %v2981
        %v3344 = vunpack.c.h.b16 %v2981
        %v3345 = vunpack.c.l.b16 %v2982
        %v3346 = vunpack.c.h.b16 %v2982
        %v3347 = vunpack.c.l.b16 %v2983
        %v3348 = vunpack.c.h.b16 %v2983
        %v3349 = vunpack.c.l.b16 %v2984
        %v3350 = vunpack.c.h.b16 %v2984
        %v3351 = vunpack.c.l.b16 %v2985
        %v3352 = vunpack.c.h.b16 %v2985
        %v3353 = vunpack.c.l.b16 %v2986
        %v3354 = vunpack.c.h.b16 %v2986
        %v3355 = vunpack.c.l.b16 %v2987
        %v3356 = vunpack.c.h.b16 %v2987
        %v3357 = vunpack.c.l.b16 %v2988
        %v3358 = vunpack.c.h.b16 %v2988
        %v3359 = vunpack.c.l.b16 %v2989
        %v3360 = vunpack.c.h.b16 %v2989
        %v3361 = vunpack.c.l.b16 %v2990
        %v3362 = vunpack.c.h.b16 %v2990
        %v3363 = vunpack.c.l.b16 %v2991
        %v3364 = vunpack.c.h.b16 %v2991
        %v3365 = vunpack.c.l.b16 %v2992
        %v3366 = vunpack.c.h.b16 %v2992
        %v3367 = vunpack.c.l.b16 %v2993
        %v3368 = vunpack.c.h.b16 %v2993
        %v3369 = vunpack.c.l.b16 %v2994
        %v3370 = vunpack.c.h.b16 %v2994
        %v3371 = vunpack.c.l.b16 %v2995
        %v3372 = vunpack.c.h.b16 %v2995
        %v3373 = vunpack.c.l.b16 %v2996
        %v3374 = vunpack.c.h.b16 %v2996
        %v3375 = vunpack.c.l.b16 %v2997
        %v3376 = vunpack.c.h.b16 %v2997
        %v3377 = vunpack.c.l.b16 %v2998
        %v3378 = vunpack.c.h.b16 %v2998
        %v3379 = vunpack.c.l.b16 %v2999
        %v3380 = vunpack.c.h.b16 %v2999
        %v3381 = vunpack.c.l.b16 %v3000
        %v3382 = vunpack.c.h.b16 %v3000
        %v3383 = vunpack.c.l.b16 %v3001
        %v3384 = vunpack.c.h.b16 %v3001
        %v3385 = vunpack.c.l.b16 %v3002
        %v3386 = vunpack.c.h.b16 %v3002
        %v3387 = vpack.c.b16 %v3131, %v3131
        %v3388 = vpack.c.b16 %v3132, %v3132
        %v3389 = vpack.c.b16 %v3133, %v3133
        %v3390 = vpack.c.b16 %v3134, %v3134
        %v3391 = vpack.c.b16 %v3135, %v3135
        %v3392 = vpack.c.b16 %v3136, %v3136
        %v3393 = vpack.c.b16 %v3137, %v3137
        %v3394 = vpack.c.b16 %v3138, %v3138
        %v3395 = vpack.c.b16 %v3139, %v3139
        %v3396 = vpack.c.b16 %v3140, %v3140
        %v3397 = vpack.c.b16 %v3141, %v3141
        %v3398 = vpack.c.b16 %v3142, %v3142
        %v3399 = vpack.c.b16 %v3143, %v3143
        %v3400 = vpack.c.b16 %v3144, %v3144
        %v3401 = vpack.c.b16 %v3145, %v3145
        %v3402 = vpack.c.b16 %v3146, %v3146
        %v3403 = vpack.c.b16 %v3147, %v3147
        %v3404 = vpack.c.b16 %v3148, %v3148
        %v3405 = vpack.c.b16 %v3149, %v3149
        %v3406 = vpack.c.b16 %v3150, %v3150
        %v3407 = vpack.c.b16 %v3151, %v3151
        %v3408 = vpack.c.b16 %v3152, %v3152
        %v3409 = vpack.c.b16 %v3153, %v3153
        %v3410 = vpack.c.b16 %v3154, %v3154
        %v3411 = vpack.c.b16 %v3155, %v3155
        %v3412 = vpack.c.b16 %v3156, %v3156
        %v3413 = vpack.c.b16 %v3157, %v3157
        %v3414 = vpack.c.b16 %v3158, %v3158
        %v3415 = vpack.c.b16 %v3159, %v3159
        %v3416 = vpack.c.b16 %v3160, %v3160
        %v3417 = vpack.c.b16 %v3161, %v3161
        %v3418 = vpack.c.b16 %v3162, %v3162
        %v3419 = vpack.c.b16 %v3163, %v3163
        %v3420 = vpack.c.b16 %v3164, %v3164
        %v3421 = vpack.c.b16 %v3165, %v3165
        %v3422 = vpack.c.b16 %v3166, %v3166
        %v3423 = vpack.c.b16 %v3167, %v3167
        %v3424 = vpack.c.b16 %v3168, %v3168
        %v3425 = vpack.c.b16 %v3169, %v3169
        %v3426 = vpack.c.b16 %v3170, %v3170
        %v3427 = vpack.c.b16 %v3171, %v3171
        %v3428 = vpack.c.b16 %v3172, %v3172
        %v3429 = vpack.c.b16 %v3173, %v3173
        %v3430 = vpack.c.b16 %v3174, %v3174
        %v3431 = vpack.c.b16 %v3175, %v3175
        %v3432 = vpack.c.b16 %v3176, %v3176
        %v3433 = vpack.c.b16 %v3177, %v3177
        %v3434 = vpack.c.b16 %v3178, %v3178
        %v3435 = vpack.c.b16 %v3179, %v3179
        %v3436 = vpack.c.b16 %v3180, %v3180
        %v3437 = vpack.c.b16 %v3181, %v3181
        %v3438 = vpack.c.b16 %v3182, %v3182
        %v3439 = vpack.c.b16 %v3183, %v3183
        %v3440 = vpack.c.b16 %v3184, %v3184
        %v3441 = vpack.c.b16 %v3185, %v3185
        %v3442 = vpack.c.b16 %v3186, %v3186
        %v3443 = vpack.c.b16 %v3187, %v3187
        %v3444 = vpack.c.b16 %v3188, %v3188
        %v3445 = vpack.c.b16 %v3189, %v3189
        %v3446 = vpack.c.b16 %v3190, %v3190
        %v3447 = vpack.c.b16 %v3191, %v3191
        %v3448 = vpack.c.b16 %v3192, %v3192
        %v3449 = vpack.c.b16 %v3193, %v3193
        %v3450 = vpack.c.b16 %v3194, %v3194
        %v3451 = vpack.c.b16 %v3195, %v3195
        %v3452 = vpack.c.b16 %v3196, %v3196
        %v3453 = vpack.c.b16 %v3197, %v3197
        %v3454 = vpack.c.b16 %v3198, %v3198
        %v3455 = vpack.c.b16 %v3199, %v3199
        %v3456 = vpack.c.b16 %v3200, %v3200
        %v3457 = vpack.c.b16 %v3201, %v3201
        %v3458 = vpack.c.b16 %v3202, %v3202
        %v3459 = vpack.c.b16 %v3203, %v3203
        %v3460 = vpack.c.b16 %v3204, %v3204
        %v3461 = vpack.c.b16 %v3205, %v3205
        %v3462 = vpack.c.b16 %v3206, %v3206
        %v3463 = vpack.c.b16 %v3207, %v3207
        %v3464 = vpack.c.b16 %v3208, %v3208
        %v3465 = vpack.c.b16 %v3209, %v3209
        %v3466 = vpack.c.b16 %v3210, %v3210
        %v3467 = vpack.c.b16 %v3211, %v3211
        %v3468 = vpack.c.b16 %v3212, %v3212
        %v3469 = vpack.c.b16 %v3213, %v3213
        %v3470 = vpack.c.b16 %v3214, %v3214
        %v3471 = vpack.c.b16 %v3215, %v3215
        %v3472 = vpack.c.b16 %v3216, %v3216
        %v3473 = vpack.c.b16 %v3217, %v3217
        %v3474 = vpack.c.b16 %v3218, %v3218
        %v3475 = vpack.c.b16 %v3219, %v3219
        %v3476 = vpack.c.b16 %v3220, %v3220
        %v3477 = vpack.c.b16 %v3221, %v3221
        %v3478 = vpack.c.b16 %v3222, %v3222
        %v3479 = vpack.c.b16 %v3223, %v3223
        %v3480 = vpack.c.b16 %v3224, %v3224
        %v3481 = vpack.c.b16 %v3225, %v3225
        %v3482 = vpack.c.b16 %v3226, %v3226
        %v3483 = vpack.c.b16 %v3227, %v3227
        %v3484 = vpack.c.b16 %v3228, %v3228
        %v3485 = vpack.c.b16 %v3229, %v3229
        %v3486 = vpack.c.b16 %v3230, %v3230
        %v3487 = vpack.c.b16 %v3231, %v3231
        %v3488 = vpack.c.b16 %v3232, %v3232
        %v3489 = vpack.c.b16 %v3233, %v3233
        %v3490 = vpack.c.b16 %v3234, %v3234
        %v3491 = vpack.c.b16 %v3235, %v3235
        %v3492 = vpack.c.b16 %v3236, %v3236
        %v3493 = vpack.c.b16 %v3237, %v3237
        %v3494 = vpack.c.b16 %v3238, %v3238
        %v3495 = vpack.c.b16 %v3239, %v3239
        %v3496 = vpack.c.b16 %v3240, %v3240
        %v3497 = vpack.c.b16 %v3241, %v3241
        %v3498 = vpack.c.b16 %v3242, %v3242
        %v3499 = vpack.c.b16 %v3243, %v3243
        %v3500 = vpack.c.b16 %v3244, %v3244
        %v3501 = vpack.c.b16 %v3245, %v3245
        %v3502 = vpack.c.b16 %v3246, %v3246
        %v3503 = vpack.c.b16 %v3247, %v3247
        %v3504 = vpack.c.b16 %v3248, %v3248
        %v3505 = vpack.c.b16 %v3249, %v3249
        %v3506 = vpack.c.b16 %v3250, %v3250
        %v3507 = vpack.c.b16 %v3251, %v3251
        %v3508 = vpack.c.b16 %v3252, %v3252
        %v3509 = vpack.c.b16 %v3253, %v3253
        %v3510 = vpack.c.b16 %v3254, %v3254
        %v3511 = vpack.c.b16 %v3255, %v3255
        %v3512 = vpack.c.b16 %v3256, %v3256
        %v3513 = vpack.c.b16 %v3257, %v3257
        %v3514 = vpack.c.b16 %v3258, %v3258
        %v3515 = vpack.c.b16 %v3259, %v3259
        %v3516 = vpack.c.b16 %v3260, %v3260
        %v3517 = vpack.c.b16 %v3261, %v3261
        %v3518 = vpack.c.b16 %v3262, %v3262
        %v3519 = vpack.c.b16 %v3263, %v3263
        %v3520 = vpack.c.b16 %v3264, %v3264
        %v3521 = vpack.c.b16 %v3265, %v3265
        %v3522 = vpack.c.b16 %v3266, %v3266
        %v3523 = vpack.c.b16 %v3267, %v3267
        %v3524 = vpack.c.b16 %v3268, %v3268
        %v3525 = vpack.c.b16 %v3269, %v3269
        %v3526 = vpack.c.b16 %v3270, %v3270
        %v3527 = vpack.c.b16 %v3271, %v3271
        %v3528 = vpack.c.b16 %v3272, %v3272
        %v3529 = vpack.c.b16 %v3273, %v3273
        %v3530 = vpack.c.b16 %v3274, %v3274
        %v3531 = vpack.c.b16 %v3275, %v3275
        %v3532 = vpack.c.b16 %v3276, %v3276
        %v3533 = vpack.c.b16 %v3277, %v3277
        %v3534 = vpack.c.b16 %v3278, %v3278
        %v3535 = vpack.c.b16 %v3279, %v3279
        %v3536 = vpack.c.b16 %v3280, %v3280
        %v3537 = vpack.c.b16 %v3281, %v3281
        %v3538 = vpack.c.b16 %v3282, %v3282
        %v3539 = vpack.c.b16 %v3283, %v3283
        %v3540 = vpack.c.b16 %v3284, %v3284
        %v3541 = vpack.c.b16 %v3285, %v3285
        %v3542 = vpack.c.b16 %v3286, %v3286
        %v3543 = vpack.c.b16 %v3287, %v3287
        %v3544 = vpack.c.b16 %v3288, %v3288
        %v3545 = vpack.c.b16 %v3289, %v3289
        %v3546 = vpack.c.b16 %v3290, %v3290
        %v3547 = vpack.c.b16 %v3291, %v3291
        %v3548 = vpack.c.b16 %v3292, %v3292
        %v3549 = vpack.c.b16 %v3293, %v3293
        %v3550 = vpack.c.b16 %v3294, %v3294
        %v3551 = vpack.c.b16 %v3295, %v3295
        %v3552 = vpack.c.b16 %v3296, %v3296
        %v3553 = vpack.c.b16 %v3297, %v3297
        %v3554 = vpack.c.b16 %v3298, %v3298
        %v3555 = vpack.c.b16 %v3299, %v3299
        %v3556 = vpack.c.b16 %v3300, %v3300
        %v3557 = vpack.c.b16 %v3301, %v3301
        %v3558 = vpack.c.b16 %v3302, %v3302
        %v3559 = vpack.c.b16 %v3303, %v3303
        %v3560 = vpack.c.b16 %v3304, %v3304
        %v3561 = vpack.c.b16 %v3305, %v3305
        %v3562 = vpack.c.b16 %v3306, %v3306
        %v3563 = vpack.c.b16 %v3307, %v3307
        %v3564 = vpack.c.b16 %v3308, %v3308
        %v3565 = vpack.c.b16 %v3309, %v3309
        %v3566 = vpack.c.b16 %v3310, %v3310
        %v3567 = vpack.c.b16 %v3311, %v3311
        %v3568 = vpack.c.b16 %v3312, %v3312
        %v3569 = vpack.c.b16 %v3313, %v3313
        %v3570 = vpack.c.b16 %v3314, %v3314
        %v3571 = vpack.c.b16 %v3315, %v3315
        %v3572 = vpack.c.b16 %v3316, %v3316
        %v3573 = vpack.c.b16 %v3317, %v3317
        %v3574 = vpack.c.b16 %v3318, %v3318
        %v3575 = vpack.c.b16 %v3319, %v3319
        %v3576 = vpack.c.b16 %v3320, %v3320
        %v3577 = vpack.c.b16 %v3321, %v3321
        %v3578 = vpack.c.b16 %v3322, %v3322
        %v3579 = vpack.c.b16 %v3323, %v3323
        %v3580 = vpack.c.b16 %v3324, %v3324
        %v3581 = vpack.c.b16 %v3325, %v3325
        %v3582 = vpack.c.b16 %v3326, %v3326
        %v3583 = vpack.c.b16 %v3327, %v3327
        %v3584 = vpack.c.b16 %v3328, %v3328
        %v3585 = vpack.c.b16 %v3329, %v3329
        %v3586 = vpack.c.b16 %v3330, %v3330
        %v3587 = vpack.c.b16 %v3331, %v3331
        %v3588 = vpack.c.b16 %v3332, %v3332
        %v3589 = vpack.c.b16 %v3333, %v3333
        %v3590 = vpack.c.b16 %v3334, %v3334
        %v3591 = vpack.c.b16 %v3335, %v3335
        %v3592 = vpack.c.b16 %v3336, %v3336
        %v3593 = vpack.c.b16 %v3337, %v3337
        %v3594 = vpack.c.b16 %v3338, %v3338
        %v3595 = vpack.c.b16 %v3339, %v3339
        %v3596 = vpack.c.b16 %v3340, %v3340
        %v3597 = vpack.c.b16 %v3341, %v3341
        %v3598 = vpack.c.b16 %v3342, %v3342
        %v3599 = vpack.c.b16 %v3343, %v3343
        %v3600 = vpack.c.b16 %v3344, %v3344
        %v3601 = vpack.c.b16 %v3345, %v3345
        %v3602 = vpack.c.b16 %v3346, %v3346
        %v3603 = vpack.c.b16 %v3347, %v3347
        %v3604 = vpack.c.b16 %v3348, %v3348
        %v3605 = vpack.c.b16 %v3349, %v3349
        %v3606 = vpack.c.b16 %v3350, %v3350
        %v3607 = vpack.c.b16 %v3351, %v3351
        %v3608 = vpack.c.b16 %v3352, %v3352
        %v3609 = vpack.c.b16 %v3353, %v3353
        %v3610 = vpack.c.b16 %v3354, %v3354
        %v3611 = vpack.c.b16 %v3355, %v3355
        %v3612 = vpack.c.b16 %v3356, %v3356
        %v3613 = vpack.c.b16 %v3357, %v3357
        %v3614 = vpack.c.b16 %v3358, %v3358
        %v3615 = vpack.c.b16 %v3359, %v3359
        %v3616 = vpack.c.b16 %v3360, %v3360
        %v3617 = vpack.c.b16 %v3361, %v3361
        %v3618 = vpack.c.b16 %v3362, %v3362
        %v3619 = vpack.c.b16 %v3363, %v3363
        %v3620 = vpack.c.b16 %v3364, %v3364
        %v3621 = vpack.c.b16 %v3365, %v3365
        %v3622 = vpack.c.b16 %v3366, %v3366
        %v3623 = vpack.c.b16 %v3367, %v3367
        %v3624 = vpack.c.b16 %v3368, %v3368
        %v3625 = vpack.c.b16 %v3369, %v3369
        %v3626 = vpack.c.b16 %v3370, %v3370
        %v3627 = vpack.c.b16 %v3371, %v3371
        %v3628 = vpack.c.b16 %v3372, %v3372
        %v3629 = vpack.c.b16 %v3373, %v3373
        %v3630 = vpack.c.b16 %v3374, %v3374
        %v3631 = vpack.c.b16 %v3375, %v3375
        %v3632 = vpack.c.b16 %v3376, %v3376
        %v3633 = vpack.c.b16 %v3377, %v3377
        %v3634 = vpack.c.b16 %v3378, %v3378
        %v3635 = vpack.c.b16 %v3379, %v3379
        %v3636 = vpack.c.b16 %v3380, %v3380
        %v3637 = vpack.c.b16 %v3381, %v3381
        %v3638 = vpack.c.b16 %v3382, %v3382
        %v3639 = vpack.c.b16 %v3383, %v3383
        %v3640 = vpack.c.b16 %v3384, %v3384
        %v3641 = vpack.c.b16 %v3385, %v3385
        %v3642 = vpack.c.b16 %v3386, %v3386
        %3899 = vst [vmem:[%s228] sm:$0xf] %v3387
        %3900 = vst [vmem:[%s228 + $0x4] sm:$0xf] %v3388
        %3901 = vst [vmem:[%s228 + $0x8] sm:$0xf] %v3389
        %3902 = vst [vmem:[%s228 + $0xc] sm:$0xf] %v3390
        %3903 = vst [vmem:[%s228 + $0x10] sm:$0xf] %v3391
        %3904 = vst [vmem:[%s228 + $0x14] sm:$0xf] %v3392
        %3905 = vst [vmem:[%s228 + $0x18] sm:$0xf] %v3393
        %3906 = vst [vmem:[%s228 + $0x1c] sm:$0xf] %v3394
        %3907 = vst [vmem:[%s228 + $0x20] sm:$0xf] %v3395
        %3908 = vst [vmem:[%s228 + $0x24] sm:$0xf] %v3396
        %3909 = vst [vmem:[%s228 + $0x28] sm:$0xf] %v3397
        %3910 = vst [vmem:[%s228 + $0x2c] sm:$0xf] %v3398
        %3911 = vst [vmem:[%s228 + $0x30] sm:$0xf] %v3399
        %3912 = vst [vmem:[%s228 + $0x34] sm:$0xf] %v3400
        %3913 = vst [vmem:[%s228 + $0x38] sm:$0xf] %v3401
        %3914 = vst [vmem:[%s228 + $0x3c] sm:$0xf] %v3402
        %3915 = vst [vmem:[%s228 + $0x40] sm:$0xf] %v3403
        %3916 = vst [vmem:[%s228 + $0x44] sm:$0xf] %v3404
        %3917 = vst [vmem:[%s228 + $0x48] sm:$0xf] %v3405
        %3918 = vst [vmem:[%s228 + $0x4c] sm:$0xf] %v3406
        %3919 = vst [vmem:[%s228 + $0x50] sm:$0xf] %v3407
        %3920 = vst [vmem:[%s228 + $0x54] sm:$0xf] %v3408
        %3921 = vst [vmem:[%s228 + $0x58] sm:$0xf] %v3409
        %3922 = vst [vmem:[%s228 + $0x5c] sm:$0xf] %v3410
        %3923 = vst [vmem:[%s228 + $0x60] sm:$0xf] %v3411
        %3924 = vst [vmem:[%s228 + $0x64] sm:$0xf] %v3412
        %3925 = vst [vmem:[%s228 + $0x68] sm:$0xf] %v3413
        %3926 = vst [vmem:[%s228 + $0x6c] sm:$0xf] %v3414
        %3927 = vst [vmem:[%s228 + $0x70] sm:$0xf] %v3415
        %3928 = vst [vmem:[%s228 + $0x74] sm:$0xf] %v3416
        %3929 = vst [vmem:[%s228 + $0x78] sm:$0xf] %v3417
        %3930 = vst [vmem:[%s228 + $0x7c] sm:$0xf] %v3418
        %3931 = vst [vmem:[%s228 + $0x80] sm:$0xf] %v3419
        %3932 = vst [vmem:[%s228 + $0x84] sm:$0xf] %v3420
        %3933 = vst [vmem:[%s228 + $0x88] sm:$0xf] %v3421
        %3934 = vst [vmem:[%s228 + $0x8c] sm:$0xf] %v3422
        %3935 = vst [vmem:[%s228 + $0x90] sm:$0xf] %v3423
        %3936 = vst [vmem:[%s228 + $0x94] sm:$0xf] %v3424
        %3937 = vst [vmem:[%s228 + $0x98] sm:$0xf] %v3425
        %3938 = vst [vmem:[%s228 + $0x9c] sm:$0xf] %v3426
        %3939 = vst [vmem:[%s228 + $0xa0] sm:$0xf] %v3427
        %3940 = vst [vmem:[%s228 + $0xa4] sm:$0xf] %v3428
        %3941 = vst [vmem:[%s228 + $0xa8] sm:$0xf] %v3429
        %3942 = vst [vmem:[%s228 + $0xac] sm:$0xf] %v3430
        %3943 = vst [vmem:[%s228 + $0xb0] sm:$0xf] %v3431
        %3944 = vst [vmem:[%s228 + $0xb4] sm:$0xf] %v3432
        %3945 = vst [vmem:[%s228 + $0xb8] sm:$0xf] %v3433
        %3946 = vst [vmem:[%s228 + $0xbc] sm:$0xf] %v3434
        %3947 = vst [vmem:[%s228 + $0xc0] sm:$0xf] %v3435
        %3948 = vst [vmem:[%s228 + $0xc4] sm:$0xf] %v3436
        %3949 = vst [vmem:[%s228 + $0xc8] sm:$0xf] %v3437
        %3950 = vst [vmem:[%s228 + $0xcc] sm:$0xf] %v3438
        %3951 = vst [vmem:[%s228 + $0xd0] sm:$0xf] %v3439
        %3952 = vst [vmem:[%s228 + $0xd4] sm:$0xf] %v3440
        %3953 = vst [vmem:[%s228 + $0xd8] sm:$0xf] %v3441
        %3954 = vst [vmem:[%s228 + $0xdc] sm:$0xf] %v3442
        %3955 = vst [vmem:[%s228 + $0xe0] sm:$0xf] %v3443
        %3956 = vst [vmem:[%s228 + $0xe4] sm:$0xf] %v3444
        %3957 = vst [vmem:[%s228 + $0xe8] sm:$0xf] %v3445
        %3958 = vst [vmem:[%s228 + $0xec] sm:$0xf] %v3446
        %3959 = vst [vmem:[%s228 + $0xf0] sm:$0xf] %v3447
        %3960 = vst [vmem:[%s228 + $0xf4] sm:$0xf] %v3448
        %3961 = vst [vmem:[%s228 + $0xf8] sm:$0xf] %v3449
        %3962 = vst [vmem:[%s228 + $0xfc] sm:$0xf] %v3450
        %3963 = vst [vmem:[%s228 + $0x100] sm:$0xf] %v3451
        %3964 = vst [vmem:[%s228 + $0x104] sm:$0xf] %v3452
        %3965 = vst [vmem:[%s228 + $0x108] sm:$0xf] %v3453
        %3966 = vst [vmem:[%s228 + $0x10c] sm:$0xf] %v3454
        %3967 = vst [vmem:[%s228 + $0x110] sm:$0xf] %v3455
        %3968 = vst [vmem:[%s228 + $0x114] sm:$0xf] %v3456
        %3969 = vst [vmem:[%s228 + $0x118] sm:$0xf] %v3457
        %3970 = vst [vmem:[%s228 + $0x11c] sm:$0xf] %v3458
        %3971 = vst [vmem:[%s228 + $0x120] sm:$0xf] %v3459
        %3972 = vst [vmem:[%s228 + $0x124] sm:$0xf] %v3460
        %3973 = vst [vmem:[%s228 + $0x128] sm:$0xf] %v3461
        %3974 = vst [vmem:[%s228 + $0x12c] sm:$0xf] %v3462
        %3975 = vst [vmem:[%s228 + $0x130] sm:$0xf] %v3463
        %3976 = vst [vmem:[%s228 + $0x134] sm:$0xf] %v3464
        %3977 = vst [vmem:[%s228 + $0x138] sm:$0xf] %v3465
        %3978 = vst [vmem:[%s228 + $0x13c] sm:$0xf] %v3466
        %3979 = vst [vmem:[%s228 + $0x140] sm:$0xf] %v3467
        %3980 = vst [vmem:[%s228 + $0x144] sm:$0xf] %v3468
        %3981 = vst [vmem:[%s228 + $0x148] sm:$0xf] %v3469
        %3982 = vst [vmem:[%s228 + $0x14c] sm:$0xf] %v3470
        %3983 = vst [vmem:[%s228 + $0x150] sm:$0xf] %v3471
        %3984 = vst [vmem:[%s228 + $0x154] sm:$0xf] %v3472
        %3985 = vst [vmem:[%s228 + $0x158] sm:$0xf] %v3473
        %3986 = vst [vmem:[%s228 + $0x15c] sm:$0xf] %v3474
        %3987 = vst [vmem:[%s228 + $0x160] sm:$0xf] %v3475
        %3988 = vst [vmem:[%s228 + $0x164] sm:$0xf] %v3476
        %3989 = vst [vmem:[%s228 + $0x168] sm:$0xf] %v3477
        %3990 = vst [vmem:[%s228 + $0x16c] sm:$0xf] %v3478
        %3991 = vst [vmem:[%s228 + $0x170] sm:$0xf] %v3479
        %3992 = vst [vmem:[%s228 + $0x174] sm:$0xf] %v3480
        %3993 = vst [vmem:[%s228 + $0x178] sm:$0xf] %v3481
        %3994 = vst [vmem:[%s228 + $0x17c] sm:$0xf] %v3482
        %3995 = vst [vmem:[%s228 + $0x180] sm:$0xf] %v3483
        %3996 = vst [vmem:[%s228 + $0x184] sm:$0xf] %v3484
        %3997 = vst [vmem:[%s228 + $0x188] sm:$0xf] %v3485
        %3998 = vst [vmem:[%s228 + $0x18c] sm:$0xf] %v3486
        %3999 = vst [vmem:[%s228 + $0x190] sm:$0xf] %v3487
        %4000 = vst [vmem:[%s228 + $0x194] sm:$0xf] %v3488
        %4001 = vst [vmem:[%s228 + $0x198] sm:$0xf] %v3489
        %4002 = vst [vmem:[%s228 + $0x19c] sm:$0xf] %v3490
        %4003 = vst [vmem:[%s228 + $0x1a0] sm:$0xf] %v3491
        %4004 = vst [vmem:[%s228 + $0x1a4] sm:$0xf] %v3492
        %4005 = vst [vmem:[%s228 + $0x1a8] sm:$0xf] %v3493
        %4006 = vst [vmem:[%s228 + $0x1ac] sm:$0xf] %v3494
        %4007 = vst [vmem:[%s228 + $0x1b0] sm:$0xf] %v3495
        %4008 = vst [vmem:[%s228 + $0x1b4] sm:$0xf] %v3496
        %4009 = vst [vmem:[%s228 + $0x1b8] sm:$0xf] %v3497
        %4010 = vst [vmem:[%s228 + $0x1bc] sm:$0xf] %v3498
        %4011 = vst [vmem:[%s228 + $0x1c0] sm:$0xf] %v3499
        %4012 = vst [vmem:[%s228 + $0x1c4] sm:$0xf] %v3500
        %4013 = vst [vmem:[%s228 + $0x1c8] sm:$0xf] %v3501
        %4014 = vst [vmem:[%s228 + $0x1cc] sm:$0xf] %v3502
        %4015 = vst [vmem:[%s228 + $0x1d0] sm:$0xf] %v3503
        %4016 = vst [vmem:[%s228 + $0x1d4] sm:$0xf] %v3504
        %4017 = vst [vmem:[%s228 + $0x1d8] sm:$0xf] %v3505
        %4018 = vst [vmem:[%s228 + $0x1dc] sm:$0xf] %v3506
        %4019 = vst [vmem:[%s228 + $0x1e0] sm:$0xf] %v3507
        %4020 = vst [vmem:[%s228 + $0x1e4] sm:$0xf] %v3508
        %4021 = vst [vmem:[%s228 + $0x1e8] sm:$0xf] %v3509
        %4022 = vst [vmem:[%s228 + $0x1ec] sm:$0xf] %v3510
        %4023 = vst [vmem:[%s228 + $0x1f0] sm:$0xf] %v3511
        %4024 = vst [vmem:[%s228 + $0x1f4] sm:$0xf] %v3512
        %4025 = vst [vmem:[%s228 + $0x1f8] sm:$0xf] %v3513
        %4026 = vst [vmem:[%s228 + $0x1fc] sm:$0xf] %v3514
        %4027 = vst [vmem:[%s228 + $0x200] sm:$0xf] %v3515
        %4028 = vst [vmem:[%s228 + $0x204] sm:$0xf] %v3516
        %4029 = vst [vmem:[%s228 + $0x208] sm:$0xf] %v3517
        %4030 = vst [vmem:[%s228 + $0x20c] sm:$0xf] %v3518
        %4031 = vst [vmem:[%s228 + $0x210] sm:$0xf] %v3519
        %4032 = vst [vmem:[%s228 + $0x214] sm:$0xf] %v3520
        %4033 = vst [vmem:[%s228 + $0x218] sm:$0xf] %v3521
        %4034 = vst [vmem:[%s228 + $0x21c] sm:$0xf] %v3522
        %4035 = vst [vmem:[%s228 + $0x220] sm:$0xf] %v3523
        %4036 = vst [vmem:[%s228 + $0x224] sm:$0xf] %v3524
        %4037 = vst [vmem:[%s228 + $0x228] sm:$0xf] %v3525
        %4038 = vst [vmem:[%s228 + $0x22c] sm:$0xf] %v3526
        %4039 = vst [vmem:[%s228 + $0x230] sm:$0xf] %v3527
        %4040 = vst [vmem:[%s228 + $0x234] sm:$0xf] %v3528
        %4041 = vst [vmem:[%s228 + $0x238] sm:$0xf] %v3529
        %4042 = vst [vmem:[%s228 + $0x23c] sm:$0xf] %v3530
        %4043 = vst [vmem:[%s228 + $0x240] sm:$0xf] %v3531
        %4044 = vst [vmem:[%s228 + $0x244] sm:$0xf] %v3532
        %4045 = vst [vmem:[%s228 + $0x248] sm:$0xf] %v3533
        %4046 = vst [vmem:[%s228 + $0x24c] sm:$0xf] %v3534
        %4047 = vst [vmem:[%s228 + $0x250] sm:$0xf] %v3535
        %4048 = vst [vmem:[%s228 + $0x254] sm:$0xf] %v3536
        %4049 = vst [vmem:[%s228 + $0x258] sm:$0xf] %v3537
        %4050 = vst [vmem:[%s228 + $0x25c] sm:$0xf] %v3538
        %4051 = vst [vmem:[%s228 + $0x260] sm:$0xf] %v3539
        %4052 = vst [vmem:[%s228 + $0x264] sm:$0xf] %v3540
        %4053 = vst [vmem:[%s228 + $0x268] sm:$0xf] %v3541
        %4054 = vst [vmem:[%s228 + $0x26c] sm:$0xf] %v3542
        %4055 = vst [vmem:[%s228 + $0x270] sm:$0xf] %v3543
        %4056 = vst [vmem:[%s228 + $0x274] sm:$0xf] %v3544
        %4057 = vst [vmem:[%s228 + $0x278] sm:$0xf] %v3545
        %4058 = vst [vmem:[%s228 + $0x27c] sm:$0xf] %v3546
        %4059 = vst [vmem:[%s228 + $0x280] sm:$0xf] %v3547
        %4060 = vst [vmem:[%s228 + $0x284] sm:$0xf] %v3548
        %4061 = vst [vmem:[%s228 + $0x288] sm:$0xf] %v3549
        %4062 = vst [vmem:[%s228 + $0x28c] sm:$0xf] %v3550
        %4063 = vst [vmem:[%s228 + $0x290] sm:$0xf] %v3551
        %4064 = vst [vmem:[%s228 + $0x294] sm:$0xf] %v3552
        %4065 = vst [vmem:[%s228 + $0x298] sm:$0xf] %v3553
        %4066 = vst [vmem:[%s228 + $0x29c] sm:$0xf] %v3554
        %4067 = vst [vmem:[%s228 + $0x2a0] sm:$0xf] %v3555
        %4068 = vst [vmem:[%s228 + $0x2a4] sm:$0xf] %v3556
        %4069 = vst [vmem:[%s228 + $0x2a8] sm:$0xf] %v3557
        %4070 = vst [vmem:[%s228 + $0x2ac] sm:$0xf] %v3558
        %4071 = vst [vmem:[%s228 + $0x2b0] sm:$0xf] %v3559
        %4072 = vst [vmem:[%s228 + $0x2b4] sm:$0xf] %v3560
        %4073 = vst [vmem:[%s228 + $0x2b8] sm:$0xf] %v3561
        %4074 = vst [vmem:[%s228 + $0x2bc] sm:$0xf] %v3562
        %4075 = vst [vmem:[%s228 + $0x2c0] sm:$0xf] %v3563
        %4076 = vst [vmem:[%s228 + $0x2c4] sm:$0xf] %v3564
        %4077 = vst [vmem:[%s228 + $0x2c8] sm:$0xf] %v3565
        %4078 = vst [vmem:[%s228 + $0x2cc] sm:$0xf] %v3566
        %4079 = vst [vmem:[%s228 + $0x2d0] sm:$0xf] %v3567
        %4080 = vst [vmem:[%s228 + $0x2d4] sm:$0xf] %v3568
        %4081 = vst [vmem:[%s228 + $0x2d8] sm:$0xf] %v3569
        %4082 = vst [vmem:[%s228 + $0x2dc] sm:$0xf] %v3570
        %4083 = vst [vmem:[%s228 + $0x2e0] sm:$0xf] %v3571
        %4084 = vst [vmem:[%s228 + $0x2e4] sm:$0xf] %v3572
        %4085 = vst [vmem:[%s228 + $0x2e8] sm:$0xf] %v3573
        %4086 = vst [vmem:[%s228 + $0x2ec] sm:$0xf] %v3574
        %4087 = vst [vmem:[%s228 + $0x2f0] sm:$0xf] %v3575
        %4088 = vst [vmem:[%s228 + $0x2f4] sm:$0xf] %v3576
        %4089 = vst [vmem:[%s228 + $0x2f8] sm:$0xf] %v3577
        %4090 = vst [vmem:[%s228 + $0x2fc] sm:$0xf] %v3578
        %4091 = vst [vmem:[%s228 + $0x300] sm:$0xf] %v3579
        %4092 = vst [vmem:[%s228 + $0x304] sm:$0xf] %v3580
        %4093 = vst [vmem:[%s228 + $0x308] sm:$0xf] %v3581
        %4094 = vst [vmem:[%s228 + $0x30c] sm:$0xf] %v3582
        %4095 = vst [vmem:[%s228 + $0x310] sm:$0xf] %v3583
        %4096 = vst [vmem:[%s228 + $0x314] sm:$0xf] %v3584
        %4097 = vst [vmem:[%s228 + $0x318] sm:$0xf] %v3585
        %4098 = vst [vmem:[%s228 + $0x31c] sm:$0xf] %v3586
        %4099 = vst [vmem:[%s228 + $0x320] sm:$0xf] %v3587
        %4100 = vst [vmem:[%s228 + $0x324] sm:$0xf] %v3588
        %4101 = vst [vmem:[%s228 + $0x328] sm:$0xf] %v3589
        %4102 = vst [vmem:[%s228 + $0x32c] sm:$0xf] %v3590
        %4103 = vst [vmem:[%s228 + $0x330] sm:$0xf] %v3591
        %4104 = vst [vmem:[%s228 + $0x334] sm:$0xf] %v3592
        %4105 = vst [vmem:[%s228 + $0x338] sm:$0xf] %v3593
        %4106 = vst [vmem:[%s228 + $0x33c] sm:$0xf] %v3594
        %4107 = vst [vmem:[%s228 + $0x340] sm:$0xf] %v3595
        %4108 = vst [vmem:[%s228 + $0x344] sm:$0xf] %v3596
        %4109 = vst [vmem:[%s228 + $0x348] sm:$0xf] %v3597
        %4110 = vst [vmem:[%s228 + $0x34c] sm:$0xf] %v3598
        %4111 = vst [vmem:[%s228 + $0x350] sm:$0xf] %v3599
        %4112 = vst [vmem:[%s228 + $0x354] sm:$0xf] %v3600
        %4113 = vst [vmem:[%s228 + $0x358] sm:$0xf] %v3601
        %4114 = vst [vmem:[%s228 + $0x35c] sm:$0xf] %v3602
        %4115 = vst [vmem:[%s228 + $0x360] sm:$0xf] %v3603
        %4116 = vst [vmem:[%s228 + $0x364] sm:$0xf] %v3604
        %4117 = vst [vmem:[%s228 + $0x368] sm:$0xf] %v3605
        %4118 = vst [vmem:[%s228 + $0x36c] sm:$0xf] %v3606
        %4119 = vst [vmem:[%s228 + $0x370] sm:$0xf] %v3607
        %4120 = vst [vmem:[%s228 + $0x374] sm:$0xf] %v3608
        %4121 = vst [vmem:[%s228 + $0x378] sm:$0xf] %v3609
        %4122 = vst [vmem:[%s228 + $0x37c] sm:$0xf] %v3610
        %4123 = vst [vmem:[%s228 + $0x380] sm:$0xf] %v3611
        %4124 = vst [vmem:[%s228 + $0x384] sm:$0xf] %v3612
        %4125 = vst [vmem:[%s228 + $0x388] sm:$0xf] %v3613
        %4126 = vst [vmem:[%s228 + $0x38c] sm:$0xf] %v3614
        %4127 = vst [vmem:[%s228 + $0x390] sm:$0xf] %v3615
        %4128 = vst [vmem:[%s228 + $0x394] sm:$0xf] %v3616
        %4129 = vst [vmem:[%s228 + $0x398] sm:$0xf] %v3617
        %4130 = vst [vmem:[%s228 + $0x39c] sm:$0xf] %v3618
        %4131 = vst [vmem:[%s228 + $0x3a0] sm:$0xf] %v3619
        %4132 = vst [vmem:[%s228 + $0x3a4] sm:$0xf] %v3620
        %4133 = vst [vmem:[%s228 + $0x3a8] sm:$0xf] %v3621
        %4134 = vst [vmem:[%s228 + $0x3ac] sm:$0xf] %v3622
        %4135 = vst [vmem:[%s228 + $0x3b0] sm:$0xf] %v3623
        %4136 = vst [vmem:[%s228 + $0x3b4] sm:$0xf] %v3624
        %4137 = vst [vmem:[%s228 + $0x3b8] sm:$0xf] %v3625
        %4138 = vst [vmem:[%s228 + $0x3bc] sm:$0xf] %v3626
        %4139 = vst [vmem:[%s228 + $0x3c0] sm:$0xf] %v3627
        %4140 = vst [vmem:[%s228 + $0x3c4] sm:$0xf] %v3628
        %4141 = vst [vmem:[%s228 + $0x3c8] sm:$0xf] %v3629
        %4142 = vst [vmem:[%s228 + $0x3cc] sm:$0xf] %v3630
        %4143 = vst [vmem:[%s228 + $0x3d0] sm:$0xf] %v3631
        %4144 = vst [vmem:[%s228 + $0x3d4] sm:$0xf] %v3632
        %4145 = vst [vmem:[%s228 + $0x3d8] sm:$0xf] %v3633
        %4146 = vst [vmem:[%s228 + $0x3dc] sm:$0xf] %v3634
        %4147 = vst [vmem:[%s228 + $0x3e0] sm:$0xf] %v3635
        %4148 = vst [vmem:[%s228 + $0x3e4] sm:$0xf] %v3636
        %4149 = vst [vmem:[%s228 + $0x3e8] sm:$0xf] %v3637
        %4150 = vst [vmem:[%s228 + $0x3ec] sm:$0xf] %v3638
        %4151 = vst [vmem:[%s228 + $0x3f0] sm:$0xf] %v3639
        %4152 = vst [vmem:[%s228 + $0x3f4] sm:$0xf] %v3640
        %4153 = vst [vmem:[%s228 + $0x3f8] sm:$0xf] %v3641
        %4154 = vst [vmem:[%s228 + $0x3fc] sm:$0xf] %v3642
        %s4155 = sand.u32 %s128, 1
        %s4156 = scalar_lea.sflag [#allocation3], %s4155
        %s4157 = sand.u32 %s128, 1
        %s4158 = smul.addr %s4157, 1024
        %s4159 = scalar_lea.vmem [#allocation2], %s4158
        // Predicated region
        $region33: #{tpu_custom_call.1} parent=31 // pred_check
          %p4160 = pneg %p138
        $region34: #{tpu_custom_call.1} parent=31 // pred_check_branch
          %4162 = sbr.rel (%p4160) target = $region36
        $region35: #{tpu_custom_call.1} parent=31 // pred_region
          %s4163 = smul.u32 256, %s22
          %s4165 = ssub.s32 16384, 16384
          %4166 = vsyncadd %s4156, %s4165
          %s4167 = sadd.s32 %s23, %s4163
          %s4168 = smul.addr %s4167, 64
          %s4169 = scalar_lea.hbm %s3, %s4168
          %s4170 = sshll.u32 %s4159, 4
          %s4171 = int_to_ptr.vmem [resolvable:$true] %s4170
          %4176 = dma.vmem_to_hbm [thread:$0]  %s4171, 16384, %s4169, %s4156, 64, 64, 4
        $region36: #{tpu_custom_call.1} parent=31 // pred_fallthru
          _
      $region32: #{tpu_custom_call.1} parent=5 // pred_fallthru
        _
      %p4177 = scmp.le.s32.totalorder 2, %s12
      // Predicated region
      $region37: #{tpu_custom_call.1} parent=5 // pred_check
        %p4178 = pneg %p4177
      $region38: #{tpu_custom_call.1} parent=5 // pred_check_branch
        %4180 = sbr.rel (%p4178) target = $region40
      $region39: #{tpu_custom_call.1} parent=5 // pred_region
        %s4181 = ssub.s32 %s12, 2
        // Predicated region
        $region41: #{tpu_custom_call.1} parent=39 // pred_check
          %p4182 = pneg %p144
        $region42: #{tpu_custom_call.1} parent=39 // pred_check_branch
          %4184 = sbr.rel (%p4182) target = $region44
        $region43: #{tpu_custom_call.1} parent=39 // pred_region
          %s4185 = sand.u32 %s129, 1
          %s4186 = scalar_lea.sflag [#allocation3], %s4185
          %s4187 = sand.u32 %s129, 1
          %s4188 = smul.addr %s4187, 1024
          %s4189 = scalar_lea.vmem [#allocation2], %s4188
          %4190 = dma.done %s4186, 16384
        $region44: #{tpu_custom_call.1} parent=39 // pred_fallthru
          _
      $region40: #{tpu_custom_call.1} parent=5 // pred_fallthru
        _
    $region6: #{tpu_custom_call.1} parent=1 // loop_footer
      %s16 = sadd.s32 1, %s12
    $region7: #{tpu_custom_call.1} parent=1 // loop_footer_branch
      %11 = sbr.rel target = $region3
    $region8: #{tpu_custom_call.1} parent=1 // loop_exit
      _
    %4191 = vsyncpa [#allocation3], 1
    %s4192 = scalar_lea.sflag [#allocation3], 1
    %4193 = vsyncpa %s4192, 1

</llo_original>
